<compile_context>
chip_gen: v5e
topology: v5e:2x2
jax: 0.10.0
libtpu: 0.0.40
codegen_flags: <defaults>
</compile_context>

<pallas_src>
import jax
import jax.numpy as jnp
from jax.experimental import pallas as pl
from jax.experimental.pallas import tpu as pltpu

EMB_DIM = 64
HID = 128
IN1_DIM = 72        # PyTorch in1 output features
IN1_PAD = 128       # lane-dense padding of IN1_DIM (zero-padded weights/bias)


def _sigmoid(z):
    # one EUP push (tanh) instead of exp + reciprocal
    return 0.5 * jnp.tanh(0.5 * z) + 0.5


def kitty_kernel(x_ref, seq_ref, smallw_ref, bigw_ref, vec_ref, o_ref, ih_ref):
    BP = x_ref.shape[0]                 # padded batch (multiple of 8 sublanes)
    H = HID
    T = seq_ref.shape[0] // BP          # static sequence length

    # ---- initial hidden / cell state: in2(relu(in1(x))) --------------------
    # smallw slab (f32): rows [0:64]=in1_w.T (padded), [64:192]=in2_w.T (padded), [192:320]=out1_w.T
    x = x_ref[...]                                                       # (BP, 64) f32
    h0 = jnp.dot(x, smallw_ref[0:EMB_DIM, :],
                 preferred_element_type=jnp.float32) + vec_ref[0:1, 0:IN1_PAD]
    h0 = jnp.maximum(h0, 0.0)                                            # (BP, 128), pad lanes = 0
    h0 = jnp.dot(h0, smallw_ref[EMB_DIM:EMB_DIM + IN1_PAD, :],
                 preferred_element_type=jnp.float32) + vec_ref[1:2, 0:H]
    # (BP, 128); PyTorch's LSTM receives this same tensor as both h_0 and c_0.

    # ---- hoisted input projection: one bf16 MXU call, (b_ih + b_hh) folded in ----
    # bigw slab (bf16): rows [0:64]=W_ih.T, rows [64:192]=W_hh.T
    ih_ref[...] = (jnp.dot(seq_ref[...], bigw_ref[0:EMB_DIM, :],
                           preferred_element_type=jnp.float32)
                   + vec_ref[2:3, :])                                    # (T*BP, 4H) f32

    # ---- recurrence: fully unrolled, only h @ W_hh left on the serial chain ----
    h = h0
    c = h0
    for t in range(T):                  # T static -> constant slice offsets
        whh = bigw_ref[EMB_DIM:EMB_DIM + H, :]          # bf16, re-read per step (vld is free; no spill)
        gates = (ih_ref[pl.ds(t * BP, BP), :]
                 + jnp.dot(h.astype(jnp.bfloat16), whh,
                           preferred_element_type=jnp.float32))          # (BP, 4H) f32
        i = _sigmoid(gates[:, 0:H])
        f = _sigmoid(gates[:, H:2 * H])
        g = jnp.tanh(gates[:, 2 * H:3 * H])
        o = _sigmoid(gates[:, 3 * H:4 * H])
        c = f * c + i * g
        h = o * jnp.tanh(c)

    # ---- output head: out2(relu(out1(h_n))) --------------------------------
    y = jnp.dot(h, smallw_ref[EMB_DIM + IN1_PAD:, :],
                preferred_element_type=jnp.float32) + vec_ref[3:4, 0:H]
    y = jnp.maximum(y, 0.0)                                              # (BP, 128)
    # out2 is a 128 -> 1 projection: lane reduction instead of an N=1 MXU push.
    o_ref[...] = (jnp.sum(y * vec_ref[4:5, 0:H], axis=-1, keepdims=True)
                  + vec_ref[5:6, 0:1])                                   # (BP, 1)


def init_params(key):
    """Deterministic synthetic parameters matching the PyTorch module's shapes."""
    ks = jax.random.split(key, 16)
    u = lambda k, shape, bound: jax.random.uniform(k, shape, jnp.float32, -bound, bound)
    p = {}
    p['emb'] = jax.random.normal(ks[0], (54, EMB_DIM), jnp.float32)          # Embedding(54, 64)
    # Linear layers: weight (out, in), bias (out,)
    p['in1_w'] = u(ks[1], (IN1_DIM, EMB_DIM), 1.0 / EMB_DIM ** 0.5)
    p['in1_b'] = u(ks[2], (IN1_DIM,), 1.0 / EMB_DIM ** 0.5)
    p['in2_w'] = u(ks[3], (HID, IN1_DIM), 1.0 / IN1_DIM ** 0.5)
    p['in2_b'] = u(ks[4], (HID,), 1.0 / IN1_DIM ** 0.5)
    # LSTM: W_ih (4H, 64), W_hh (4H, H), biases (4H,); gate order i, f, g, o
    p['w_ih'] = u(ks[5], (4 * HID, EMB_DIM), 1.0 / HID ** 0.5)
    p['w_hh'] = u(ks[6], (4 * HID, HID), 1.0 / HID ** 0.5)
    p['b_ih'] = u(ks[7], (4 * HID,), 1.0 / HID ** 0.5)
    p['b_hh'] = u(ks[8], (4 * HID,), 1.0 / HID ** 0.5)
    p['out1_w'] = u(ks[9], (HID, HID), 1.0 / HID ** 0.5)
    p['out1_b'] = u(ks[10], (HID,), 1.0 / HID ** 0.5)
    p['out2_w'] = u(ks[11], (1, HID), 1.0 / HID ** 0.5)
    p['out2_b'] = u(ks[12], (1,), 1.0 / HID ** 0.5)
    return p


def prepare_kernel_params(p):
    """One-time preprocessing: transposes, bias folding, padding, dtype casts, DMA packing."""
    # small f32 weight slab: (320, 128) = [in1_w.T padded ; in2_w.T padded ; out1_w.T]
    in1_wT = jnp.zeros((EMB_DIM, IN1_PAD), jnp.float32).at[:, :IN1_DIM].set(p['in1_w'].T)
    in2_wT = jnp.zeros((IN1_PAD, HID), jnp.float32).at[:IN1_DIM, :].set(p['in2_w'].T)
    smallw = jnp.concatenate([in1_wT, in2_wT, p['out1_w'].T], axis=0)

    # big bf16 weight slab: (192, 512) = [W_ih.T ; W_hh.T]
    bigw = jnp.concatenate([p['w_ih'].T, p['w_hh'].T], axis=0).astype(jnp.bfloat16)

    # bias / small-vector slab: (8, 512) f32, one row per vector, static offsets in-kernel
    vec = jnp.zeros((8, 4 * HID), jnp.float32)
    vec = vec.at[0, :IN1_DIM].set(p['in1_b'])
    vec = vec.at[1, :HID].set(p['in2_b'])
    vec = vec.at[2, :].set(p['b_ih'] + p['b_hh'])
    vec = vec.at[3, :HID].set(p['out1_b'])
    vec = vec.at[4, :HID].set(p['out2_w'][0])
    vec = vec.at[5, 0].set(p['out2_b'][0])

    return {
        'emb': p['emb'].astype(jnp.bfloat16),   # gather produces bf16 seq directly
        'smallw': smallw,
        'bigw': bigw,
        'vec': vec,
    }


@jax.jit
def kitty_forward(x, hand, card, kp):
    B = x.shape[0]
    BP = ((B + 7) // 8) * 8                      # pad batch to sublane multiple
    T = hand.shape[1] + card.shape[1]

    # glue: embedding lookup + time-major layout (gather fused in this jit)
    seq_idx = jnp.concatenate([hand, card], axis=-1)                    # (B, T)
    seq_idx = jnp.pad(seq_idx, ((0, BP - B), (0, 0)))                   # pad rows -> idx 0
    seq = jnp.take(kp['emb'], seq_idx, axis=0)                          # (BP, T, 64) bf16
    seq = jnp.transpose(seq, (1, 0, 2)).reshape(T * BP, EMB_DIM)        # (T*BP, 64) bf16

    x_p = jnp.pad(x.astype(jnp.float32), ((0, BP - B), (0, 0)))         # (BP, 64) f32

    vmem = pl.BlockSpec(memory_space=pltpu.MemorySpace.VMEM)
    out = pl.pallas_call(
        kitty_kernel,
        out_shape=jax.ShapeDtypeStruct((BP, 1), jnp.float32),
        in_specs=[vmem] * 5,
        out_specs=vmem,
        scratch_shapes=[pltpu.VMEM((T * BP, 4 * HID), jnp.float32)],
    )(x_p, seq, kp['smallw'], kp['bigw'], kp['vec'])
    return out[:B]


def kitty_reference(x, hand, card, p):
    """Pure-JAX f32 reference mirroring the PyTorch forward."""
    seq_idx = jnp.concatenate([hand, card], axis=-1)
    seq = jnp.take(p['emb'], seq_idx, axis=0)                           # (B, T, 64)
    h = jnp.maximum(x @ p['in1_w'].T + p['in1_b'], 0.0)
    h = h @ p['in2_w'].T + p['in2_b']
    c = h
    b = p['b_ih'] + p['b_hh']
    for t in range(seq.shape[1]):
        gates = seq[:, t, :] @ p['w_ih'].T + h @ p['w_hh'].T + b
        i, f, g, o = jnp.split(gates, 4, axis=-1)
        i, f, o = jax.nn.sigmoid(i), jax.nn.sigmoid(f), jax.nn.sigmoid(o)
        g = jnp.tanh(g)
        c = f * c + i * g
        h = o * jnp.tanh(c)
    y = jnp.maximum(h @ p['out1_w'].T + p['out1_b'], 0.0)
    return y @ p['out2_w'].T + p['out2_b']


if __name__ == "__main__":
    key = jax.random.PRNGKey(0)
    kparam, kx, kh, kc = jax.random.split(key, 4)

    B = 2
    T_HAND = 25   # player hand
    T_CARD = 1    # candidate discard card

    params = init_params(kparam)
    kernel_params = prepare_kernel_params(params)   # one-time preprocessing (not per call)

    # NOTE: module docstring claims x is (B, 172), but in1 = Linear(64, 72),
    # so the forward actually requires x of shape (B, 64); we follow the code.
    x = jax.random.normal(kx, (B, EMB_DIM), jnp.float32)
    hand = jax.random.randint(kh, (B, T_HAND), 0, 54, jnp.int32)
    card = jax.random.randint(kc, (B, T_CARD), 0, 54, jnp.int32)

    out = jax.block_until_ready(kitty_forward(x, hand, card, kernel_params))
    ref = kitty_reference(x, hand, card, params)

    assert out.shape == (B, 1)
    # bf16 MXU operands over a 26-step recurrence vs. the pure-f32 reference:
    # expected deviation is a few e-3 on an O(0.3) output, so 3e-2 is a wide margin.
    assert jnp.allclose(out, ref, rtol=3e-2, atol=3e-2), (out, ref)
    print("KERNEL_OK")
</pallas_src>

<mosaic_0001>
module attributes {stable_mosaic.version = 11 : i64} {
  func.func @kitty_kernel(%arg0: memref<8x64xf32, #tpu.memory_space<vmem>>, %arg1: memref<208x64xbf16, #tpu.memory_space<vmem>>, %arg2: memref<320x128xf32, #tpu.memory_space<vmem>>, %arg3: memref<192x512xbf16, #tpu.memory_space<vmem>>, %arg4: memref<8x512xf32, #tpu.memory_space<vmem>>, %arg5: memref<8x1xf32, #tpu.memory_space<vmem>>, %arg6: memref<208x512xf32, #tpu.memory_space<vmem>>) attributes {dimension_semantics = [], scalar_prefetch = 0 : i64, scratch_operands = 1 : i64, tpu.core_type = #tpu.core_type<tc>} {
    %c0 = arith.constant 0 : index
    %c0_0 = arith.constant 0 : index
    %0 = vector.load %arg0[%c0, %c0_0] : memref<8x64xf32, #tpu.memory_space<vmem>>, vector<8x64xf32>
    %c0_1 = arith.constant 0 : index
    %c0_2 = arith.constant 0 : index
    %1 = vector.load %arg2[%c0_1, %c0_2] : memref<320x128xf32, #tpu.memory_space<vmem>>, vector<64x128xf32>
    %cst = arith.constant dense<0.000000e+00> : vector<8x128xf32>
    %2 = tpu.matmul %0, %1, %cst {dimension_numbers = #tpu.dot_dimension_numbers<[1], [0], [0], [1], [0, 0, 1, 1], [], []>} : vector<8x64xf32>, vector<64x128xf32>, vector<8x128xf32> -> vector<8x128xf32>
    %c0_3 = arith.constant 0 : index
    %c0_4 = arith.constant 0 : index
    %3 = vector.load %arg4[%c0_3, %c0_4] : memref<8x512xf32, #tpu.memory_space<vmem>>, vector<1x128xf32>
    %4 = vector.broadcast %3 : vector<1x128xf32> to vector<8x128xf32>
    %5 = arith.addf %2, %4 : vector<8x128xf32>
    %cst_5 = arith.constant 0.000000e+00 : f32
    %6 = vector.broadcast %cst_5 : f32 to vector<8x128xf32>
    %7 = arith.maximumf %5, %6 : vector<8x128xf32>
    %c64 = arith.constant 64 : index
    %c0_6 = arith.constant 0 : index
    %8 = vector.load %arg2[%c64, %c0_6] : memref<320x128xf32, #tpu.memory_space<vmem>>, vector<128x128xf32>
    %cst_7 = arith.constant dense<0.000000e+00> : vector<8x128xf32>
    %9 = tpu.matmul %7, %8, %cst_7 {dimension_numbers = #tpu.dot_dimension_numbers<[1], [0], [0], [1], [0, 0, 1, 1], [], []>} : vector<8x128xf32>, vector<128x128xf32>, vector<8x128xf32> -> vector<8x128xf32>
    %c1 = arith.constant 1 : index
    %c0_8 = arith.constant 0 : index
    %10 = vector.load %arg4[%c1, %c0_8] : memref<8x512xf32, #tpu.memory_space<vmem>>, vector<1x128xf32>
    %11 = vector.broadcast %10 : vector<1x128xf32> to vector<8x128xf32>
    %12 = arith.addf %9, %11 : vector<8x128xf32>
    %c0_9 = arith.constant 0 : index
    %c0_10 = arith.constant 0 : index
    %13 = vector.load %arg1[%c0_9, %c0_10] : memref<208x64xbf16, #tpu.memory_space<vmem>>, vector<208x64xbf16>
    %c0_11 = arith.constant 0 : index
    %c0_12 = arith.constant 0 : index
    %14 = vector.load %arg3[%c0_11, %c0_12] : memref<192x512xbf16, #tpu.memory_space<vmem>>, vector<64x512xbf16>
    %cst_13 = arith.constant dense<0.000000e+00> : vector<208x512xf32>
    %15 = tpu.matmul %13, %14, %cst_13 {dimension_numbers = #tpu.dot_dimension_numbers<[1], [0], [0], [1], [0, 0, 1, 1], [], []>} : vector<208x64xbf16>, vector<64x512xbf16>, vector<208x512xf32> -> vector<208x512xf32>
    %c2 = arith.constant 2 : index
    %c0_14 = arith.constant 0 : index
    %16 = vector.load %arg4[%c2, %c0_14] : memref<8x512xf32, #tpu.memory_space<vmem>>, vector<1x512xf32>
    %17 = vector.broadcast %16 : vector<1x512xf32> to vector<208x512xf32>
    %18 = arith.addf %15, %17 : vector<208x512xf32>
    %c0_15 = arith.constant 0 : index
    %c0_16 = arith.constant 0 : index
    %19 = vector.load %arg6[%c0_15, %c0_16] : memref<208x512xf32, #tpu.memory_space<vmem>>, vector<208x512xf32>
    tpu.vector_store %arg6[%c0_15, %c0_16], %18 {strides = array<i32>} : memref<208x512xf32, #tpu.memory_space<vmem>>, vector<208x512xf32>,
    %c64_17 = arith.constant 64 : index
    %c0_18 = arith.constant 0 : index
    %20 = vector.load %arg3[%c64_17, %c0_18] : memref<192x512xbf16, #tpu.memory_space<vmem>>, vector<128x512xbf16>
    %c0_19 = arith.constant 0 : index
    %c0_20 = arith.constant 0 : index
    %21 = vector.load %arg6[%c0_19, %c0_20] : memref<208x512xf32, #tpu.memory_space<vmem>>, vector<8x512xf32>
    %22 = arith.truncf %12 : vector<8x128xf32> to vector<8x128xbf16>
    %cst_21 = arith.constant dense<0.000000e+00> : vector<8x512xf32>
    %23 = tpu.matmul %22, %20, %cst_21 {dimension_numbers = #tpu.dot_dimension_numbers<[1], [0], [0], [1], [0, 0, 1, 1], [], []>} : vector<8x128xbf16>, vector<128x512xbf16>, vector<8x512xf32> -> vector<8x512xf32>
    %24 = arith.addf %21, %23 : vector<8x512xf32>
    %25 = vector.extract_strided_slice %24 {offsets = [0, 0], sizes = [8, 128], strides = [1, 1]} : vector<8x512xf32> to vector<8x128xf32>
    %cst_22 = arith.constant 5.000000e-01 : f32
    %26 = vector.broadcast %cst_22 : f32 to vector<8x128xf32>
    %27 = arith.mulf %26, %25 : vector<8x128xf32>
    %28 = math.tanh %27 : vector<8x128xf32>
    %cst_23 = arith.constant 5.000000e-01 : f32
    %29 = vector.broadcast %cst_23 : f32 to vector<8x128xf32>
    %30 = arith.mulf %29, %28 : vector<8x128xf32>
    %cst_24 = arith.constant 5.000000e-01 : f32
    %31 = vector.broadcast %cst_24 : f32 to vector<8x128xf32>
    %32 = arith.addf %30, %31 : vector<8x128xf32>
    %33 = vector.extract_strided_slice %24 {offsets = [0, 128], sizes = [8, 128], strides = [1, 1]} : vector<8x512xf32> to vector<8x128xf32>
    %cst_25 = arith.constant 5.000000e-01 : f32
    %34 = vector.broadcast %cst_25 : f32 to vector<8x128xf32>
    %35 = arith.mulf %34, %33 : vector<8x128xf32>
    %36 = math.tanh %35 : vector<8x128xf32>
    %cst_26 = arith.constant 5.000000e-01 : f32
    %37 = vector.broadcast %cst_26 : f32 to vector<8x128xf32>
    %38 = arith.mulf %37, %36 : vector<8x128xf32>
    %cst_27 = arith.constant 5.000000e-01 : f32
    %39 = vector.broadcast %cst_27 : f32 to vector<8x128xf32>
    %40 = arith.addf %38, %39 : vector<8x128xf32>
    %41 = vector.extract_strided_slice %24 {offsets = [0, 256], sizes = [8, 128], strides = [1, 1]} : vector<8x512xf32> to vector<8x128xf32>
    %42 = math.tanh %41 : vector<8x128xf32>
    %43 = vector.extract_strided_slice %24 {offsets = [0, 384], sizes = [8, 128], strides = [1, 1]} : vector<8x512xf32> to vector<8x128xf32>
    %cst_28 = arith.constant 5.000000e-01 : f32
    %44 = vector.broadcast %cst_28 : f32 to vector<8x128xf32>
    %45 = arith.mulf %44, %43 : vector<8x128xf32>
    %46 = math.tanh %45 : vector<8x128xf32>
    %cst_29 = arith.constant 5.000000e-01 : f32
    %47 = vector.broadcast %cst_29 : f32 to vector<8x128xf32>
    %48 = arith.mulf %47, %46 : vector<8x128xf32>
    %cst_30 = arith.constant 5.000000e-01 : f32
    %49 = vector.broadcast %cst_30 : f32 to vector<8x128xf32>
    %50 = arith.addf %48, %49 : vector<8x128xf32>
    %51 = arith.mulf %40, %12 : vector<8x128xf32>
    %52 = arith.mulf %32, %42 : vector<8x128xf32>
    %53 = arith.addf %51, %52 : vector<8x128xf32>
    %54 = math.tanh %53 : vector<8x128xf32>
    %55 = arith.mulf %50, %54 : vector<8x128xf32>
    %c64_31 = arith.constant 64 : index
    %c0_32 = arith.constant 0 : index
    %56 = vector.load %arg3[%c64_31, %c0_32] : memref<192x512xbf16, #tpu.memory_space<vmem>>, vector<128x512xbf16>
    %c8 = arith.constant 8 : index
    %c0_33 = arith.constant 0 : index
    %57 = vector.load %arg6[%c8, %c0_33] : memref<208x512xf32, #tpu.memory_space<vmem>>, vector<8x512xf32>
    %58 = arith.truncf %55 : vector<8x128xf32> to vector<8x128xbf16>
    %cst_34 = arith.constant dense<0.000000e+00> : vector<8x512xf32>
    %59 = tpu.matmul %58, %56, %cst_34 {dimension_numbers = #tpu.dot_dimension_numbers<[1], [0], [0], [1], [0, 0, 1, 1], [], []>} : vector<8x128xbf16>, vector<128x512xbf16>, vector<8x512xf32> -> vector<8x512xf32>
    %60 = arith.addf %57, %59 : vector<8x512xf32>
    %61 = vector.extract_strided_slice %60 {offsets = [0, 0], sizes = [8, 128], strides = [1, 1]} : vector<8x512xf32> to vector<8x128xf32>
    %cst_35 = arith.constant 5.000000e-01 : f32
    %62 = vector.broadcast %cst_35 : f32 to vector<8x128xf32>
    %63 = arith.mulf %62, %61 : vector<8x128xf32>
    %64 = math.tanh %63 : vector<8x128xf32>
    %cst_36 = arith.constant 5.000000e-01 : f32
    %65 = vector.broadcast %cst_36 : f32 to vector<8x128xf32>
    %66 = arith.mulf %65, %64 : vector<8x128xf32>
    %cst_37 = arith.constant 5.000000e-01 : f32
    %67 = vector.broadcast %cst_37 : f32 to vector<8x128xf32>
    %68 = arith.addf %66, %67 : vector<8x128xf32>
    %69 = vector.extract_strided_slice %60 {offsets = [0, 128], sizes = [8, 128], strides = [1, 1]} : vector<8x512xf32> to vector<8x128xf32>
    %cst_38 = arith.constant 5.000000e-01 : f32
    %70 = vector.broadcast %cst_38 : f32 to vector<8x128xf32>
    %71 = arith.mulf %70, %69 : vector<8x128xf32>
    %72 = math.tanh %71 : vector<8x128xf32>
    %cst_39 = arith.constant 5.000000e-01 : f32
    %73 = vector.broadcast %cst_39 : f32 to vector<8x128xf32>
    %74 = arith.mulf %73, %72 : vector<8x128xf32>
    %cst_40 = arith.constant 5.000000e-01 : f32
    %75 = vector.broadcast %cst_40 : f32 to vector<8x128xf32>
    %76 = arith.addf %74, %75 : vector<8x128xf32>
    %77 = vector.extract_strided_slice %60 {offsets = [0, 256], sizes = [8, 128], strides = [1, 1]} : vector<8x512xf32> to vector<8x128xf32>
    %78 = math.tanh %77 : vector<8x128xf32>
    %79 = vector.extract_strided_slice %60 {offsets = [0, 384], sizes = [8, 128], strides = [1, 1]} : vector<8x512xf32> to vector<8x128xf32>
    %cst_41 = arith.constant 5.000000e-01 : f32
    %80 = vector.broadcast %cst_41 : f32 to vector<8x128xf32>
    %81 = arith.mulf %80, %79 : vector<8x128xf32>
    %82 = math.tanh %81 : vector<8x128xf32>
    %cst_42 = arith.constant 5.000000e-01 : f32
    %83 = vector.broadcast %cst_42 : f32 to vector<8x128xf32>
    %84 = arith.mulf %83, %82 : vector<8x128xf32>
    %cst_43 = arith.constant 5.000000e-01 : f32
    %85 = vector.broadcast %cst_43 : f32 to vector<8x128xf32>
    %86 = arith.addf %84, %85 : vector<8x128xf32>
    %87 = arith.mulf %76, %53 : vector<8x128xf32>
    %88 = arith.mulf %68, %78 : vector<8x128xf32>
    %89 = arith.addf %87, %88 : vector<8x128xf32>
    %90 = math.tanh %89 : vector<8x128xf32>
    %91 = arith.mulf %86, %90 : vector<8x128xf32>
    %c64_44 = arith.constant 64 : index
    %c0_45 = arith.constant 0 : index
    %92 = vector.load %arg3[%c64_44, %c0_45] : memref<192x512xbf16, #tpu.memory_space<vmem>>, vector<128x512xbf16>
    %c16 = arith.constant 16 : index
    %c0_46 = arith.constant 0 : index
    %93 = vector.load %arg6[%c16, %c0_46] : memref<208x512xf32, #tpu.memory_space<vmem>>, vector<8x512xf32>
    %94 = arith.truncf %91 : vector<8x128xf32> to vector<8x128xbf16>
    %cst_47 = arith.constant dense<0.000000e+00> : vector<8x512xf32>
    %95 = tpu.matmul %94, %92, %cst_47 {dimension_numbers = #tpu.dot_dimension_numbers<[1], [0], [0], [1], [0, 0, 1, 1], [], []>} : vector<8x128xbf16>, vector<128x512xbf16>, vector<8x512xf32> -> vector<8x512xf32>
    %96 = arith.addf %93, %95 : vector<8x512xf32>
    %97 = vector.extract_strided_slice %96 {offsets = [0, 0], sizes = [8, 128], strides = [1, 1]} : vector<8x512xf32> to vector<8x128xf32>
    %cst_48 = arith.constant 5.000000e-01 : f32
    %98 = vector.broadcast %cst_48 : f32 to vector<8x128xf32>
    %99 = arith.mulf %98, %97 : vector<8x128xf32>
    %100 = math.tanh %99 : vector<8x128xf32>
    %cst_49 = arith.constant 5.000000e-01 : f32
    %101 = vector.broadcast %cst_49 : f32 to vector<8x128xf32>
    %102 = arith.mulf %101, %100 : vector<8x128xf32>
    %cst_50 = arith.constant 5.000000e-01 : f32
    %103 = vector.broadcast %cst_50 : f32 to vector<8x128xf32>
    %104 = arith.addf %102, %103 : vector<8x128xf32>
    %105 = vector.extract_strided_slice %96 {offsets = [0, 128], sizes = [8, 128], strides = [1, 1]} : vector<8x512xf32> to vector<8x128xf32>
    %cst_51 = arith.constant 5.000000e-01 : f32
    %106 = vector.broadcast %cst_51 : f32 to vector<8x128xf32>
    %107 = arith.mulf %106, %105 : vector<8x128xf32>
    %108 = math.tanh %107 : vector<8x128xf32>
    %cst_52 = arith.constant 5.000000e-01 : f32
    %109 = vector.broadcast %cst_52 : f32 to vector<8x128xf32>
    %110 = arith.mulf %109, %108 : vector<8x128xf32>
    %cst_53 = arith.constant 5.000000e-01 : f32
    %111 = vector.broadcast %cst_53 : f32 to vector<8x128xf32>
    %112 = arith.addf %110, %111 : vector<8x128xf32>
    %113 = vector.extract_strided_slice %96 {offsets = [0, 256], sizes = [8, 128], strides = [1, 1]} : vector<8x512xf32> to vector<8x128xf32>
    %114 = math.tanh %113 : vector<8x128xf32>
    %115 = vector.extract_strided_slice %96 {offsets = [0, 384], sizes = [8, 128], strides = [1, 1]} : vector<8x512xf32> to vector<8x128xf32>
    %cst_54 = arith.constant 5.000000e-01 : f32
    %116 = vector.broadcast %cst_54 : f32 to vector<8x128xf32>
    %117 = arith.mulf %116, %115 : vector<8x128xf32>
    %118 = math.tanh %117 : vector<8x128xf32>
    %cst_55 = arith.constant 5.000000e-01 : f32
    %119 = vector.broadcast %cst_55 : f32 to vector<8x128xf32>
    %120 = arith.mulf %119, %118 : vector<8x128xf32>
    %cst_56 = arith.constant 5.000000e-01 : f32
    %121 = vector.broadcast %cst_56 : f32 to vector<8x128xf32>
    %122 = arith.addf %120, %121 : vector<8x128xf32>
    %123 = arith.mulf %112, %89 : vector<8x128xf32>
    %124 = arith.mulf %104, %114 : vector<8x128xf32>
    %125 = arith.addf %123, %124 : vector<8x128xf32>
    %126 = math.tanh %125 : vector<8x128xf32>
    %127 = arith.mulf %122, %126 : vector<8x128xf32>
    %c64_57 = arith.constant 64 : index
    %c0_58 = arith.constant 0 : index
    %128 = vector.load %arg3[%c64_57, %c0_58] : memref<192x512xbf16, #tpu.memory_space<vmem>>, vector<128x512xbf16>
    %c24 = arith.constant 24 : index
    %c0_59 = arith.constant 0 : index
    %129 = vector.load %arg6[%c24, %c0_59] : memref<208x512xf32, #tpu.memory_space<vmem>>, vector<8x512xf32>
    %130 = arith.truncf %127 : vector<8x128xf32> to vector<8x128xbf16>
    %cst_60 = arith.constant dense<0.000000e+00> : vector<8x512xf32>
    %131 = tpu.matmul %130, %128, %cst_60 {dimension_numbers = #tpu.dot_dimension_numbers<[1], [0], [0], [1], [0, 0, 1, 1], [], []>} : vector<8x128xbf16>, vector<128x512xbf16>, vector<8x512xf32> -> vector<8x512xf32>
    %132 = arith.addf %129, %131 : vector<8x512xf32>
    %133 = vector.extract_strided_slice %132 {offsets = [0, 0], sizes = [8, 128], strides = [1, 1]} : vector<8x512xf32> to vector<8x128xf32>
    %cst_61 = arith.constant 5.000000e-01 : f32
    %134 = vector.broadcast %cst_61 : f32 to vector<8x128xf32>
    %135 = arith.mulf %134, %133 : vector<8x128xf32>
    %136 = math.tanh %135 : vector<8x128xf32>
    %cst_62 = arith.constant 5.000000e-01 : f32
    %137 = vector.broadcast %cst_62 : f32 to vector<8x128xf32>
    %138 = arith.mulf %137, %136 : vector<8x128xf32>
    %cst_63 = arith.constant 5.000000e-01 : f32
    %139 = vector.broadcast %cst_63 : f32 to vector<8x128xf32>
    %140 = arith.addf %138, %139 : vector<8x128xf32>
    %141 = vector.extract_strided_slice %132 {offsets = [0, 128], sizes = [8, 128], strides = [1, 1]} : vector<8x512xf32> to vector<8x128xf32>
    %cst_64 = arith.constant 5.000000e-01 : f32
    %142 = vector.broadcast %cst_64 : f32 to vector<8x128xf32>
    %143 = arith.mulf %142, %141 : vector<8x128xf32>
    %144 = math.tanh %143 : vector<8x128xf32>
    %cst_65 = arith.constant 5.000000e-01 : f32
    %145 = vector.broadcast %cst_65 : f32 to vector<8x128xf32>
    %146 = arith.mulf %145, %144 : vector<8x128xf32>
    %cst_66 = arith.constant 5.000000e-01 : f32
    %147 = vector.broadcast %cst_66 : f32 to vector<8x128xf32>
    %148 = arith.addf %146, %147 : vector<8x128xf32>
    %149 = vector.extract_strided_slice %132 {offsets = [0, 256], sizes = [8, 128], strides = [1, 1]} : vector<8x512xf32> to vector<8x128xf32>
    %150 = math.tanh %149 : vector<8x128xf32>
    %151 = vector.extract_strided_slice %132 {offsets = [0, 384], sizes = [8, 128], strides = [1, 1]} : vector<8x512xf32> to vector<8x128xf32>
    %cst_67 = arith.constant 5.000000e-01 : f32
    %152 = vector.broadcast %cst_67 : f32 to vector<8x128xf32>
    %153 = arith.mulf %152, %151 : vector<8x128xf32>
    %154 = math.tanh %153 : vector<8x128xf32>
    %cst_68 = arith.constant 5.000000e-01 : f32
    %155 = vector.broadcast %cst_68 : f32 to vector<8x128xf32>
    %156 = arith.mulf %155, %154 : vector<8x128xf32>
    %cst_69 = arith.constant 5.000000e-01 : f32
    %157 = vector.broadcast %cst_69 : f32 to vector<8x128xf32>
    %158 = arith.addf %156, %157 : vector<8x128xf32>
    %159 = arith.mulf %148, %125 : vector<8x128xf32>
    %160 = arith.mulf %140, %150 : vector<8x128xf32>
    %161 = arith.addf %159, %160 : vector<8x128xf32>
    %162 = math.tanh %161 : vector<8x128xf32>
    %163 = arith.mulf %158, %162 : vector<8x128xf32>
    %c64_70 = arith.constant 64 : index
    %c0_71 = arith.constant 0 : index
    %164 = vector.load %arg3[%c64_70, %c0_71] : memref<192x512xbf16, #tpu.memory_space<vmem>>, vector<128x512xbf16>
    %c32 = arith.constant 32 : index
    %c0_72 = arith.constant 0 : index
    %165 = vector.load %arg6[%c32, %c0_72] : memref<208x512xf32, #tpu.memory_space<vmem>>, vector<8x512xf32>
    %166 = arith.truncf %163 : vector<8x128xf32> to vector<8x128xbf16>
    %cst_73 = arith.constant dense<0.000000e+00> : vector<8x512xf32>
    %167 = tpu.matmul %166, %164, %cst_73 {dimension_numbers = #tpu.dot_dimension_numbers<[1], [0], [0], [1], [0, 0, 1, 1], [], []>} : vector<8x128xbf16>, vector<128x512xbf16>, vector<8x512xf32> -> vector<8x512xf32>
    %168 = arith.addf %165, %167 : vector<8x512xf32>
    %169 = vector.extract_strided_slice %168 {offsets = [0, 0], sizes = [8, 128], strides = [1, 1]} : vector<8x512xf32> to vector<8x128xf32>
    %cst_74 = arith.constant 5.000000e-01 : f32
    %170 = vector.broadcast %cst_74 : f32 to vector<8x128xf32>
    %171 = arith.mulf %170, %169 : vector<8x128xf32>
    %172 = math.tanh %171 : vector<8x128xf32>
    %cst_75 = arith.constant 5.000000e-01 : f32
    %173 = vector.broadcast %cst_75 : f32 to vector<8x128xf32>
    %174 = arith.mulf %173, %172 : vector<8x128xf32>
    %cst_76 = arith.constant 5.000000e-01 : f32
    %175 = vector.broadcast %cst_76 : f32 to vector<8x128xf32>
    %176 = arith.addf %174, %175 : vector<8x128xf32>
    %177 = vector.extract_strided_slice %168 {offsets = [0, 128], sizes = [8, 128], strides = [1, 1]} : vector<8x512xf32> to vector<8x128xf32>
    %cst_77 = arith.constant 5.000000e-01 : f32
    %178 = vector.broadcast %cst_77 : f32 to vector<8x128xf32>
    %179 = arith.mulf %178, %177 : vector<8x128xf32>
    %180 = math.tanh %179 : vector<8x128xf32>
    %cst_78 = arith.constant 5.000000e-01 : f32
    %181 = vector.broadcast %cst_78 : f32 to vector<8x128xf32>
    %182 = arith.mulf %181, %180 : vector<8x128xf32>
    %cst_79 = arith.constant 5.000000e-01 : f32
    %183 = vector.broadcast %cst_79 : f32 to vector<8x128xf32>
    %184 = arith.addf %182, %183 : vector<8x128xf32>
    %185 = vector.extract_strided_slice %168 {offsets = [0, 256], sizes = [8, 128], strides = [1, 1]} : vector<8x512xf32> to vector<8x128xf32>
    %186 = math.tanh %185 : vector<8x128xf32>
    %187 = vector.extract_strided_slice %168 {offsets = [0, 384], sizes = [8, 128], strides = [1, 1]} : vector<8x512xf32> to vector<8x128xf32>
    %cst_80 = arith.constant 5.000000e-01 : f32
    %188 = vector.broadcast %cst_80 : f32 to vector<8x128xf32>
    %189 = arith.mulf %188, %187 : vector<8x128xf32>
    %190 = math.tanh %189 : vector<8x128xf32>
    %cst_81 = arith.constant 5.000000e-01 : f32
    %191 = vector.broadcast %cst_81 : f32 to vector<8x128xf32>
    %192 = arith.mulf %191, %190 : vector<8x128xf32>
    %cst_82 = arith.constant 5.000000e-01 : f32
    %193 = vector.broadcast %cst_82 : f32 to vector<8x128xf32>
    %194 = arith.addf %192, %193 : vector<8x128xf32>
    %195 = arith.mulf %184, %161 : vector<8x128xf32>
    %196 = arith.mulf %176, %186 : vector<8x128xf32>
    %197 = arith.addf %195, %196 : vector<8x128xf32>
    %198 = math.tanh %197 : vector<8x128xf32>
    %199 = arith.mulf %194, %198 : vector<8x128xf32>
    %c64_83 = arith.constant 64 : index
    %c0_84 = arith.constant 0 : index
    %200 = vector.load %arg3[%c64_83, %c0_84] : memref<192x512xbf16, #tpu.memory_space<vmem>>, vector<128x512xbf16>
    %c40 = arith.constant 40 : index
    %c0_85 = arith.constant 0 : index
    %201 = vector.load %arg6[%c40, %c0_85] : memref<208x512xf32, #tpu.memory_space<vmem>>, vector<8x512xf32>
    %202 = arith.truncf %199 : vector<8x128xf32> to vector<8x128xbf16>
    %cst_86 = arith.constant dense<0.000000e+00> : vector<8x512xf32>
    %203 = tpu.matmul %202, %200, %cst_86 {dimension_numbers = #tpu.dot_dimension_numbers<[1], [0], [0], [1], [0, 0, 1, 1], [], []>} : vector<8x128xbf16>, vector<128x512xbf16>, vector<8x512xf32> -> vector<8x512xf32>
    %204 = arith.addf %201, %203 : vector<8x512xf32>
    %205 = vector.extract_strided_slice %204 {offsets = [0, 0], sizes = [8, 128], strides = [1, 1]} : vector<8x512xf32> to vector<8x128xf32>
    %cst_87 = arith.constant 5.000000e-01 : f32
    %206 = vector.broadcast %cst_87 : f32 to vector<8x128xf32>
    %207 = arith.mulf %206, %205 : vector<8x128xf32>
    %208 = math.tanh %207 : vector<8x128xf32>
    %cst_88 = arith.constant 5.000000e-01 : f32
    %209 = vector.broadcast %cst_88 : f32 to vector<8x128xf32>
    %210 = arith.mulf %209, %208 : vector<8x128xf32>
    %cst_89 = arith.constant 5.000000e-01 : f32
    %211 = vector.broadcast %cst_89 : f32 to vector<8x128xf32>
    %212 = arith.addf %210, %211 : vector<8x128xf32>
    %213 = vector.extract_strided_slice %204 {offsets = [0, 128], sizes = [8, 128], strides = [1, 1]} : vector<8x512xf32> to vector<8x128xf32>
    %cst_90 = arith.constant 5.000000e-01 : f32
    %214 = vector.broadcast %cst_90 : f32 to vector<8x128xf32>
    %215 = arith.mulf %214, %213 : vector<8x128xf32>
    %216 = math.tanh %215 : vector<8x128xf32>
    %cst_91 = arith.constant 5.000000e-01 : f32
    %217 = vector.broadcast %cst_91 : f32 to vector<8x128xf32>
    %218 = arith.mulf %217, %216 : vector<8x128xf32>
    %cst_92 = arith.constant 5.000000e-01 : f32
    %219 = vector.broadcast %cst_92 : f32 to vector<8x128xf32>
    %220 = arith.addf %218, %219 : vector<8x128xf32>
    %221 = vector.extract_strided_slice %204 {offsets = [0, 256], sizes = [8, 128], strides = [1, 1]} : vector<8x512xf32> to vector<8x128xf32>
    %222 = math.tanh %221 : vector<8x128xf32>
    %223 = vector.extract_strided_slice %204 {offsets = [0, 384], sizes = [8, 128], strides = [1, 1]} : vector<8x512xf32> to vector<8x128xf32>
    %cst_93 = arith.constant 5.000000e-01 : f32
    %224 = vector.broadcast %cst_93 : f32 to vector<8x128xf32>
    %225 = arith.mulf %224, %223 : vector<8x128xf32>
    %226 = math.tanh %225 : vector<8x128xf32>
    %cst_94 = arith.constant 5.000000e-01 : f32
    %227 = vector.broadcast %cst_94 : f32 to vector<8x128xf32>
    %228 = arith.mulf %227, %226 : vector<8x128xf32>
    %cst_95 = arith.constant 5.000000e-01 : f32
    %229 = vector.broadcast %cst_95 : f32 to vector<8x128xf32>
    %230 = arith.addf %228, %229 : vector<8x128xf32>
    %231 = arith.mulf %220, %197 : vector<8x128xf32>
    %232 = arith.mulf %212, %222 : vector<8x128xf32>
    %233 = arith.addf %231, %232 : vector<8x128xf32>
    %234 = math.tanh %233 : vector<8x128xf32>
    %235 = arith.mulf %230, %234 : vector<8x128xf32>
    %c64_96 = arith.constant 64 : index
    %c0_97 = arith.constant 0 : index
    %236 = vector.load %arg3[%c64_96, %c0_97] : memref<192x512xbf16, #tpu.memory_space<vmem>>, vector<128x512xbf16>
    %c48 = arith.constant 48 : index
    %c0_98 = arith.constant 0 : index
    %237 = vector.load %arg6[%c48, %c0_98] : memref<208x512xf32, #tpu.memory_space<vmem>>, vector<8x512xf32>
    %238 = arith.truncf %235 : vector<8x128xf32> to vector<8x128xbf16>
    %cst_99 = arith.constant dense<0.000000e+00> : vector<8x512xf32>
    %239 = tpu.matmul %238, %236, %cst_99 {dimension_numbers = #tpu.dot_dimension_numbers<[1], [0], [0], [1], [0, 0, 1, 1], [], []>} : vector<8x128xbf16>, vector<128x512xbf16>, vector<8x512xf32> -> vector<8x512xf32>
    %240 = arith.addf %237, %239 : vector<8x512xf32>
    %241 = vector.extract_strided_slice %240 {offsets = [0, 0], sizes = [8, 128], strides = [1, 1]} : vector<8x512xf32> to vector<8x128xf32>
    %cst_100 = arith.constant 5.000000e-01 : f32
    %242 = vector.broadcast %cst_100 : f32 to vector<8x128xf32>
    %243 = arith.mulf %242, %241 : vector<8x128xf32>
    %244 = math.tanh %243 : vector<8x128xf32>
    %cst_101 = arith.constant 5.000000e-01 : f32
    %245 = vector.broadcast %cst_101 : f32 to vector<8x128xf32>
    %246 = arith.mulf %245, %244 : vector<8x128xf32>
    %cst_102 = arith.constant 5.000000e-01 : f32
    %247 = vector.broadcast %cst_102 : f32 to vector<8x128xf32>
    %248 = arith.addf %246, %247 : vector<8x128xf32>
    %249 = vector.extract_strided_slice %240 {offsets = [0, 128], sizes = [8, 128], strides = [1, 1]} : vector<8x512xf32> to vector<8x128xf32>
    %cst_103 = arith.constant 5.000000e-01 : f32
    %250 = vector.broadcast %cst_103 : f32 to vector<8x128xf32>
    %251 = arith.mulf %250, %249 : vector<8x128xf32>
    %252 = math.tanh %251 : vector<8x128xf32>
    %cst_104 = arith.constant 5.000000e-01 : f32
    %253 = vector.broadcast %cst_104 : f32 to vector<8x128xf32>
    %254 = arith.mulf %253, %252 : vector<8x128xf32>
    %cst_105 = arith.constant 5.000000e-01 : f32
    %255 = vector.broadcast %cst_105 : f32 to vector<8x128xf32>
    %256 = arith.addf %254, %255 : vector<8x128xf32>
    %257 = vector.extract_strided_slice %240 {offsets = [0, 256], sizes = [8, 128], strides = [1, 1]} : vector<8x512xf32> to vector<8x128xf32>
    %258 = math.tanh %257 : vector<8x128xf32>
    %259 = vector.extract_strided_slice %240 {offsets = [0, 384], sizes = [8, 128], strides = [1, 1]} : vector<8x512xf32> to vector<8x128xf32>
    %cst_106 = arith.constant 5.000000e-01 : f32
    %260 = vector.broadcast %cst_106 : f32 to vector<8x128xf32>
    %261 = arith.mulf %260, %259 : vector<8x128xf32>
    %262 = math.tanh %261 : vector<8x128xf32>
    %cst_107 = arith.constant 5.000000e-01 : f32
    %263 = vector.broadcast %cst_107 : f32 to vector<8x128xf32>
    %264 = arith.mulf %263, %262 : vector<8x128xf32>
    %cst_108 = arith.constant 5.000000e-01 : f32
    %265 = vector.broadcast %cst_108 : f32 to vector<8x128xf32>
    %266 = arith.addf %264, %265 : vector<8x128xf32>
    %267 = arith.mulf %256, %233 : vector<8x128xf32>
    %268 = arith.mulf %248, %258 : vector<8x128xf32>
    %269 = arith.addf %267, %268 : vector<8x128xf32>
    %270 = math.tanh %269 : vector<8x128xf32>
    %271 = arith.mulf %266, %270 : vector<8x128xf32>
    %c64_109 = arith.constant 64 : index
    %c0_110 = arith.constant 0 : index
    %272 = vector.load %arg3[%c64_109, %c0_110] : memref<192x512xbf16, #tpu.memory_space<vmem>>, vector<128x512xbf16>
    %c56 = arith.constant 56 : index
    %c0_111 = arith.constant 0 : index
    %273 = vector.load %arg6[%c56, %c0_111] : memref<208x512xf32, #tpu.memory_space<vmem>>, vector<8x512xf32>
    %274 = arith.truncf %271 : vector<8x128xf32> to vector<8x128xbf16>
    %cst_112 = arith.constant dense<0.000000e+00> : vector<8x512xf32>
    %275 = tpu.matmul %274, %272, %cst_112 {dimension_numbers = #tpu.dot_dimension_numbers<[1], [0], [0], [1], [0, 0, 1, 1], [], []>} : vector<8x128xbf16>, vector<128x512xbf16>, vector<8x512xf32> -> vector<8x512xf32>
    %276 = arith.addf %273, %275 : vector<8x512xf32>
    %277 = vector.extract_strided_slice %276 {offsets = [0, 0], sizes = [8, 128], strides = [1, 1]} : vector<8x512xf32> to vector<8x128xf32>
    %cst_113 = arith.constant 5.000000e-01 : f32
    %278 = vector.broadcast %cst_113 : f32 to vector<8x128xf32>
    %279 = arith.mulf %278, %277 : vector<8x128xf32>
    %280 = math.tanh %279 : vector<8x128xf32>
    %cst_114 = arith.constant 5.000000e-01 : f32
    %281 = vector.broadcast %cst_114 : f32 to vector<8x128xf32>
    %282 = arith.mulf %281, %280 : vector<8x128xf32>
    %cst_115 = arith.constant 5.000000e-01 : f32
    %283 = vector.broadcast %cst_115 : f32 to vector<8x128xf32>
    %284 = arith.addf %282, %283 : vector<8x128xf32>
    %285 = vector.extract_strided_slice %276 {offsets = [0, 128], sizes = [8, 128], strides = [1, 1]} : vector<8x512xf32> to vector<8x128xf32>
    %cst_116 = arith.constant 5.000000e-01 : f32
    %286 = vector.broadcast %cst_116 : f32 to vector<8x128xf32>
    %287 = arith.mulf %286, %285 : vector<8x128xf32>
    %288 = math.tanh %287 : vector<8x128xf32>
    %cst_117 = arith.constant 5.000000e-01 : f32
    %289 = vector.broadcast %cst_117 : f32 to vector<8x128xf32>
    %290 = arith.mulf %289, %288 : vector<8x128xf32>
    %cst_118 = arith.constant 5.000000e-01 : f32
    %291 = vector.broadcast %cst_118 : f32 to vector<8x128xf32>
    %292 = arith.addf %290, %291 : vector<8x128xf32>
    %293 = vector.extract_strided_slice %276 {offsets = [0, 256], sizes = [8, 128], strides = [1, 1]} : vector<8x512xf32> to vector<8x128xf32>
    %294 = math.tanh %293 : vector<8x128xf32>
    %295 = vector.extract_strided_slice %276 {offsets = [0, 384], sizes = [8, 128], strides = [1, 1]} : vector<8x512xf32> to vector<8x128xf32>
    %cst_119 = arith.constant 5.000000e-01 : f32
    %296 = vector.broadcast %cst_119 : f32 to vector<8x128xf32>
    %297 = arith.mulf %296, %295 : vector<8x128xf32>
    %298 = math.tanh %297 : vector<8x128xf32>
    %cst_120 = arith.constant 5.000000e-01 : f32
    %299 = vector.broadcast %cst_120 : f32 to vector<8x128xf32>
    %300 = arith.mulf %299, %298 : vector<8x128xf32>
    %cst_121 = arith.constant 5.000000e-01 : f32
    %301 = vector.broadcast %cst_121 : f32 to vector<8x128xf32>
    %302 = arith.addf %300, %301 : vector<8x128xf32>
    %303 = arith.mulf %292, %269 : vector<8x128xf32>
    %304 = arith.mulf %284, %294 : vector<8x128xf32>
    %305 = arith.addf %303, %304 : vector<8x128xf32>
    %306 = math.tanh %305 : vector<8x128xf32>
    %307 = arith.mulf %302, %306 : vector<8x128xf32>
    %c64_122 = arith.constant 64 : index
    %c0_123 = arith.constant 0 : index
    %308 = vector.load %arg3[%c64_122, %c0_123] : memref<192x512xbf16, #tpu.memory_space<vmem>>, vector<128x512xbf16>
    %c64_124 = arith.constant 64 : index
    %c0_125 = arith.constant 0 : index
    %309 = vector.load %arg6[%c64_124, %c0_125] : memref<208x512xf32, #tpu.memory_space<vmem>>, vector<8x512xf32>
    %310 = arith.truncf %307 : vector<8x128xf32> to vector<8x128xbf16>
    %cst_126 = arith.constant dense<0.000000e+00> : vector<8x512xf32>
    %311 = tpu.matmul %310, %308, %cst_126 {dimension_numbers = #tpu.dot_dimension_numbers<[1], [0], [0], [1], [0, 0, 1, 1], [], []>} : vector<8x128xbf16>, vector<128x512xbf16>, vector<8x512xf32> -> vector<8x512xf32>
    %312 = arith.addf %309, %311 : vector<8x512xf32>
    %313 = vector.extract_strided_slice %312 {offsets = [0, 0], sizes = [8, 128], strides = [1, 1]} : vector<8x512xf32> to vector<8x128xf32>
    %cst_127 = arith.constant 5.000000e-01 : f32
    %314 = vector.broadcast %cst_127 : f32 to vector<8x128xf32>
    %315 = arith.mulf %314, %313 : vector<8x128xf32>
    %316 = math.tanh %315 : vector<8x128xf32>
    %cst_128 = arith.constant 5.000000e-01 : f32
    %317 = vector.broadcast %cst_128 : f32 to vector<8x128xf32>
    %318 = arith.mulf %317, %316 : vector<8x128xf32>
    %cst_129 = arith.constant 5.000000e-01 : f32
    %319 = vector.broadcast %cst_129 : f32 to vector<8x128xf32>
    %320 = arith.addf %318, %319 : vector<8x128xf32>
    %321 = vector.extract_strided_slice %312 {offsets = [0, 128], sizes = [8, 128], strides = [1, 1]} : vector<8x512xf32> to vector<8x128xf32>
    %cst_130 = arith.constant 5.000000e-01 : f32
    %322 = vector.broadcast %cst_130 : f32 to vector<8x128xf32>
    %323 = arith.mulf %322, %321 : vector<8x128xf32>
    %324 = math.tanh %323 : vector<8x128xf32>
    %cst_131 = arith.constant 5.000000e-01 : f32
    %325 = vector.broadcast %cst_131 : f32 to vector<8x128xf32>
    %326 = arith.mulf %325, %324 : vector<8x128xf32>
    %cst_132 = arith.constant 5.000000e-01 : f32
    %327 = vector.broadcast %cst_132 : f32 to vector<8x128xf32>
    %328 = arith.addf %326, %327 : vector<8x128xf32>
    %329 = vector.extract_strided_slice %312 {offsets = [0, 256], sizes = [8, 128], strides = [1, 1]} : vector<8x512xf32> to vector<8x128xf32>
    %330 = math.tanh %329 : vector<8x128xf32>
    %331 = vector.extract_strided_slice %312 {offsets = [0, 384], sizes = [8, 128], strides = [1, 1]} : vector<8x512xf32> to vector<8x128xf32>
    %cst_133 = arith.constant 5.000000e-01 : f32
    %332 = vector.broadcast %cst_133 : f32 to vector<8x128xf32>
    %333 = arith.mulf %332, %331 : vector<8x128xf32>
    %334 = math.tanh %333 : vector<8x128xf32>
    %cst_134 = arith.constant 5.000000e-01 : f32
    %335 = vector.broadcast %cst_134 : f32 to vector<8x128xf32>
    %336 = arith.mulf %335, %334 : vector<8x128xf32>
    %cst_135 = arith.constant 5.000000e-01 : f32
    %337 = vector.broadcast %cst_135 : f32 to vector<8x128xf32>
    %338 = arith.addf %336, %337 : vector<8x128xf32>
    %339 = arith.mulf %328, %305 : vector<8x128xf32>
    %340 = arith.mulf %320, %330 : vector<8x128xf32>
    %341 = arith.addf %339, %340 : vector<8x128xf32>
    %342 = math.tanh %341 : vector<8x128xf32>
    %343 = arith.mulf %338, %342 : vector<8x128xf32>
    %c64_136 = arith.constant 64 : index
    %c0_137 = arith.constant 0 : index
    %344 = vector.load %arg3[%c64_136, %c0_137] : memref<192x512xbf16, #tpu.memory_space<vmem>>, vector<128x512xbf16>
    %c72 = arith.constant 72 : index
    %c0_138 = arith.constant 0 : index
    %345 = vector.load %arg6[%c72, %c0_138] : memref<208x512xf32, #tpu.memory_space<vmem>>, vector<8x512xf32>
    %346 = arith.truncf %343 : vector<8x128xf32> to vector<8x128xbf16>
    %cst_139 = arith.constant dense<0.000000e+00> : vector<8x512xf32>
    %347 = tpu.matmul %346, %344, %cst_139 {dimension_numbers = #tpu.dot_dimension_numbers<[1], [0], [0], [1], [0, 0, 1, 1], [], []>} : vector<8x128xbf16>, vector<128x512xbf16>, vector<8x512xf32> -> vector<8x512xf32>
    %348 = arith.addf %345, %347 : vector<8x512xf32>
    %349 = vector.extract_strided_slice %348 {offsets = [0, 0], sizes = [8, 128], strides = [1, 1]} : vector<8x512xf32> to vector<8x128xf32>
    %cst_140 = arith.constant 5.000000e-01 : f32
    %350 = vector.broadcast %cst_140 : f32 to vector<8x128xf32>
    %351 = arith.mulf %350, %349 : vector<8x128xf32>
    %352 = math.tanh %351 : vector<8x128xf32>
    %cst_141 = arith.constant 5.000000e-01 : f32
    %353 = vector.broadcast %cst_141 : f32 to vector<8x128xf32>
    %354 = arith.mulf %353, %352 : vector<8x128xf32>
    %cst_142 = arith.constant 5.000000e-01 : f32
    %355 = vector.broadcast %cst_142 : f32 to vector<8x128xf32>
    %356 = arith.addf %354, %355 : vector<8x128xf32>
    %357 = vector.extract_strided_slice %348 {offsets = [0, 128], sizes = [8, 128], strides = [1, 1]} : vector<8x512xf32> to vector<8x128xf32>
    %cst_143 = arith.constant 5.000000e-01 : f32
    %358 = vector.broadcast %cst_143 : f32 to vector<8x128xf32>
    %359 = arith.mulf %358, %357 : vector<8x128xf32>
    %360 = math.tanh %359 : vector<8x128xf32>
    %cst_144 = arith.constant 5.000000e-01 : f32
    %361 = vector.broadcast %cst_144 : f32 to vector<8x128xf32>
    %362 = arith.mulf %361, %360 : vector<8x128xf32>
    %cst_145 = arith.constant 5.000000e-01 : f32
    %363 = vector.broadcast %cst_145 : f32 to vector<8x128xf32>
    %364 = arith.addf %362, %363 : vector<8x128xf32>
    %365 = vector.extract_strided_slice %348 {offsets = [0, 256], sizes = [8, 128], strides = [1, 1]} : vector<8x512xf32> to vector<8x128xf32>
    %366 = math.tanh %365 : vector<8x128xf32>
    %367 = vector.extract_strided_slice %348 {offsets = [0, 384], sizes = [8, 128], strides = [1, 1]} : vector<8x512xf32> to vector<8x128xf32>
    %cst_146 = arith.constant 5.000000e-01 : f32
    %368 = vector.broadcast %cst_146 : f32 to vector<8x128xf32>
    %369 = arith.mulf %368, %367 : vector<8x128xf32>
    %370 = math.tanh %369 : vector<8x128xf32>
    %cst_147 = arith.constant 5.000000e-01 : f32
    %371 = vector.broadcast %cst_147 : f32 to vector<8x128xf32>
    %372 = arith.mulf %371, %370 : vector<8x128xf32>
    %cst_148 = arith.constant 5.000000e-01 : f32
    %373 = vector.broadcast %cst_148 : f32 to vector<8x128xf32>
    %374 = arith.addf %372, %373 : vector<8x128xf32>
    %375 = arith.mulf %364, %341 : vector<8x128xf32>
    %376 = arith.mulf %356, %366 : vector<8x128xf32>
    %377 = arith.addf %375, %376 : vector<8x128xf32>
    %378 = math.tanh %377 : vector<8x128xf32>
    %379 = arith.mulf %374, %378 : vector<8x128xf32>
    %c64_149 = arith.constant 64 : index
    %c0_150 = arith.constant 0 : index
    %380 = vector.load %arg3[%c64_149, %c0_150] : memref<192x512xbf16, #tpu.memory_space<vmem>>, vector<128x512xbf16>
    %c80 = arith.constant 80 : index
    %c0_151 = arith.constant 0 : index
    %381 = vector.load %arg6[%c80, %c0_151] : memref<208x512xf32, #tpu.memory_space<vmem>>, vector<8x512xf32>
    %382 = arith.truncf %379 : vector<8x128xf32> to vector<8x128xbf16>
    %cst_152 = arith.constant dense<0.000000e+00> : vector<8x512xf32>
    %383 = tpu.matmul %382, %380, %cst_152 {dimension_numbers = #tpu.dot_dimension_numbers<[1], [0], [0], [1], [0, 0, 1, 1], [], []>} : vector<8x128xbf16>, vector<128x512xbf16>, vector<8x512xf32> -> vector<8x512xf32>
    %384 = arith.addf %381, %383 : vector<8x512xf32>
    %385 = vector.extract_strided_slice %384 {offsets = [0, 0], sizes = [8, 128], strides = [1, 1]} : vector<8x512xf32> to vector<8x128xf32>
    %cst_153 = arith.constant 5.000000e-01 : f32
    %386 = vector.broadcast %cst_153 : f32 to vector<8x128xf32>
    %387 = arith.mulf %386, %385 : vector<8x128xf32>
    %388 = math.tanh %387 : vector<8x128xf32>
    %cst_154 = arith.constant 5.000000e-01 : f32
    %389 = vector.broadcast %cst_154 : f32 to vector<8x128xf32>
    %390 = arith.mulf %389, %388 : vector<8x128xf32>
    %cst_155 = arith.constant 5.000000e-01 : f32
    %391 = vector.broadcast %cst_155 : f32 to vector<8x128xf32>
    %392 = arith.addf %390, %391 : vector<8x128xf32>
    %393 = vector.extract_strided_slice %384 {offsets = [0, 128], sizes = [8, 128], strides = [1, 1]} : vector<8x512xf32> to vector<8x128xf32>
    %cst_156 = arith.constant 5.000000e-01 : f32
    %394 = vector.broadcast %cst_156 : f32 to vector<8x128xf32>
    %395 = arith.mulf %394, %393 : vector<8x128xf32>
    %396 = math.tanh %395 : vector<8x128xf32>
    %cst_157 = arith.constant 5.000000e-01 : f32
    %397 = vector.broadcast %cst_157 : f32 to vector<8x128xf32>
    %398 = arith.mulf %397, %396 : vector<8x128xf32>
    %cst_158 = arith.constant 5.000000e-01 : f32
    %399 = vector.broadcast %cst_158 : f32 to vector<8x128xf32>
    %400 = arith.addf %398, %399 : vector<8x128xf32>
    %401 = vector.extract_strided_slice %384 {offsets = [0, 256], sizes = [8, 128], strides = [1, 1]} : vector<8x512xf32> to vector<8x128xf32>
    %402 = math.tanh %401 : vector<8x128xf32>
    %403 = vector.extract_strided_slice %384 {offsets = [0, 384], sizes = [8, 128], strides = [1, 1]} : vector<8x512xf32> to vector<8x128xf32>
    %cst_159 = arith.constant 5.000000e-01 : f32
    %404 = vector.broadcast %cst_159 : f32 to vector<8x128xf32>
    %405 = arith.mulf %404, %403 : vector<8x128xf32>
    %406 = math.tanh %405 : vector<8x128xf32>
    %cst_160 = arith.constant 5.000000e-01 : f32
    %407 = vector.broadcast %cst_160 : f32 to vector<8x128xf32>
    %408 = arith.mulf %407, %406 : vector<8x128xf32>
    %cst_161 = arith.constant 5.000000e-01 : f32
    %409 = vector.broadcast %cst_161 : f32 to vector<8x128xf32>
    %410 = arith.addf %408, %409 : vector<8x128xf32>
    %411 = arith.mulf %400, %377 : vector<8x128xf32>
    %412 = arith.mulf %392, %402 : vector<8x128xf32>
    %413 = arith.addf %411, %412 : vector<8x128xf32>
    %414 = math.tanh %413 : vector<8x128xf32>
    %415 = arith.mulf %410, %414 : vector<8x128xf32>
    %c64_162 = arith.constant 64 : index
    %c0_163 = arith.constant 0 : index
    %416 = vector.load %arg3[%c64_162, %c0_163] : memref<192x512xbf16, #tpu.memory_space<vmem>>, vector<128x512xbf16>
    %c88 = arith.constant 88 : index
    %c0_164 = arith.constant 0 : index
    %417 = vector.load %arg6[%c88, %c0_164] : memref<208x512xf32, #tpu.memory_space<vmem>>, vector<8x512xf32>
    %418 = arith.truncf %415 : vector<8x128xf32> to vector<8x128xbf16>
    %cst_165 = arith.constant dense<0.000000e+00> : vector<8x512xf32>
    %419 = tpu.matmul %418, %416, %cst_165 {dimension_numbers = #tpu.dot_dimension_numbers<[1], [0], [0], [1], [0, 0, 1, 1], [], []>} : vector<8x128xbf16>, vector<128x512xbf16>, vector<8x512xf32> -> vector<8x512xf32>
    %420 = arith.addf %417, %419 : vector<8x512xf32>
    %421 = vector.extract_strided_slice %420 {offsets = [0, 0], sizes = [8, 128], strides = [1, 1]} : vector<8x512xf32> to vector<8x128xf32>
    %cst_166 = arith.constant 5.000000e-01 : f32
    %422 = vector.broadcast %cst_166 : f32 to vector<8x128xf32>
    %423 = arith.mulf %422, %421 : vector<8x128xf32>
    %424 = math.tanh %423 : vector<8x128xf32>
    %cst_167 = arith.constant 5.000000e-01 : f32
    %425 = vector.broadcast %cst_167 : f32 to vector<8x128xf32>
    %426 = arith.mulf %425, %424 : vector<8x128xf32>
    %cst_168 = arith.constant 5.000000e-01 : f32
    %427 = vector.broadcast %cst_168 : f32 to vector<8x128xf32>
    %428 = arith.addf %426, %427 : vector<8x128xf32>
    %429 = vector.extract_strided_slice %420 {offsets = [0, 128], sizes = [8, 128], strides = [1, 1]} : vector<8x512xf32> to vector<8x128xf32>
    %cst_169 = arith.constant 5.000000e-01 : f32
    %430 = vector.broadcast %cst_169 : f32 to vector<8x128xf32>
    %431 = arith.mulf %430, %429 : vector<8x128xf32>
    %432 = math.tanh %431 : vector<8x128xf32>
    %cst_170 = arith.constant 5.000000e-01 : f32
    %433 = vector.broadcast %cst_170 : f32 to vector<8x128xf32>
    %434 = arith.mulf %433, %432 : vector<8x128xf32>
    %cst_171 = arith.constant 5.000000e-01 : f32
    %435 = vector.broadcast %cst_171 : f32 to vector<8x128xf32>
    %436 = arith.addf %434, %435 : vector<8x128xf32>
    %437 = vector.extract_strided_slice %420 {offsets = [0, 256], sizes = [8, 128], strides = [1, 1]} : vector<8x512xf32> to vector<8x128xf32>
    %438 = math.tanh %437 : vector<8x128xf32>
    %439 = vector.extract_strided_slice %420 {offsets = [0, 384], sizes = [8, 128], strides = [1, 1]} : vector<8x512xf32> to vector<8x128xf32>
    %cst_172 = arith.constant 5.000000e-01 : f32
    %440 = vector.broadcast %cst_172 : f32 to vector<8x128xf32>
    %441 = arith.mulf %440, %439 : vector<8x128xf32>
    %442 = math.tanh %441 : vector<8x128xf32>
    %cst_173 = arith.constant 5.000000e-01 : f32
    %443 = vector.broadcast %cst_173 : f32 to vector<8x128xf32>
    %444 = arith.mulf %443, %442 : vector<8x128xf32>
    %cst_174 = arith.constant 5.000000e-01 : f32
    %445 = vector.broadcast %cst_174 : f32 to vector<8x128xf32>
    %446 = arith.addf %444, %445 : vector<8x128xf32>
    %447 = arith.mulf %436, %413 : vector<8x128xf32>
    %448 = arith.mulf %428, %438 : vector<8x128xf32>
    %449 = arith.addf %447, %448 : vector<8x128xf32>
    %450 = math.tanh %449 : vector<8x128xf32>
    %451 = arith.mulf %446, %450 : vector<8x128xf32>
    %c64_175 = arith.constant 64 : index
    %c0_176 = arith.constant 0 : index
    %452 = vector.load %arg3[%c64_175, %c0_176] : memref<192x512xbf16, #tpu.memory_space<vmem>>, vector<128x512xbf16>
    %c96 = arith.constant 96 : index
    %c0_177 = arith.constant 0 : index
    %453 = vector.load %arg6[%c96, %c0_177] : memref<208x512xf32, #tpu.memory_space<vmem>>, vector<8x512xf32>
    %454 = arith.truncf %451 : vector<8x128xf32> to vector<8x128xbf16>
    %cst_178 = arith.constant dense<0.000000e+00> : vector<8x512xf32>
    %455 = tpu.matmul %454, %452, %cst_178 {dimension_numbers = #tpu.dot_dimension_numbers<[1], [0], [0], [1], [0, 0, 1, 1], [], []>} : vector<8x128xbf16>, vector<128x512xbf16>, vector<8x512xf32> -> vector<8x512xf32>
    %456 = arith.addf %453, %455 : vector<8x512xf32>
    %457 = vector.extract_strided_slice %456 {offsets = [0, 0], sizes = [8, 128], strides = [1, 1]} : vector<8x512xf32> to vector<8x128xf32>
    %cst_179 = arith.constant 5.000000e-01 : f32
    %458 = vector.broadcast %cst_179 : f32 to vector<8x128xf32>
    %459 = arith.mulf %458, %457 : vector<8x128xf32>
    %460 = math.tanh %459 : vector<8x128xf32>
    %cst_180 = arith.constant 5.000000e-01 : f32
    %461 = vector.broadcast %cst_180 : f32 to vector<8x128xf32>
    %462 = arith.mulf %461, %460 : vector<8x128xf32>
    %cst_181 = arith.constant 5.000000e-01 : f32
    %463 = vector.broadcast %cst_181 : f32 to vector<8x128xf32>
    %464 = arith.addf %462, %463 : vector<8x128xf32>
    %465 = vector.extract_strided_slice %456 {offsets = [0, 128], sizes = [8, 128], strides = [1, 1]} : vector<8x512xf32> to vector<8x128xf32>
    %cst_182 = arith.constant 5.000000e-01 : f32
    %466 = vector.broadcast %cst_182 : f32 to vector<8x128xf32>
    %467 = arith.mulf %466, %465 : vector<8x128xf32>
    %468 = math.tanh %467 : vector<8x128xf32>
    %cst_183 = arith.constant 5.000000e-01 : f32
    %469 = vector.broadcast %cst_183 : f32 to vector<8x128xf32>
    %470 = arith.mulf %469, %468 : vector<8x128xf32>
    %cst_184 = arith.constant 5.000000e-01 : f32
    %471 = vector.broadcast %cst_184 : f32 to vector<8x128xf32>
    %472 = arith.addf %470, %471 : vector<8x128xf32>
    %473 = vector.extract_strided_slice %456 {offsets = [0, 256], sizes = [8, 128], strides = [1, 1]} : vector<8x512xf32> to vector<8x128xf32>
    %474 = math.tanh %473 : vector<8x128xf32>
    %475 = vector.extract_strided_slice %456 {offsets = [0, 384], sizes = [8, 128], strides = [1, 1]} : vector<8x512xf32> to vector<8x128xf32>
    %cst_185 = arith.constant 5.000000e-01 : f32
    %476 = vector.broadcast %cst_185 : f32 to vector<8x128xf32>
    %477 = arith.mulf %476, %475 : vector<8x128xf32>
    %478 = math.tanh %477 : vector<8x128xf32>
    %cst_186 = arith.constant 5.000000e-01 : f32
    %479 = vector.broadcast %cst_186 : f32 to vector<8x128xf32>
    %480 = arith.mulf %479, %478 : vector<8x128xf32>
    %cst_187 = arith.constant 5.000000e-01 : f32
    %481 = vector.broadcast %cst_187 : f32 to vector<8x128xf32>
    %482 = arith.addf %480, %481 : vector<8x128xf32>
    %483 = arith.mulf %472, %449 : vector<8x128xf32>
    %484 = arith.mulf %464, %474 : vector<8x128xf32>
    %485 = arith.addf %483, %484 : vector<8x128xf32>
    %486 = math.tanh %485 : vector<8x128xf32>
    %487 = arith.mulf %482, %486 : vector<8x128xf32>
    %c64_188 = arith.constant 64 : index
    %c0_189 = arith.constant 0 : index
    %488 = vector.load %arg3[%c64_188, %c0_189] : memref<192x512xbf16, #tpu.memory_space<vmem>>, vector<128x512xbf16>
    %c104 = arith.constant 104 : index
    %c0_190 = arith.constant 0 : index
    %489 = vector.load %arg6[%c104, %c0_190] : memref<208x512xf32, #tpu.memory_space<vmem>>, vector<8x512xf32>
    %490 = arith.truncf %487 : vector<8x128xf32> to vector<8x128xbf16>
    %cst_191 = arith.constant dense<0.000000e+00> : vector<8x512xf32>
    %491 = tpu.matmul %490, %488, %cst_191 {dimension_numbers = #tpu.dot_dimension_numbers<[1], [0], [0], [1], [0, 0, 1, 1], [], []>} : vector<8x128xbf16>, vector<128x512xbf16>, vector<8x512xf32> -> vector<8x512xf32>
    %492 = arith.addf %489, %491 : vector<8x512xf32>
    %493 = vector.extract_strided_slice %492 {offsets = [0, 0], sizes = [8, 128], strides = [1, 1]} : vector<8x512xf32> to vector<8x128xf32>
    %cst_192 = arith.constant 5.000000e-01 : f32
    %494 = vector.broadcast %cst_192 : f32 to vector<8x128xf32>
    %495 = arith.mulf %494, %493 : vector<8x128xf32>
    %496 = math.tanh %495 : vector<8x128xf32>
    %cst_193 = arith.constant 5.000000e-01 : f32
    %497 = vector.broadcast %cst_193 : f32 to vector<8x128xf32>
    %498 = arith.mulf %497, %496 : vector<8x128xf32>
    %cst_194 = arith.constant 5.000000e-01 : f32
    %499 = vector.broadcast %cst_194 : f32 to vector<8x128xf32>
    %500 = arith.addf %498, %499 : vector<8x128xf32>
    %501 = vector.extract_strided_slice %492 {offsets = [0, 128], sizes = [8, 128], strides = [1, 1]} : vector<8x512xf32> to vector<8x128xf32>
    %cst_195 = arith.constant 5.000000e-01 : f32
    %502 = vector.broadcast %cst_195 : f32 to vector<8x128xf32>
    %503 = arith.mulf %502, %501 : vector<8x128xf32>
    %504 = math.tanh %503 : vector<8x128xf32>
    %cst_196 = arith.constant 5.000000e-01 : f32
    %505 = vector.broadcast %cst_196 : f32 to vector<8x128xf32>
    %506 = arith.mulf %505, %504 : vector<8x128xf32>
    %cst_197 = arith.constant 5.000000e-01 : f32
    %507 = vector.broadcast %cst_197 : f32 to vector<8x128xf32>
    %508 = arith.addf %506, %507 : vector<8x128xf32>
    %509 = vector.extract_strided_slice %492 {offsets = [0, 256], sizes = [8, 128], strides = [1, 1]} : vector<8x512xf32> to vector<8x128xf32>
    %510 = math.tanh %509 : vector<8x128xf32>
    %511 = vector.extract_strided_slice %492 {offsets = [0, 384], sizes = [8, 128], strides = [1, 1]} : vector<8x512xf32> to vector<8x128xf32>
    %cst_198 = arith.constant 5.000000e-01 : f32
    %512 = vector.broadcast %cst_198 : f32 to vector<8x128xf32>
    %513 = arith.mulf %512, %511 : vector<8x128xf32>
    %514 = math.tanh %513 : vector<8x128xf32>
    %cst_199 = arith.constant 5.000000e-01 : f32
    %515 = vector.broadcast %cst_199 : f32 to vector<8x128xf32>
    %516 = arith.mulf %515, %514 : vector<8x128xf32>
    %cst_200 = arith.constant 5.000000e-01 : f32
    %517 = vector.broadcast %cst_200 : f32 to vector<8x128xf32>
    %518 = arith.addf %516, %517 : vector<8x128xf32>
    %519 = arith.mulf %508, %485 : vector<8x128xf32>
    %520 = arith.mulf %500, %510 : vector<8x128xf32>
    %521 = arith.addf %519, %520 : vector<8x128xf32>
    %522 = math.tanh %521 : vector<8x128xf32>
    %523 = arith.mulf %518, %522 : vector<8x128xf32>
    %c64_201 = arith.constant 64 : index
    %c0_202 = arith.constant 0 : index
    %524 = vector.load %arg3[%c64_201, %c0_202] : memref<192x512xbf16, #tpu.memory_space<vmem>>, vector<128x512xbf16>
    %c112 = arith.constant 112 : index
    %c0_203 = arith.constant 0 : index
    %525 = vector.load %arg6[%c112, %c0_203] : memref<208x512xf32, #tpu.memory_space<vmem>>, vector<8x512xf32>
    %526 = arith.truncf %523 : vector<8x128xf32> to vector<8x128xbf16>
    %cst_204 = arith.constant dense<0.000000e+00> : vector<8x512xf32>
    %527 = tpu.matmul %526, %524, %cst_204 {dimension_numbers = #tpu.dot_dimension_numbers<[1], [0], [0], [1], [0, 0, 1, 1], [], []>} : vector<8x128xbf16>, vector<128x512xbf16>, vector<8x512xf32> -> vector<8x512xf32>
    %528 = arith.addf %525, %527 : vector<8x512xf32>
    %529 = vector.extract_strided_slice %528 {offsets = [0, 0], sizes = [8, 128], strides = [1, 1]} : vector<8x512xf32> to vector<8x128xf32>
    %cst_205 = arith.constant 5.000000e-01 : f32
    %530 = vector.broadcast %cst_205 : f32 to vector<8x128xf32>
    %531 = arith.mulf %530, %529 : vector<8x128xf32>
    %532 = math.tanh %531 : vector<8x128xf32>
    %cst_206 = arith.constant 5.000000e-01 : f32
    %533 = vector.broadcast %cst_206 : f32 to vector<8x128xf32>
    %534 = arith.mulf %533, %532 : vector<8x128xf32>
    %cst_207 = arith.constant 5.000000e-01 : f32
    %535 = vector.broadcast %cst_207 : f32 to vector<8x128xf32>
    %536 = arith.addf %534, %535 : vector<8x128xf32>
    %537 = vector.extract_strided_slice %528 {offsets = [0, 128], sizes = [8, 128], strides = [1, 1]} : vector<8x512xf32> to vector<8x128xf32>
    %cst_208 = arith.constant 5.000000e-01 : f32
    %538 = vector.broadcast %cst_208 : f32 to vector<8x128xf32>
    %539 = arith.mulf %538, %537 : vector<8x128xf32>
    %540 = math.tanh %539 : vector<8x128xf32>
    %cst_209 = arith.constant 5.000000e-01 : f32
    %541 = vector.broadcast %cst_209 : f32 to vector<8x128xf32>
    %542 = arith.mulf %541, %540 : vector<8x128xf32>
    %cst_210 = arith.constant 5.000000e-01 : f32
    %543 = vector.broadcast %cst_210 : f32 to vector<8x128xf32>
    %544 = arith.addf %542, %543 : vector<8x128xf32>
    %545 = vector.extract_strided_slice %528 {offsets = [0, 256], sizes = [8, 128], strides = [1, 1]} : vector<8x512xf32> to vector<8x128xf32>
    %546 = math.tanh %545 : vector<8x128xf32>
    %547 = vector.extract_strided_slice %528 {offsets = [0, 384], sizes = [8, 128], strides = [1, 1]} : vector<8x512xf32> to vector<8x128xf32>
    %cst_211 = arith.constant 5.000000e-01 : f32
    %548 = vector.broadcast %cst_211 : f32 to vector<8x128xf32>
    %549 = arith.mulf %548, %547 : vector<8x128xf32>
    %550 = math.tanh %549 : vector<8x128xf32>
    %cst_212 = arith.constant 5.000000e-01 : f32
    %551 = vector.broadcast %cst_212 : f32 to vector<8x128xf32>
    %552 = arith.mulf %551, %550 : vector<8x128xf32>
    %cst_213 = arith.constant 5.000000e-01 : f32
    %553 = vector.broadcast %cst_213 : f32 to vector<8x128xf32>
    %554 = arith.addf %552, %553 : vector<8x128xf32>
    %555 = arith.mulf %544, %521 : vector<8x128xf32>
    %556 = arith.mulf %536, %546 : vector<8x128xf32>
    %557 = arith.addf %555, %556 : vector<8x128xf32>
    %558 = math.tanh %557 : vector<8x128xf32>
    %559 = arith.mulf %554, %558 : vector<8x128xf32>
    %c64_214 = arith.constant 64 : index
    %c0_215 = arith.constant 0 : index
    %560 = vector.load %arg3[%c64_214, %c0_215] : memref<192x512xbf16, #tpu.memory_space<vmem>>, vector<128x512xbf16>
    %c120 = arith.constant 120 : index
    %c0_216 = arith.constant 0 : index
    %561 = vector.load %arg6[%c120, %c0_216] : memref<208x512xf32, #tpu.memory_space<vmem>>, vector<8x512xf32>
    %562 = arith.truncf %559 : vector<8x128xf32> to vector<8x128xbf16>
    %cst_217 = arith.constant dense<0.000000e+00> : vector<8x512xf32>
    %563 = tpu.matmul %562, %560, %cst_217 {dimension_numbers = #tpu.dot_dimension_numbers<[1], [0], [0], [1], [0, 0, 1, 1], [], []>} : vector<8x128xbf16>, vector<128x512xbf16>, vector<8x512xf32> -> vector<8x512xf32>
    %564 = arith.addf %561, %563 : vector<8x512xf32>
    %565 = vector.extract_strided_slice %564 {offsets = [0, 0], sizes = [8, 128], strides = [1, 1]} : vector<8x512xf32> to vector<8x128xf32>
    %cst_218 = arith.constant 5.000000e-01 : f32
    %566 = vector.broadcast %cst_218 : f32 to vector<8x128xf32>
    %567 = arith.mulf %566, %565 : vector<8x128xf32>
    %568 = math.tanh %567 : vector<8x128xf32>
    %cst_219 = arith.constant 5.000000e-01 : f32
    %569 = vector.broadcast %cst_219 : f32 to vector<8x128xf32>
    %570 = arith.mulf %569, %568 : vector<8x128xf32>
    %cst_220 = arith.constant 5.000000e-01 : f32
    %571 = vector.broadcast %cst_220 : f32 to vector<8x128xf32>
    %572 = arith.addf %570, %571 : vector<8x128xf32>
    %573 = vector.extract_strided_slice %564 {offsets = [0, 128], sizes = [8, 128], strides = [1, 1]} : vector<8x512xf32> to vector<8x128xf32>
    %cst_221 = arith.constant 5.000000e-01 : f32
    %574 = vector.broadcast %cst_221 : f32 to vector<8x128xf32>
    %575 = arith.mulf %574, %573 : vector<8x128xf32>
    %576 = math.tanh %575 : vector<8x128xf32>
    %cst_222 = arith.constant 5.000000e-01 : f32
    %577 = vector.broadcast %cst_222 : f32 to vector<8x128xf32>
    %578 = arith.mulf %577, %576 : vector<8x128xf32>
    %cst_223 = arith.constant 5.000000e-01 : f32
    %579 = vector.broadcast %cst_223 : f32 to vector<8x128xf32>
    %580 = arith.addf %578, %579 : vector<8x128xf32>
    %581 = vector.extract_strided_slice %564 {offsets = [0, 256], sizes = [8, 128], strides = [1, 1]} : vector<8x512xf32> to vector<8x128xf32>
    %582 = math.tanh %581 : vector<8x128xf32>
    %583 = vector.extract_strided_slice %564 {offsets = [0, 384], sizes = [8, 128], strides = [1, 1]} : vector<8x512xf32> to vector<8x128xf32>
    %cst_224 = arith.constant 5.000000e-01 : f32
    %584 = vector.broadcast %cst_224 : f32 to vector<8x128xf32>
    %585 = arith.mulf %584, %583 : vector<8x128xf32>
    %586 = math.tanh %585 : vector<8x128xf32>
    %cst_225 = arith.constant 5.000000e-01 : f32
    %587 = vector.broadcast %cst_225 : f32 to vector<8x128xf32>
    %588 = arith.mulf %587, %586 : vector<8x128xf32>
    %cst_226 = arith.constant 5.000000e-01 : f32
    %589 = vector.broadcast %cst_226 : f32 to vector<8x128xf32>
    %590 = arith.addf %588, %589 : vector<8x128xf32>
    %591 = arith.mulf %580, %557 : vector<8x128xf32>
    %592 = arith.mulf %572, %582 : vector<8x128xf32>
    %593 = arith.addf %591, %592 : vector<8x128xf32>
    %594 = math.tanh %593 : vector<8x128xf32>
    %595 = arith.mulf %590, %594 : vector<8x128xf32>
    %c64_227 = arith.constant 64 : index
    %c0_228 = arith.constant 0 : index
    %596 = vector.load %arg3[%c64_227, %c0_228] : memref<192x512xbf16, #tpu.memory_space<vmem>>, vector<128x512xbf16>
    %c128 = arith.constant 128 : index
    %c0_229 = arith.constant 0 : index
    %597 = vector.load %arg6[%c128, %c0_229] : memref<208x512xf32, #tpu.memory_space<vmem>>, vector<8x512xf32>
    %598 = arith.truncf %595 : vector<8x128xf32> to vector<8x128xbf16>
    %cst_230 = arith.constant dense<0.000000e+00> : vector<8x512xf32>
    %599 = tpu.matmul %598, %596, %cst_230 {dimension_numbers = #tpu.dot_dimension_numbers<[1], [0], [0], [1], [0, 0, 1, 1], [], []>} : vector<8x128xbf16>, vector<128x512xbf16>, vector<8x512xf32> -> vector<8x512xf32>
    %600 = arith.addf %597, %599 : vector<8x512xf32>
    %601 = vector.extract_strided_slice %600 {offsets = [0, 0], sizes = [8, 128], strides = [1, 1]} : vector<8x512xf32> to vector<8x128xf32>
    %cst_231 = arith.constant 5.000000e-01 : f32
    %602 = vector.broadcast %cst_231 : f32 to vector<8x128xf32>
    %603 = arith.mulf %602, %601 : vector<8x128xf32>
    %604 = math.tanh %603 : vector<8x128xf32>
    %cst_232 = arith.constant 5.000000e-01 : f32
    %605 = vector.broadcast %cst_232 : f32 to vector<8x128xf32>
    %606 = arith.mulf %605, %604 : vector<8x128xf32>
    %cst_233 = arith.constant 5.000000e-01 : f32
    %607 = vector.broadcast %cst_233 : f32 to vector<8x128xf32>
    %608 = arith.addf %606, %607 : vector<8x128xf32>
    %609 = vector.extract_strided_slice %600 {offsets = [0, 128], sizes = [8, 128], strides = [1, 1]} : vector<8x512xf32> to vector<8x128xf32>
    %cst_234 = arith.constant 5.000000e-01 : f32
    %610 = vector.broadcast %cst_234 : f32 to vector<8x128xf32>
    %611 = arith.mulf %610, %609 : vector<8x128xf32>
    %612 = math.tanh %611 : vector<8x128xf32>
    %cst_235 = arith.constant 5.000000e-01 : f32
    %613 = vector.broadcast %cst_235 : f32 to vector<8x128xf32>
    %614 = arith.mulf %613, %612 : vector<8x128xf32>
    %cst_236 = arith.constant 5.000000e-01 : f32
    %615 = vector.broadcast %cst_236 : f32 to vector<8x128xf32>
    %616 = arith.addf %614, %615 : vector<8x128xf32>
    %617 = vector.extract_strided_slice %600 {offsets = [0, 256], sizes = [8, 128], strides = [1, 1]} : vector<8x512xf32> to vector<8x128xf32>
    %618 = math.tanh %617 : vector<8x128xf32>
    %619 = vector.extract_strided_slice %600 {offsets = [0, 384], sizes = [8, 128], strides = [1, 1]} : vector<8x512xf32> to vector<8x128xf32>
    %cst_237 = arith.constant 5.000000e-01 : f32
    %620 = vector.broadcast %cst_237 : f32 to vector<8x128xf32>
    %621 = arith.mulf %620, %619 : vector<8x128xf32>
    %622 = math.tanh %621 : vector<8x128xf32>
    %cst_238 = arith.constant 5.000000e-01 : f32
    %623 = vector.broadcast %cst_238 : f32 to vector<8x128xf32>
    %624 = arith.mulf %623, %622 : vector<8x128xf32>
    %cst_239 = arith.constant 5.000000e-01 : f32
    %625 = vector.broadcast %cst_239 : f32 to vector<8x128xf32>
    %626 = arith.addf %624, %625 : vector<8x128xf32>
    %627 = arith.mulf %616, %593 : vector<8x128xf32>
    %628 = arith.mulf %608, %618 : vector<8x128xf32>
    %629 = arith.addf %627, %628 : vector<8x128xf32>
    %630 = math.tanh %629 : vector<8x128xf32>
    %631 = arith.mulf %626, %630 : vector<8x128xf32>
    %c64_240 = arith.constant 64 : index
    %c0_241 = arith.constant 0 : index
    %632 = vector.load %arg3[%c64_240, %c0_241] : memref<192x512xbf16, #tpu.memory_space<vmem>>, vector<128x512xbf16>
    %c136 = arith.constant 136 : index
    %c0_242 = arith.constant 0 : index
    %633 = vector.load %arg6[%c136, %c0_242] : memref<208x512xf32, #tpu.memory_space<vmem>>, vector<8x512xf32>
    %634 = arith.truncf %631 : vector<8x128xf32> to vector<8x128xbf16>
    %cst_243 = arith.constant dense<0.000000e+00> : vector<8x512xf32>
    %635 = tpu.matmul %634, %632, %cst_243 {dimension_numbers = #tpu.dot_dimension_numbers<[1], [0], [0], [1], [0, 0, 1, 1], [], []>} : vector<8x128xbf16>, vector<128x512xbf16>, vector<8x512xf32> -> vector<8x512xf32>
    %636 = arith.addf %633, %635 : vector<8x512xf32>
    %637 = vector.extract_strided_slice %636 {offsets = [0, 0], sizes = [8, 128], strides = [1, 1]} : vector<8x512xf32> to vector<8x128xf32>
    %cst_244 = arith.constant 5.000000e-01 : f32
    %638 = vector.broadcast %cst_244 : f32 to vector<8x128xf32>
    %639 = arith.mulf %638, %637 : vector<8x128xf32>
    %640 = math.tanh %639 : vector<8x128xf32>
    %cst_245 = arith.constant 5.000000e-01 : f32
    %641 = vector.broadcast %cst_245 : f32 to vector<8x128xf32>
    %642 = arith.mulf %641, %640 : vector<8x128xf32>
    %cst_246 = arith.constant 5.000000e-01 : f32
    %643 = vector.broadcast %cst_246 : f32 to vector<8x128xf32>
    %644 = arith.addf %642, %643 : vector<8x128xf32>
    %645 = vector.extract_strided_slice %636 {offsets = [0, 128], sizes = [8, 128], strides = [1, 1]} : vector<8x512xf32> to vector<8x128xf32>
    %cst_247 = arith.constant 5.000000e-01 : f32
    %646 = vector.broadcast %cst_247 : f32 to vector<8x128xf32>
    %647 = arith.mulf %646, %645 : vector<8x128xf32>
    %648 = math.tanh %647 : vector<8x128xf32>
    %cst_248 = arith.constant 5.000000e-01 : f32
    %649 = vector.broadcast %cst_248 : f32 to vector<8x128xf32>
    %650 = arith.mulf %649, %648 : vector<8x128xf32>
    %cst_249 = arith.constant 5.000000e-01 : f32
    %651 = vector.broadcast %cst_249 : f32 to vector<8x128xf32>
    %652 = arith.addf %650, %651 : vector<8x128xf32>
    %653 = vector.extract_strided_slice %636 {offsets = [0, 256], sizes = [8, 128], strides = [1, 1]} : vector<8x512xf32> to vector<8x128xf32>
    %654 = math.tanh %653 : vector<8x128xf32>
    %655 = vector.extract_strided_slice %636 {offsets = [0, 384], sizes = [8, 128], strides = [1, 1]} : vector<8x512xf32> to vector<8x128xf32>
    %cst_250 = arith.constant 5.000000e-01 : f32
    %656 = vector.broadcast %cst_250 : f32 to vector<8x128xf32>
    %657 = arith.mulf %656, %655 : vector<8x128xf32>
    %658 = math.tanh %657 : vector<8x128xf32>
    %cst_251 = arith.constant 5.000000e-01 : f32
    %659 = vector.broadcast %cst_251 : f32 to vector<8x128xf32>
    %660 = arith.mulf %659, %658 : vector<8x128xf32>
    %cst_252 = arith.constant 5.000000e-01 : f32
    %661 = vector.broadcast %cst_252 : f32 to vector<8x128xf32>
    %662 = arith.addf %660, %661 : vector<8x128xf32>
    %663 = arith.mulf %652, %629 : vector<8x128xf32>
    %664 = arith.mulf %644, %654 : vector<8x128xf32>
    %665 = arith.addf %663, %664 : vector<8x128xf32>
    %666 = math.tanh %665 : vector<8x128xf32>
    %667 = arith.mulf %662, %666 : vector<8x128xf32>
    %c64_253 = arith.constant 64 : index
    %c0_254 = arith.constant 0 : index
    %668 = vector.load %arg3[%c64_253, %c0_254] : memref<192x512xbf16, #tpu.memory_space<vmem>>, vector<128x512xbf16>
    %c144 = arith.constant 144 : index
    %c0_255 = arith.constant 0 : index
    %669 = vector.load %arg6[%c144, %c0_255] : memref<208x512xf32, #tpu.memory_space<vmem>>, vector<8x512xf32>
    %670 = arith.truncf %667 : vector<8x128xf32> to vector<8x128xbf16>
    %cst_256 = arith.constant dense<0.000000e+00> : vector<8x512xf32>
    %671 = tpu.matmul %670, %668, %cst_256 {dimension_numbers = #tpu.dot_dimension_numbers<[1], [0], [0], [1], [0, 0, 1, 1], [], []>} : vector<8x128xbf16>, vector<128x512xbf16>, vector<8x512xf32> -> vector<8x512xf32>
    %672 = arith.addf %669, %671 : vector<8x512xf32>
    %673 = vector.extract_strided_slice %672 {offsets = [0, 0], sizes = [8, 128], strides = [1, 1]} : vector<8x512xf32> to vector<8x128xf32>
    %cst_257 = arith.constant 5.000000e-01 : f32
    %674 = vector.broadcast %cst_257 : f32 to vector<8x128xf32>
    %675 = arith.mulf %674, %673 : vector<8x128xf32>
    %676 = math.tanh %675 : vector<8x128xf32>
    %cst_258 = arith.constant 5.000000e-01 : f32
    %677 = vector.broadcast %cst_258 : f32 to vector<8x128xf32>
    %678 = arith.mulf %677, %676 : vector<8x128xf32>
    %cst_259 = arith.constant 5.000000e-01 : f32
    %679 = vector.broadcast %cst_259 : f32 to vector<8x128xf32>
    %680 = arith.addf %678, %679 : vector<8x128xf32>
    %681 = vector.extract_strided_slice %672 {offsets = [0, 128], sizes = [8, 128], strides = [1, 1]} : vector<8x512xf32> to vector<8x128xf32>
    %cst_260 = arith.constant 5.000000e-01 : f32
    %682 = vector.broadcast %cst_260 : f32 to vector<8x128xf32>
    %683 = arith.mulf %682, %681 : vector<8x128xf32>
    %684 = math.tanh %683 : vector<8x128xf32>
    %cst_261 = arith.constant 5.000000e-01 : f32
    %685 = vector.broadcast %cst_261 : f32 to vector<8x128xf32>
    %686 = arith.mulf %685, %684 : vector<8x128xf32>
    %cst_262 = arith.constant 5.000000e-01 : f32
    %687 = vector.broadcast %cst_262 : f32 to vector<8x128xf32>
    %688 = arith.addf %686, %687 : vector<8x128xf32>
    %689 = vector.extract_strided_slice %672 {offsets = [0, 256], sizes = [8, 128], strides = [1, 1]} : vector<8x512xf32> to vector<8x128xf32>
    %690 = math.tanh %689 : vector<8x128xf32>
    %691 = vector.extract_strided_slice %672 {offsets = [0, 384], sizes = [8, 128], strides = [1, 1]} : vector<8x512xf32> to vector<8x128xf32>
    %cst_263 = arith.constant 5.000000e-01 : f32
    %692 = vector.broadcast %cst_263 : f32 to vector<8x128xf32>
    %693 = arith.mulf %692, %691 : vector<8x128xf32>
    %694 = math.tanh %693 : vector<8x128xf32>
    %cst_264 = arith.constant 5.000000e-01 : f32
    %695 = vector.broadcast %cst_264 : f32 to vector<8x128xf32>
    %696 = arith.mulf %695, %694 : vector<8x128xf32>
    %cst_265 = arith.constant 5.000000e-01 : f32
    %697 = vector.broadcast %cst_265 : f32 to vector<8x128xf32>
    %698 = arith.addf %696, %697 : vector<8x128xf32>
    %699 = arith.mulf %688, %665 : vector<8x128xf32>
    %700 = arith.mulf %680, %690 : vector<8x128xf32>
    %701 = arith.addf %699, %700 : vector<8x128xf32>
    %702 = math.tanh %701 : vector<8x128xf32>
    %703 = arith.mulf %698, %702 : vector<8x128xf32>
    %c64_266 = arith.constant 64 : index
    %c0_267 = arith.constant 0 : index
    %704 = vector.load %arg3[%c64_266, %c0_267] : memref<192x512xbf16, #tpu.memory_space<vmem>>, vector<128x512xbf16>
    %c152 = arith.constant 152 : index
    %c0_268 = arith.constant 0 : index
    %705 = vector.load %arg6[%c152, %c0_268] : memref<208x512xf32, #tpu.memory_space<vmem>>, vector<8x512xf32>
    %706 = arith.truncf %703 : vector<8x128xf32> to vector<8x128xbf16>
    %cst_269 = arith.constant dense<0.000000e+00> : vector<8x512xf32>
    %707 = tpu.matmul %706, %704, %cst_269 {dimension_numbers = #tpu.dot_dimension_numbers<[1], [0], [0], [1], [0, 0, 1, 1], [], []>} : vector<8x128xbf16>, vector<128x512xbf16>, vector<8x512xf32> -> vector<8x512xf32>
    %708 = arith.addf %705, %707 : vector<8x512xf32>
    %709 = vector.extract_strided_slice %708 {offsets = [0, 0], sizes = [8, 128], strides = [1, 1]} : vector<8x512xf32> to vector<8x128xf32>
    %cst_270 = arith.constant 5.000000e-01 : f32
    %710 = vector.broadcast %cst_270 : f32 to vector<8x128xf32>
    %711 = arith.mulf %710, %709 : vector<8x128xf32>
    %712 = math.tanh %711 : vector<8x128xf32>
    %cst_271 = arith.constant 5.000000e-01 : f32
    %713 = vector.broadcast %cst_271 : f32 to vector<8x128xf32>
    %714 = arith.mulf %713, %712 : vector<8x128xf32>
    %cst_272 = arith.constant 5.000000e-01 : f32
    %715 = vector.broadcast %cst_272 : f32 to vector<8x128xf32>
    %716 = arith.addf %714, %715 : vector<8x128xf32>
    %717 = vector.extract_strided_slice %708 {offsets = [0, 128], sizes = [8, 128], strides = [1, 1]} : vector<8x512xf32> to vector<8x128xf32>
    %cst_273 = arith.constant 5.000000e-01 : f32
    %718 = vector.broadcast %cst_273 : f32 to vector<8x128xf32>
    %719 = arith.mulf %718, %717 : vector<8x128xf32>
    %720 = math.tanh %719 : vector<8x128xf32>
    %cst_274 = arith.constant 5.000000e-01 : f32
    %721 = vector.broadcast %cst_274 : f32 to vector<8x128xf32>
    %722 = arith.mulf %721, %720 : vector<8x128xf32>
    %cst_275 = arith.constant 5.000000e-01 : f32
    %723 = vector.broadcast %cst_275 : f32 to vector<8x128xf32>
    %724 = arith.addf %722, %723 : vector<8x128xf32>
    %725 = vector.extract_strided_slice %708 {offsets = [0, 256], sizes = [8, 128], strides = [1, 1]} : vector<8x512xf32> to vector<8x128xf32>
    %726 = math.tanh %725 : vector<8x128xf32>
    %727 = vector.extract_strided_slice %708 {offsets = [0, 384], sizes = [8, 128], strides = [1, 1]} : vector<8x512xf32> to vector<8x128xf32>
    %cst_276 = arith.constant 5.000000e-01 : f32
    %728 = vector.broadcast %cst_276 : f32 to vector<8x128xf32>
    %729 = arith.mulf %728, %727 : vector<8x128xf32>
    %730 = math.tanh %729 : vector<8x128xf32>
    %cst_277 = arith.constant 5.000000e-01 : f32
    %731 = vector.broadcast %cst_277 : f32 to vector<8x128xf32>
    %732 = arith.mulf %731, %730 : vector<8x128xf32>
    %cst_278 = arith.constant 5.000000e-01 : f32
    %733 = vector.broadcast %cst_278 : f32 to vector<8x128xf32>
    %734 = arith.addf %732, %733 : vector<8x128xf32>
    %735 = arith.mulf %724, %701 : vector<8x128xf32>
    %736 = arith.mulf %716, %726 : vector<8x128xf32>
    %737 = arith.addf %735, %736 : vector<8x128xf32>
    %738 = math.tanh %737 : vector<8x128xf32>
    %739 = arith.mulf %734, %738 : vector<8x128xf32>
    %c64_279 = arith.constant 64 : index
    %c0_280 = arith.constant 0 : index
    %740 = vector.load %arg3[%c64_279, %c0_280] : memref<192x512xbf16, #tpu.memory_space<vmem>>, vector<128x512xbf16>
    %c160 = arith.constant 160 : index
    %c0_281 = arith.constant 0 : index
    %741 = vector.load %arg6[%c160, %c0_281] : memref<208x512xf32, #tpu.memory_space<vmem>>, vector<8x512xf32>
    %742 = arith.truncf %739 : vector<8x128xf32> to vector<8x128xbf16>
    %cst_282 = arith.constant dense<0.000000e+00> : vector<8x512xf32>
    %743 = tpu.matmul %742, %740, %cst_282 {dimension_numbers = #tpu.dot_dimension_numbers<[1], [0], [0], [1], [0, 0, 1, 1], [], []>} : vector<8x128xbf16>, vector<128x512xbf16>, vector<8x512xf32> -> vector<8x512xf32>
    %744 = arith.addf %741, %743 : vector<8x512xf32>
    %745 = vector.extract_strided_slice %744 {offsets = [0, 0], sizes = [8, 128], strides = [1, 1]} : vector<8x512xf32> to vector<8x128xf32>
    %cst_283 = arith.constant 5.000000e-01 : f32
    %746 = vector.broadcast %cst_283 : f32 to vector<8x128xf32>
    %747 = arith.mulf %746, %745 : vector<8x128xf32>
    %748 = math.tanh %747 : vector<8x128xf32>
    %cst_284 = arith.constant 5.000000e-01 : f32
    %749 = vector.broadcast %cst_284 : f32 to vector<8x128xf32>
    %750 = arith.mulf %749, %748 : vector<8x128xf32>
    %cst_285 = arith.constant 5.000000e-01 : f32
    %751 = vector.broadcast %cst_285 : f32 to vector<8x128xf32>
    %752 = arith.addf %750, %751 : vector<8x128xf32>
    %753 = vector.extract_strided_slice %744 {offsets = [0, 128], sizes = [8, 128], strides = [1, 1]} : vector<8x512xf32> to vector<8x128xf32>
    %cst_286 = arith.constant 5.000000e-01 : f32
    %754 = vector.broadcast %cst_286 : f32 to vector<8x128xf32>
    %755 = arith.mulf %754, %753 : vector<8x128xf32>
    %756 = math.tanh %755 : vector<8x128xf32>
    %cst_287 = arith.constant 5.000000e-01 : f32
    %757 = vector.broadcast %cst_287 : f32 to vector<8x128xf32>
    %758 = arith.mulf %757, %756 : vector<8x128xf32>
    %cst_288 = arith.constant 5.000000e-01 : f32
    %759 = vector.broadcast %cst_288 : f32 to vector<8x128xf32>
    %760 = arith.addf %758, %759 : vector<8x128xf32>
    %761 = vector.extract_strided_slice %744 {offsets = [0, 256], sizes = [8, 128], strides = [1, 1]} : vector<8x512xf32> to vector<8x128xf32>
    %762 = math.tanh %761 : vector<8x128xf32>
    %763 = vector.extract_strided_slice %744 {offsets = [0, 384], sizes = [8, 128], strides = [1, 1]} : vector<8x512xf32> to vector<8x128xf32>
    %cst_289 = arith.constant 5.000000e-01 : f32
    %764 = vector.broadcast %cst_289 : f32 to vector<8x128xf32>
    %765 = arith.mulf %764, %763 : vector<8x128xf32>
    %766 = math.tanh %765 : vector<8x128xf32>
    %cst_290 = arith.constant 5.000000e-01 : f32
    %767 = vector.broadcast %cst_290 : f32 to vector<8x128xf32>
    %768 = arith.mulf %767, %766 : vector<8x128xf32>
    %cst_291 = arith.constant 5.000000e-01 : f32
    %769 = vector.broadcast %cst_291 : f32 to vector<8x128xf32>
    %770 = arith.addf %768, %769 : vector<8x128xf32>
    %771 = arith.mulf %760, %737 : vector<8x128xf32>
    %772 = arith.mulf %752, %762 : vector<8x128xf32>
    %773 = arith.addf %771, %772 : vector<8x128xf32>
    %774 = math.tanh %773 : vector<8x128xf32>
    %775 = arith.mulf %770, %774 : vector<8x128xf32>
    %c64_292 = arith.constant 64 : index
    %c0_293 = arith.constant 0 : index
    %776 = vector.load %arg3[%c64_292, %c0_293] : memref<192x512xbf16, #tpu.memory_space<vmem>>, vector<128x512xbf16>
    %c168 = arith.constant 168 : index
    %c0_294 = arith.constant 0 : index
    %777 = vector.load %arg6[%c168, %c0_294] : memref<208x512xf32, #tpu.memory_space<vmem>>, vector<8x512xf32>
    %778 = arith.truncf %775 : vector<8x128xf32> to vector<8x128xbf16>
    %cst_295 = arith.constant dense<0.000000e+00> : vector<8x512xf32>
    %779 = tpu.matmul %778, %776, %cst_295 {dimension_numbers = #tpu.dot_dimension_numbers<[1], [0], [0], [1], [0, 0, 1, 1], [], []>} : vector<8x128xbf16>, vector<128x512xbf16>, vector<8x512xf32> -> vector<8x512xf32>
    %780 = arith.addf %777, %779 : vector<8x512xf32>
    %781 = vector.extract_strided_slice %780 {offsets = [0, 0], sizes = [8, 128], strides = [1, 1]} : vector<8x512xf32> to vector<8x128xf32>
    %cst_296 = arith.constant 5.000000e-01 : f32
    %782 = vector.broadcast %cst_296 : f32 to vector<8x128xf32>
    %783 = arith.mulf %782, %781 : vector<8x128xf32>
    %784 = math.tanh %783 : vector<8x128xf32>
    %cst_297 = arith.constant 5.000000e-01 : f32
    %785 = vector.broadcast %cst_297 : f32 to vector<8x128xf32>
    %786 = arith.mulf %785, %784 : vector<8x128xf32>
    %cst_298 = arith.constant 5.000000e-01 : f32
    %787 = vector.broadcast %cst_298 : f32 to vector<8x128xf32>
    %788 = arith.addf %786, %787 : vector<8x128xf32>
    %789 = vector.extract_strided_slice %780 {offsets = [0, 128], sizes = [8, 128], strides = [1, 1]} : vector<8x512xf32> to vector<8x128xf32>
    %cst_299 = arith.constant 5.000000e-01 : f32
    %790 = vector.broadcast %cst_299 : f32 to vector<8x128xf32>
    %791 = arith.mulf %790, %789 : vector<8x128xf32>
    %792 = math.tanh %791 : vector<8x128xf32>
    %cst_300 = arith.constant 5.000000e-01 : f32
    %793 = vector.broadcast %cst_300 : f32 to vector<8x128xf32>
    %794 = arith.mulf %793, %792 : vector<8x128xf32>
    %cst_301 = arith.constant 5.000000e-01 : f32
    %795 = vector.broadcast %cst_301 : f32 to vector<8x128xf32>
    %796 = arith.addf %794, %795 : vector<8x128xf32>
    %797 = vector.extract_strided_slice %780 {offsets = [0, 256], sizes = [8, 128], strides = [1, 1]} : vector<8x512xf32> to vector<8x128xf32>
    %798 = math.tanh %797 : vector<8x128xf32>
    %799 = vector.extract_strided_slice %780 {offsets = [0, 384], sizes = [8, 128], strides = [1, 1]} : vector<8x512xf32> to vector<8x128xf32>
    %cst_302 = arith.constant 5.000000e-01 : f32
    %800 = vector.broadcast %cst_302 : f32 to vector<8x128xf32>
    %801 = arith.mulf %800, %799 : vector<8x128xf32>
    %802 = math.tanh %801 : vector<8x128xf32>
    %cst_303 = arith.constant 5.000000e-01 : f32
    %803 = vector.broadcast %cst_303 : f32 to vector<8x128xf32>
    %804 = arith.mulf %803, %802 : vector<8x128xf32>
    %cst_304 = arith.constant 5.000000e-01 : f32
    %805 = vector.broadcast %cst_304 : f32 to vector<8x128xf32>
    %806 = arith.addf %804, %805 : vector<8x128xf32>
    %807 = arith.mulf %796, %773 : vector<8x128xf32>
    %808 = arith.mulf %788, %798 : vector<8x128xf32>
    %809 = arith.addf %807, %808 : vector<8x128xf32>
    %810 = math.tanh %809 : vector<8x128xf32>
    %811 = arith.mulf %806, %810 : vector<8x128xf32>
    %c64_305 = arith.constant 64 : index
    %c0_306 = arith.constant 0 : index
    %812 = vector.load %arg3[%c64_305, %c0_306] : memref<192x512xbf16, #tpu.memory_space<vmem>>, vector<128x512xbf16>
    %c176 = arith.constant 176 : index
    %c0_307 = arith.constant 0 : index
    %813 = vector.load %arg6[%c176, %c0_307] : memref<208x512xf32, #tpu.memory_space<vmem>>, vector<8x512xf32>
    %814 = arith.truncf %811 : vector<8x128xf32> to vector<8x128xbf16>
    %cst_308 = arith.constant dense<0.000000e+00> : vector<8x512xf32>
    %815 = tpu.matmul %814, %812, %cst_308 {dimension_numbers = #tpu.dot_dimension_numbers<[1], [0], [0], [1], [0, 0, 1, 1], [], []>} : vector<8x128xbf16>, vector<128x512xbf16>, vector<8x512xf32> -> vector<8x512xf32>
    %816 = arith.addf %813, %815 : vector<8x512xf32>
    %817 = vector.extract_strided_slice %816 {offsets = [0, 0], sizes = [8, 128], strides = [1, 1]} : vector<8x512xf32> to vector<8x128xf32>
    %cst_309 = arith.constant 5.000000e-01 : f32
    %818 = vector.broadcast %cst_309 : f32 to vector<8x128xf32>
    %819 = arith.mulf %818, %817 : vector<8x128xf32>
    %820 = math.tanh %819 : vector<8x128xf32>
    %cst_310 = arith.constant 5.000000e-01 : f32
    %821 = vector.broadcast %cst_310 : f32 to vector<8x128xf32>
    %822 = arith.mulf %821, %820 : vector<8x128xf32>
    %cst_311 = arith.constant 5.000000e-01 : f32
    %823 = vector.broadcast %cst_311 : f32 to vector<8x128xf32>
    %824 = arith.addf %822, %823 : vector<8x128xf32>
    %825 = vector.extract_strided_slice %816 {offsets = [0, 128], sizes = [8, 128], strides = [1, 1]} : vector<8x512xf32> to vector<8x128xf32>
    %cst_312 = arith.constant 5.000000e-01 : f32
    %826 = vector.broadcast %cst_312 : f32 to vector<8x128xf32>
    %827 = arith.mulf %826, %825 : vector<8x128xf32>
    %828 = math.tanh %827 : vector<8x128xf32>
    %cst_313 = arith.constant 5.000000e-01 : f32
    %829 = vector.broadcast %cst_313 : f32 to vector<8x128xf32>
    %830 = arith.mulf %829, %828 : vector<8x128xf32>
    %cst_314 = arith.constant 5.000000e-01 : f32
    %831 = vector.broadcast %cst_314 : f32 to vector<8x128xf32>
    %832 = arith.addf %830, %831 : vector<8x128xf32>
    %833 = vector.extract_strided_slice %816 {offsets = [0, 256], sizes = [8, 128], strides = [1, 1]} : vector<8x512xf32> to vector<8x128xf32>
    %834 = math.tanh %833 : vector<8x128xf32>
    %835 = vector.extract_strided_slice %816 {offsets = [0, 384], sizes = [8, 128], strides = [1, 1]} : vector<8x512xf32> to vector<8x128xf32>
    %cst_315 = arith.constant 5.000000e-01 : f32
    %836 = vector.broadcast %cst_315 : f32 to vector<8x128xf32>
    %837 = arith.mulf %836, %835 : vector<8x128xf32>
    %838 = math.tanh %837 : vector<8x128xf32>
    %cst_316 = arith.constant 5.000000e-01 : f32
    %839 = vector.broadcast %cst_316 : f32 to vector<8x128xf32>
    %840 = arith.mulf %839, %838 : vector<8x128xf32>
    %cst_317 = arith.constant 5.000000e-01 : f32
    %841 = vector.broadcast %cst_317 : f32 to vector<8x128xf32>
    %842 = arith.addf %840, %841 : vector<8x128xf32>
    %843 = arith.mulf %832, %809 : vector<8x128xf32>
    %844 = arith.mulf %824, %834 : vector<8x128xf32>
    %845 = arith.addf %843, %844 : vector<8x128xf32>
    %846 = math.tanh %845 : vector<8x128xf32>
    %847 = arith.mulf %842, %846 : vector<8x128xf32>
    %c64_318 = arith.constant 64 : index
    %c0_319 = arith.constant 0 : index
    %848 = vector.load %arg3[%c64_318, %c0_319] : memref<192x512xbf16, #tpu.memory_space<vmem>>, vector<128x512xbf16>
    %c184 = arith.constant 184 : index
    %c0_320 = arith.constant 0 : index
    %849 = vector.load %arg6[%c184, %c0_320] : memref<208x512xf32, #tpu.memory_space<vmem>>, vector<8x512xf32>
    %850 = arith.truncf %847 : vector<8x128xf32> to vector<8x128xbf16>
    %cst_321 = arith.constant dense<0.000000e+00> : vector<8x512xf32>
    %851 = tpu.matmul %850, %848, %cst_321 {dimension_numbers = #tpu.dot_dimension_numbers<[1], [0], [0], [1], [0, 0, 1, 1], [], []>} : vector<8x128xbf16>, vector<128x512xbf16>, vector<8x512xf32> -> vector<8x512xf32>
    %852 = arith.addf %849, %851 : vector<8x512xf32>
    %853 = vector.extract_strided_slice %852 {offsets = [0, 0], sizes = [8, 128], strides = [1, 1]} : vector<8x512xf32> to vector<8x128xf32>
    %cst_322 = arith.constant 5.000000e-01 : f32
    %854 = vector.broadcast %cst_322 : f32 to vector<8x128xf32>
    %855 = arith.mulf %854, %853 : vector<8x128xf32>
    %856 = math.tanh %855 : vector<8x128xf32>
    %cst_323 = arith.constant 5.000000e-01 : f32
    %857 = vector.broadcast %cst_323 : f32 to vector<8x128xf32>
    %858 = arith.mulf %857, %856 : vector<8x128xf32>
    %cst_324 = arith.constant 5.000000e-01 : f32
    %859 = vector.broadcast %cst_324 : f32 to vector<8x128xf32>
    %860 = arith.addf %858, %859 : vector<8x128xf32>
    %861 = vector.extract_strided_slice %852 {offsets = [0, 128], sizes = [8, 128], strides = [1, 1]} : vector<8x512xf32> to vector<8x128xf32>
    %cst_325 = arith.constant 5.000000e-01 : f32
    %862 = vector.broadcast %cst_325 : f32 to vector<8x128xf32>
    %863 = arith.mulf %862, %861 : vector<8x128xf32>
    %864 = math.tanh %863 : vector<8x128xf32>
    %cst_326 = arith.constant 5.000000e-01 : f32
    %865 = vector.broadcast %cst_326 : f32 to vector<8x128xf32>
    %866 = arith.mulf %865, %864 : vector<8x128xf32>
    %cst_327 = arith.constant 5.000000e-01 : f32
    %867 = vector.broadcast %cst_327 : f32 to vector<8x128xf32>
    %868 = arith.addf %866, %867 : vector<8x128xf32>
    %869 = vector.extract_strided_slice %852 {offsets = [0, 256], sizes = [8, 128], strides = [1, 1]} : vector<8x512xf32> to vector<8x128xf32>
    %870 = math.tanh %869 : vector<8x128xf32>
    %871 = vector.extract_strided_slice %852 {offsets = [0, 384], sizes = [8, 128], strides = [1, 1]} : vector<8x512xf32> to vector<8x128xf32>
    %cst_328 = arith.constant 5.000000e-01 : f32
    %872 = vector.broadcast %cst_328 : f32 to vector<8x128xf32>
    %873 = arith.mulf %872, %871 : vector<8x128xf32>
    %874 = math.tanh %873 : vector<8x128xf32>
    %cst_329 = arith.constant 5.000000e-01 : f32
    %875 = vector.broadcast %cst_329 : f32 to vector<8x128xf32>
    %876 = arith.mulf %875, %874 : vector<8x128xf32>
    %cst_330 = arith.constant 5.000000e-01 : f32
    %877 = vector.broadcast %cst_330 : f32 to vector<8x128xf32>
    %878 = arith.addf %876, %877 : vector<8x128xf32>
    %879 = arith.mulf %868, %845 : vector<8x128xf32>
    %880 = arith.mulf %860, %870 : vector<8x128xf32>
    %881 = arith.addf %879, %880 : vector<8x128xf32>
    %882 = math.tanh %881 : vector<8x128xf32>
    %883 = arith.mulf %878, %882 : vector<8x128xf32>
    %c64_331 = arith.constant 64 : index
    %c0_332 = arith.constant 0 : index
    %884 = vector.load %arg3[%c64_331, %c0_332] : memref<192x512xbf16, #tpu.memory_space<vmem>>, vector<128x512xbf16>
    %c192 = arith.constant 192 : index
    %c0_333 = arith.constant 0 : index
    %885 = vector.load %arg6[%c192, %c0_333] : memref<208x512xf32, #tpu.memory_space<vmem>>, vector<8x512xf32>
    %886 = arith.truncf %883 : vector<8x128xf32> to vector<8x128xbf16>
    %cst_334 = arith.constant dense<0.000000e+00> : vector<8x512xf32>
    %887 = tpu.matmul %886, %884, %cst_334 {dimension_numbers = #tpu.dot_dimension_numbers<[1], [0], [0], [1], [0, 0, 1, 1], [], []>} : vector<8x128xbf16>, vector<128x512xbf16>, vector<8x512xf32> -> vector<8x512xf32>
    %888 = arith.addf %885, %887 : vector<8x512xf32>
    %889 = vector.extract_strided_slice %888 {offsets = [0, 0], sizes = [8, 128], strides = [1, 1]} : vector<8x512xf32> to vector<8x128xf32>
    %cst_335 = arith.constant 5.000000e-01 : f32
    %890 = vector.broadcast %cst_335 : f32 to vector<8x128xf32>
    %891 = arith.mulf %890, %889 : vector<8x128xf32>
    %892 = math.tanh %891 : vector<8x128xf32>
    %cst_336 = arith.constant 5.000000e-01 : f32
    %893 = vector.broadcast %cst_336 : f32 to vector<8x128xf32>
    %894 = arith.mulf %893, %892 : vector<8x128xf32>
    %cst_337 = arith.constant 5.000000e-01 : f32
    %895 = vector.broadcast %cst_337 : f32 to vector<8x128xf32>
    %896 = arith.addf %894, %895 : vector<8x128xf32>
    %897 = vector.extract_strided_slice %888 {offsets = [0, 128], sizes = [8, 128], strides = [1, 1]} : vector<8x512xf32> to vector<8x128xf32>
    %cst_338 = arith.constant 5.000000e-01 : f32
    %898 = vector.broadcast %cst_338 : f32 to vector<8x128xf32>
    %899 = arith.mulf %898, %897 : vector<8x128xf32>
    %900 = math.tanh %899 : vector<8x128xf32>
    %cst_339 = arith.constant 5.000000e-01 : f32
    %901 = vector.broadcast %cst_339 : f32 to vector<8x128xf32>
    %902 = arith.mulf %901, %900 : vector<8x128xf32>
    %cst_340 = arith.constant 5.000000e-01 : f32
    %903 = vector.broadcast %cst_340 : f32 to vector<8x128xf32>
    %904 = arith.addf %902, %903 : vector<8x128xf32>
    %905 = vector.extract_strided_slice %888 {offsets = [0, 256], sizes = [8, 128], strides = [1, 1]} : vector<8x512xf32> to vector<8x128xf32>
    %906 = math.tanh %905 : vector<8x128xf32>
    %907 = vector.extract_strided_slice %888 {offsets = [0, 384], sizes = [8, 128], strides = [1, 1]} : vector<8x512xf32> to vector<8x128xf32>
    %cst_341 = arith.constant 5.000000e-01 : f32
    %908 = vector.broadcast %cst_341 : f32 to vector<8x128xf32>
    %909 = arith.mulf %908, %907 : vector<8x128xf32>
    %910 = math.tanh %909 : vector<8x128xf32>
    %cst_342 = arith.constant 5.000000e-01 : f32
    %911 = vector.broadcast %cst_342 : f32 to vector<8x128xf32>
    %912 = arith.mulf %911, %910 : vector<8x128xf32>
    %cst_343 = arith.constant 5.000000e-01 : f32
    %913 = vector.broadcast %cst_343 : f32 to vector<8x128xf32>
    %914 = arith.addf %912, %913 : vector<8x128xf32>
    %915 = arith.mulf %904, %881 : vector<8x128xf32>
    %916 = arith.mulf %896, %906 : vector<8x128xf32>
    %917 = arith.addf %915, %916 : vector<8x128xf32>
    %918 = math.tanh %917 : vector<8x128xf32>
    %919 = arith.mulf %914, %918 : vector<8x128xf32>
    %c64_344 = arith.constant 64 : index
    %c0_345 = arith.constant 0 : index
    %920 = vector.load %arg3[%c64_344, %c0_345] : memref<192x512xbf16, #tpu.memory_space<vmem>>, vector<128x512xbf16>
    %c200 = arith.constant 200 : index
    %c0_346 = arith.constant 0 : index
    %921 = vector.load %arg6[%c200, %c0_346] : memref<208x512xf32, #tpu.memory_space<vmem>>, vector<8x512xf32>
    %922 = arith.truncf %919 : vector<8x128xf32> to vector<8x128xbf16>
    %cst_347 = arith.constant dense<0.000000e+00> : vector<8x512xf32>
    %923 = tpu.matmul %922, %920, %cst_347 {dimension_numbers = #tpu.dot_dimension_numbers<[1], [0], [0], [1], [0, 0, 1, 1], [], []>} : vector<8x128xbf16>, vector<128x512xbf16>, vector<8x512xf32> -> vector<8x512xf32>
    %924 = arith.addf %921, %923 : vector<8x512xf32>
    %925 = vector.extract_strided_slice %924 {offsets = [0, 0], sizes = [8, 128], strides = [1, 1]} : vector<8x512xf32> to vector<8x128xf32>
    %cst_348 = arith.constant 5.000000e-01 : f32
    %926 = vector.broadcast %cst_348 : f32 to vector<8x128xf32>
    %927 = arith.mulf %926, %925 : vector<8x128xf32>
    %928 = math.tanh %927 : vector<8x128xf32>
    %cst_349 = arith.constant 5.000000e-01 : f32
    %929 = vector.broadcast %cst_349 : f32 to vector<8x128xf32>
    %930 = arith.mulf %929, %928 : vector<8x128xf32>
    %cst_350 = arith.constant 5.000000e-01 : f32
    %931 = vector.broadcast %cst_350 : f32 to vector<8x128xf32>
    %932 = arith.addf %930, %931 : vector<8x128xf32>
    %933 = vector.extract_strided_slice %924 {offsets = [0, 128], sizes = [8, 128], strides = [1, 1]} : vector<8x512xf32> to vector<8x128xf32>
    %cst_351 = arith.constant 5.000000e-01 : f32
    %934 = vector.broadcast %cst_351 : f32 to vector<8x128xf32>
    %935 = arith.mulf %934, %933 : vector<8x128xf32>
    %936 = math.tanh %935 : vector<8x128xf32>
    %cst_352 = arith.constant 5.000000e-01 : f32
    %937 = vector.broadcast %cst_352 : f32 to vector<8x128xf32>
    %938 = arith.mulf %937, %936 : vector<8x128xf32>
    %cst_353 = arith.constant 5.000000e-01 : f32
    %939 = vector.broadcast %cst_353 : f32 to vector<8x128xf32>
    %940 = arith.addf %938, %939 : vector<8x128xf32>
    %941 = vector.extract_strided_slice %924 {offsets = [0, 256], sizes = [8, 128], strides = [1, 1]} : vector<8x512xf32> to vector<8x128xf32>
    %942 = math.tanh %941 : vector<8x128xf32>
    %943 = vector.extract_strided_slice %924 {offsets = [0, 384], sizes = [8, 128], strides = [1, 1]} : vector<8x512xf32> to vector<8x128xf32>
    %cst_354 = arith.constant 5.000000e-01 : f32
    %944 = vector.broadcast %cst_354 : f32 to vector<8x128xf32>
    %945 = arith.mulf %944, %943 : vector<8x128xf32>
    %946 = math.tanh %945 : vector<8x128xf32>
    %cst_355 = arith.constant 5.000000e-01 : f32
    %947 = vector.broadcast %cst_355 : f32 to vector<8x128xf32>
    %948 = arith.mulf %947, %946 : vector<8x128xf32>
    %cst_356 = arith.constant 5.000000e-01 : f32
    %949 = vector.broadcast %cst_356 : f32 to vector<8x128xf32>
    %950 = arith.addf %948, %949 : vector<8x128xf32>
    %951 = arith.mulf %940, %917 : vector<8x128xf32>
    %952 = arith.mulf %932, %942 : vector<8x128xf32>
    %953 = arith.addf %951, %952 : vector<8x128xf32>
    %954 = math.tanh %953 : vector<8x128xf32>
    %955 = arith.mulf %950, %954 : vector<8x128xf32>
    %c192_357 = arith.constant 192 : index
    %c0_358 = arith.constant 0 : index
    %956 = vector.load %arg2[%c192_357, %c0_358] : memref<320x128xf32, #tpu.memory_space<vmem>>, vector<128x128xf32>
    %cst_359 = arith.constant dense<0.000000e+00> : vector<8x128xf32>
    %957 = tpu.matmul %955, %956, %cst_359 {dimension_numbers = #tpu.dot_dimension_numbers<[1], [0], [0], [1], [0, 0, 1, 1], [], []>} : vector<8x128xf32>, vector<128x128xf32>, vector<8x128xf32> -> vector<8x128xf32>
    %c3 = arith.constant 3 : index
    %c0_360 = arith.constant 0 : index
    %958 = vector.load %arg4[%c3, %c0_360] : memref<8x512xf32, #tpu.memory_space<vmem>>, vector<1x128xf32>
    %959 = vector.broadcast %958 : vector<1x128xf32> to vector<8x128xf32>
    %960 = arith.addf %957, %959 : vector<8x128xf32>
    %cst_361 = arith.constant 0.000000e+00 : f32
    %961 = vector.broadcast %cst_361 : f32 to vector<8x128xf32>
    %962 = arith.maximumf %960, %961 : vector<8x128xf32>
    %c4 = arith.constant 4 : index
    %c0_362 = arith.constant 0 : index
    %963 = vector.load %arg4[%c4, %c0_362] : memref<8x512xf32, #tpu.memory_space<vmem>>, vector<1x128xf32>
    %964 = vector.broadcast %963 : vector<1x128xf32> to vector<8x128xf32>
    %965 = arith.mulf %962, %964 : vector<8x128xf32>
    %cst_363 = arith.constant dense<0.000000e+00> : vector<8xf32>
    %966 = vector.multi_reduction <add>, %965, %cst_363 [1] : vector<8x128xf32> to vector<8xf32>
    %967 = vector.shape_cast %966 : vector<8xf32> to vector<8x1xf32>
    %c5 = arith.constant 5 : index
    %c0_364 = arith.constant 0 : index
    %968 = vector.load %arg4[%c5, %c0_364] : memref<8x512xf32, #tpu.memory_space<vmem>>, vector<1x1xf32>
    %969 = vector.broadcast %968 : vector<1x1xf32> to vector<8x1xf32>
    %970 = arith.addf %967, %969 : vector<8x1xf32>
    %c0_365 = arith.constant 0 : index
    %c0_366 = arith.constant 0 : index
    %971 = vector.load %arg5[%c0_365, %c0_366] : memref<8x1xf32, #tpu.memory_space<vmem>>, vector<8x1xf32>
    tpu.vector_store %arg5[%c0_365, %c0_366], %970 {strides = array<i32>} : memref<8x1xf32, #tpu.memory_space<vmem>>, vector<8x1xf32>,
    return
  }
}

</mosaic_0001>

<llo_original>
// kernel: kitty_forward.1
$region0: #{kitty_forward.1}
  #allocation0 [shape = 'u32[]', space=smem, size = 0x4, offset = 0x4, fixed_abs, tag = 'smem constant byte address 0x4 - core index']
  #allocation1 [shape = 'u32[72,128]{1,0:T(1,128)}', space=vmem, size = 0x9000, scoped, tag = 'internal scratch']
  #allocation2 [shape = 'f32[208,512]{1,0:T(8,128)}', space=vmem, size = 0x68000, scoped, tag = 'scratch operand']
  %s0 = inlined_call_operand.vmem [shape: f32[8,64], index: 0, kind: input, shape index: {}]
  %s1 = inlined_call_operand.vmem [shape: bf16[208,64], index: 1, kind: input, shape index: {}]
  %s2 = inlined_call_operand.vmem [shape: f32[320,128], index: 2, kind: input, shape index: {}]
  %s3 = inlined_call_operand.vmem [shape: bf16[192,512], index: 3, kind: input, shape index: {}]
  %s4 = inlined_call_operand.vmem [shape: f32[8,512], index: 4, kind: input, shape index: {}]
  %s5 = inlined_call_operand.vmem [shape: f32[8,1], index: 5, kind: output, shape index: {}]
  %s6 = sld [smem:[#allocation0]]
  $region30: #{kitty_forward.1} parent=0
    _
  %s8 = ssub.s32 1, %s6
  %s9 = scalar_select 0, %s8, %s6
  // Predicated region
  $region2: #{kitty_forward.1} parent=0 // pred_check
    _
  $region3: #{kitty_forward.1} parent=0 // pred_check_branch
    %11 = sbr.rel (0) target = $region5
  $region4: #{kitty_forward.1} parent=0 // pred_region
    _
  $region5: #{kitty_forward.1} parent=0 // pred_fallthru
    _
  // Predicated region
  $region6: #{kitty_forward.1} parent=0 // pred_check
    _
  $region7: #{kitty_forward.1} parent=0 // pred_check_branch
    %13 = sbr.rel (0) target = $region9
  $region8: #{kitty_forward.1} parent=0 // pred_region
    _
  $region9: #{kitty_forward.1} parent=0 // pred_fallthru
    _
  // Predicated region
  $region10: #{kitty_forward.1} parent=0 // pred_check
    _
  $region11: #{kitty_forward.1} parent=0 // pred_check_branch
    %15 = sbr.rel (0) target = $region13
  $region12: #{kitty_forward.1} parent=0 // pred_region
    _
  $region13: #{kitty_forward.1} parent=0 // pred_fallthru
    _
  // Predicated region
  $region14: #{kitty_forward.1} parent=0 // pred_check
    _
  $region15: #{kitty_forward.1} parent=0 // pred_check_branch
    %17 = sbr.rel (0) target = $region17
  $region16: #{kitty_forward.1} parent=0 // pred_region
    _
  $region17: #{kitty_forward.1} parent=0 // pred_fallthru
    _
  // Predicated region
  $region18: #{kitty_forward.1} parent=0 // pred_check
    _
  $region19: #{kitty_forward.1} parent=0 // pred_check_branch
    %19 = sbr.rel (0) target = $region21
  $region20: #{kitty_forward.1} parent=0 // pred_region
    _
  $region21: #{kitty_forward.1} parent=0 // pred_fallthru
    _
  %v21 = vld [vmem:[%s0] sm:$0xff]
  %v22 = vld [vmem:[%s2] sm:$0xff]
  %v23 = vld [vmem:[%s2 + $0x8] sm:$0xff]
  %v24 = vld [vmem:[%s2 + $0x10] sm:$0xff]
  %v25 = vld [vmem:[%s2 + $0x18] sm:$0xff]
  %v26 = vld [vmem:[%s2 + $0x20] sm:$0xff]
  %v27 = vld [vmem:[%s2 + $0x28] sm:$0xff]
  %v28 = vld [vmem:[%s2 + $0x30] sm:$0xff]
  %v29 = vld [vmem:[%s2 + $0x38] sm:$0xff]
  %v30 = vld [vmem:[%s4] ss:$0 sm:$0xff]
  %vm31 = vcmask 523264
  %v33 = vsel %vm31, %v21, 0
  %35 = vmatpush.msra.mxu0 0.0
  %36 = vmatpush.msra.mxu0 0.0
  %37 = vmatpush.msra.mxu0 0.0
  %38 = vmatpush.msra.mxu0 0.0
  %39 = vmatpush.msra.mxu0 0.0
  %40 = vmatpush.msra.mxu0 0.0
  %41 = vmatpush.msra.mxu0 0.0
  %42 = vmatpush.msra.mxu0 0.0
  %43 = vmatpush.msra.mxu0 %v29
  %44 = vmatpush.msra.mxu0 %v28
  %45 = vmatpush.msra.mxu0 %v27
  %46 = vmatpush.msra.mxu0 %v26
  %47 = vmatpush.msra.mxu0 %v25
  %48 = vmatpush.msra.mxu0 %v24
  %49 = vmatpush.msra.mxu0 %v23
  %50 = vmatpush.msra.mxu0 %v22
  %51 = vmatmul.f32.gmra.mxu0 %v33
  %v52 = vpop.f32.mrf.mxu0
  %v53 = vadd.f32 %v30, %v52
  %54 = vdwg.mxu0
  %v55 = vmax.f32 %v53, 0.0
  %v56 = vld [vmem:[%s2 + $0x40] sm:$0xff]
  %v57 = vld [vmem:[%s2 + $0x48] sm:$0xff]
  %v58 = vld [vmem:[%s2 + $0x50] sm:$0xff]
  %v59 = vld [vmem:[%s2 + $0x58] sm:$0xff]
  %v60 = vld [vmem:[%s2 + $0x60] sm:$0xff]
  %v61 = vld [vmem:[%s2 + $0x68] sm:$0xff]
  %v62 = vld [vmem:[%s2 + $0x70] sm:$0xff]
  %v63 = vld [vmem:[%s2 + $0x78] sm:$0xff]
  %v64 = vld [vmem:[%s2 + $0x80] sm:$0xff]
  %v65 = vld [vmem:[%s2 + $0x88] sm:$0xff]
  %v66 = vld [vmem:[%s2 + $0x90] sm:$0xff]
  %v67 = vld [vmem:[%s2 + $0x98] sm:$0xff]
  %v68 = vld [vmem:[%s2 + $0xa0] sm:$0xff]
  %v69 = vld [vmem:[%s2 + $0xa8] sm:$0xff]
  %v70 = vld [vmem:[%s2 + $0xb0] sm:$0xff]
  %v71 = vld [vmem:[%s2 + $0xb8] sm:$0xff]
  %v72 = vld [vmem:[%s4 + $0x1] ss:$0 sm:$0xff]
  %73 = vmatpush.msra.mxu0 %v71
  %74 = vmatpush.msra.mxu0 %v70
  %75 = vmatpush.msra.mxu0 %v69
  %76 = vmatpush.msra.mxu0 %v68
  %77 = vmatpush.msra.mxu0 %v67
  %78 = vmatpush.msra.mxu0 %v66
  %79 = vmatpush.msra.mxu0 %v65
  %80 = vmatpush.msra.mxu0 %v64
  %81 = vmatpush.msra.mxu0 %v63
  %82 = vmatpush.msra.mxu0 %v62
  %83 = vmatpush.msra.mxu0 %v61
  %84 = vmatpush.msra.mxu0 %v60
  %85 = vmatpush.msra.mxu0 %v59
  %86 = vmatpush.msra.mxu0 %v58
  %87 = vmatpush.msra.mxu0 %v57
  %88 = vmatpush.msra.mxu0 %v56
  %89 = vmatmul.f32.gmra.mxu0 %v55
  %v90 = vpop.f32.mrf.mxu0
  %v91 = vadd.f32 %v72, %v90
  %92 = vdwg.mxu0
  %v93 = vld [vmem:[%s1] sm:$0xf]
  %v94 = vld [vmem:[%s1 + $0x4] sm:$0xf]
  %v95 = vld [vmem:[%s1 + $0x8] sm:$0xf]
  %v96 = vld [vmem:[%s1 + $0xc] sm:$0xf]
  %v97 = vld [vmem:[%s1 + $0x10] sm:$0xf]
  %v98 = vld [vmem:[%s1 + $0x14] sm:$0xf]
  %v99 = vld [vmem:[%s1 + $0x18] sm:$0xf]
  %v100 = vld [vmem:[%s1 + $0x1c] sm:$0xf]
  %v101 = vld [vmem:[%s1 + $0x20] sm:$0xf]
  %v102 = vld [vmem:[%s1 + $0x24] sm:$0xf]
  %v103 = vld [vmem:[%s1 + $0x28] sm:$0xf]
  %v104 = vld [vmem:[%s1 + $0x2c] sm:$0xf]
  %v105 = vld [vmem:[%s1 + $0x30] sm:$0xf]
  %v106 = vld [vmem:[%s1 + $0x34] sm:$0xf]
  %v107 = vld [vmem:[%s1 + $0x38] sm:$0xf]
  %v108 = vld [vmem:[%s1 + $0x3c] sm:$0xf]
  %v109 = vld [vmem:[%s1 + $0x40] sm:$0xf]
  %v110 = vld [vmem:[%s1 + $0x44] sm:$0xf]
  %v111 = vld [vmem:[%s1 + $0x48] sm:$0xf]
  %v112 = vld [vmem:[%s1 + $0x4c] sm:$0xf]
  %v113 = vld [vmem:[%s1 + $0x50] sm:$0xf]
  %v114 = vld [vmem:[%s1 + $0x54] sm:$0xf]
  %v115 = vld [vmem:[%s1 + $0x58] sm:$0xf]
  %v116 = vld [vmem:[%s1 + $0x5c] sm:$0xf]
  %v117 = vld [vmem:[%s1 + $0x60] sm:$0xf]
  %v118 = vld [vmem:[%s1 + $0x64] sm:$0xf]
  %v119 = vld [vmem:[%s3] sm:$0xff]
  %v120 = vld [vmem:[%s3 + $0x8] sm:$0xff]
  %v121 = vld [vmem:[%s3 + $0x10] sm:$0xff]
  %v122 = vld [vmem:[%s3 + $0x18] sm:$0xff]
  %v123 = vld [vmem:[%s3 + $0x20] sm:$0xff]
  %v124 = vld [vmem:[%s3 + $0x28] sm:$0xff]
  %v125 = vld [vmem:[%s3 + $0x30] sm:$0xff]
  %v126 = vld [vmem:[%s3 + $0x38] sm:$0xff]
  %v127 = vld [vmem:[%s3 + $0x40] sm:$0xff]
  %v128 = vld [vmem:[%s3 + $0x48] sm:$0xff]
  %v129 = vld [vmem:[%s3 + $0x50] sm:$0xff]
  %v130 = vld [vmem:[%s3 + $0x58] sm:$0xff]
  %v131 = vld [vmem:[%s3 + $0x60] sm:$0xff]
  %v132 = vld [vmem:[%s3 + $0x68] sm:$0xff]
  %v133 = vld [vmem:[%s3 + $0x70] sm:$0xff]
  %v134 = vld [vmem:[%s3 + $0x78] sm:$0xff]
  %s135 = scalar_lea.vmem %s4, 2
  %v136 = vld [vmem:[%s135] ss:$8 sm:$0xf]
  %v138 = vperm.slane %v136, 0
  %v139 = vperm.slane %v136, 1
  %v140 = vperm.slane %v136, 2
  %v141 = vperm.slane %v136, 3
  %v172 = vunpack.c.l.b16 %v93
  %v173 = vunpack.c.l.b16 %v94
  %v174 = vunpack.c.l.b16 %v95
  %v175 = vunpack.c.l.b16 %v96
  %v176 = vunpack.c.l.b16 %v97
  %v177 = vunpack.c.l.b16 %v98
  %v178 = vunpack.c.l.b16 %v99
  %v179 = vunpack.c.l.b16 %v100
  %v180 = vunpack.c.l.b16 %v101
  %v181 = vunpack.c.l.b16 %v102
  %v182 = vunpack.c.l.b16 %v103
  %v183 = vunpack.c.l.b16 %v104
  %v184 = vunpack.c.l.b16 %v105
  %v185 = vunpack.c.l.b16 %v106
  %v186 = vunpack.c.l.b16 %v107
  %v187 = vunpack.c.l.b16 %v108
  %v188 = vunpack.c.l.b16 %v109
  %v189 = vunpack.c.l.b16 %v110
  %v190 = vunpack.c.l.b16 %v111
  %v191 = vunpack.c.l.b16 %v112
  %v192 = vunpack.c.l.b16 %v113
  %v193 = vunpack.c.l.b16 %v114
  %v194 = vunpack.c.l.b16 %v115
  %v195 = vunpack.c.l.b16 %v116
  %v196 = vunpack.c.l.b16 %v117
  %v197 = vunpack.c.l.b16 %v118
  %v198 = vpack.c.b16 %v173, %v172
  %v199 = vpack.c.b16 %v175, %v174
  %v200 = vpack.c.b16 %v177, %v176
  %v201 = vpack.c.b16 %v179, %v178
  %v202 = vpack.c.b16 %v181, %v180
  %v203 = vpack.c.b16 %v183, %v182
  %v204 = vpack.c.b16 %v185, %v184
  %v205 = vpack.c.b16 %v187, %v186
  %v206 = vpack.c.b16 %v189, %v188
  %v207 = vpack.c.b16 %v191, %v190
  %v208 = vpack.c.b16 %v193, %v192
  %v209 = vpack.c.b16 %v195, %v194
  %v210 = vpack.c.b16 %v197, %v196
  %v227 = vunpack.c.l.b16 %v119
  %v228 = vunpack.c.h.b16 %v119
  %v229 = vunpack.c.l.b16 %v120
  %v230 = vunpack.c.h.b16 %v120
  %v231 = vunpack.c.l.b16 %v121
  %v232 = vunpack.c.h.b16 %v121
  %v233 = vunpack.c.l.b16 %v122
  %v234 = vunpack.c.h.b16 %v122
  %v235 = vunpack.c.l.b16 %v123
  %v236 = vunpack.c.h.b16 %v123
  %v237 = vunpack.c.l.b16 %v124
  %v238 = vunpack.c.h.b16 %v124
  %v239 = vunpack.c.l.b16 %v125
  %v240 = vunpack.c.h.b16 %v125
  %v241 = vunpack.c.l.b16 %v126
  %v242 = vunpack.c.h.b16 %v126
  %v243 = vunpack.c.l.b16 %v127
  %v244 = vunpack.c.h.b16 %v127
  %v245 = vunpack.c.l.b16 %v128
  %v246 = vunpack.c.h.b16 %v128
  %v247 = vunpack.c.l.b16 %v129
  %v248 = vunpack.c.h.b16 %v129
  %v249 = vunpack.c.l.b16 %v130
  %v250 = vunpack.c.h.b16 %v130
  %v251 = vunpack.c.l.b16 %v131
  %v252 = vunpack.c.h.b16 %v131
  %v253 = vunpack.c.l.b16 %v132
  %v254 = vunpack.c.h.b16 %v132
  %v255 = vunpack.c.l.b16 %v133
  %v256 = vunpack.c.h.b16 %v133
  %v257 = vunpack.c.l.b16 %v134
  %v258 = vunpack.c.h.b16 %v134
  %v259 = vpack.c.b16 %v231, %v227
  %v260 = vpack.c.b16 %v232, %v228
  %v261 = vpack.c.b16 %v233, %v229
  %v262 = vpack.c.b16 %v234, %v230
  %v263 = vpack.c.b16 %v239, %v235
  %v264 = vpack.c.b16 %v240, %v236
  %v265 = vpack.c.b16 %v241, %v237
  %v266 = vpack.c.b16 %v242, %v238
  %v267 = vpack.c.b16 %v247, %v243
  %v268 = vpack.c.b16 %v248, %v244
  %v269 = vpack.c.b16 %v249, %v245
  %v270 = vpack.c.b16 %v250, %v246
  %v271 = vpack.c.b16 %v255, %v251
  %v272 = vpack.c.b16 %v256, %v252
  %v273 = vpack.c.b16 %v257, %v253
  %v274 = vpack.c.b16 %v258, %v254
  %v292 = vsel %vm31, %v198, 0
  %v295 = vsel %vm31, %v199, 0
  %v298 = vsel %vm31, %v200, 0
  %v301 = vsel %vm31, %v201, 0
  %v304 = vsel %vm31, %v202, 0
  %v307 = vsel %vm31, %v203, 0
  %v310 = vsel %vm31, %v204, 0
  %v313 = vsel %vm31, %v205, 0
  %v316 = vsel %vm31, %v206, 0
  %v319 = vsel %vm31, %v207, 0
  %v322 = vsel %vm31, %v208, 0
  %v325 = vsel %vm31, %v209, 0
  %v328 = vsel %vm31, %v210, 0
  %330 = vmatpush.bf16.msra.mxu0 0
  %331 = vmatpush.bf16.msra.mxu0 0
  %332 = vmatpush.bf16.msra.mxu0 0
  %333 = vmatpush.bf16.msra.mxu0 0
  %334 = vmatpush.bf16.msra.mxu0 %v271
  %335 = vmatpush.bf16.msra.mxu0 %v267
  %336 = vmatpush.bf16.msra.mxu0 %v263
  %337 = vmatpush.bf16.msra.mxu0 %v259
  %338 = vmatmul.bf16.gmra.mxu0 %v292
  %v339 = vpop.f32.mrf.mxu0
  %v340 = vadd.f32 %v138, %v339
  %v341 = vpop.f32.mrf.mxu0
  %v342 = vadd.f32 %v138, %v341
  %343 = vmatmul.bf16.gmra.mxu0 %v295
  %v344 = vpop.f32.mrf.mxu0
  %v345 = vadd.f32 %v138, %v344
  %v346 = vpop.f32.mrf.mxu0
  %v347 = vadd.f32 %v138, %v346
  %348 = vmatmul.bf16.gmra.mxu0 %v298
  %v349 = vpop.f32.mrf.mxu0
  %v350 = vadd.f32 %v138, %v349
  %v351 = vpop.f32.mrf.mxu0
  %v352 = vadd.f32 %v138, %v351
  %353 = vmatmul.bf16.gmra.mxu0 %v301
  %v354 = vpop.f32.mrf.mxu0
  %v355 = vadd.f32 %v138, %v354
  %v356 = vpop.f32.mrf.mxu0
  %v357 = vadd.f32 %v138, %v356
  %358 = vmatmul.bf16.gmra.mxu0 %v304
  %v359 = vpop.f32.mrf.mxu0
  %v360 = vadd.f32 %v138, %v359
  %v361 = vpop.f32.mrf.mxu0
  %v362 = vadd.f32 %v138, %v361
  %363 = vmatmul.bf16.gmra.mxu0 %v307
  %v364 = vpop.f32.mrf.mxu0
  %v365 = vadd.f32 %v138, %v364
  %v366 = vpop.f32.mrf.mxu0
  %v367 = vadd.f32 %v138, %v366
  %368 = vmatmul.bf16.gmra.mxu0 %v310
  %v369 = vpop.f32.mrf.mxu0
  %v370 = vadd.f32 %v138, %v369
  %v371 = vpop.f32.mrf.mxu0
  %v372 = vadd.f32 %v138, %v371
  %373 = vmatmul.bf16.gmra.mxu0 %v313
  %v374 = vpop.f32.mrf.mxu0
  %v375 = vadd.f32 %v138, %v374
  %v376 = vpop.f32.mrf.mxu0
  %v377 = vadd.f32 %v138, %v376
  %378 = vmatmul.bf16.gmra.mxu0 %v316
  %v379 = vpop.f32.mrf.mxu0
  %v380 = vadd.f32 %v138, %v379
  %v381 = vpop.f32.mrf.mxu0
  %v382 = vadd.f32 %v138, %v381
  %383 = vmatmul.bf16.gmra.mxu0 %v319
  %v384 = vpop.f32.mrf.mxu0
  %v385 = vadd.f32 %v138, %v384
  %v386 = vpop.f32.mrf.mxu0
  %v387 = vadd.f32 %v138, %v386
  %388 = vmatmul.bf16.gmra.mxu0 %v322
  %v389 = vpop.f32.mrf.mxu0
  %v390 = vadd.f32 %v138, %v389
  %v391 = vpop.f32.mrf.mxu0
  %v392 = vadd.f32 %v138, %v391
  %393 = vmatmul.bf16.gmra.mxu0 %v325
  %v394 = vpop.f32.mrf.mxu0
  %v395 = vadd.f32 %v138, %v394
  %v396 = vpop.f32.mrf.mxu0
  %v397 = vadd.f32 %v138, %v396
  %398 = vmatmul.bf16.gmra.mxu0 %v328
  %v399 = vpop.f32.mrf.mxu0
  %v400 = vadd.f32 %v138, %v399
  %v401 = vpop.f32.mrf.mxu0
  %v402 = vadd.f32 %v138, %v401
  %403 = vdwg.mxu0
  %404 = vmatpush.bf16.msra.mxu0 0
  %405 = vmatpush.bf16.msra.mxu0 0
  %406 = vmatpush.bf16.msra.mxu0 0
  %407 = vmatpush.bf16.msra.mxu0 0
  %408 = vmatpush.bf16.msra.mxu0 %v272
  %409 = vmatpush.bf16.msra.mxu0 %v268
  %410 = vmatpush.bf16.msra.mxu0 %v264
  %411 = vmatpush.bf16.msra.mxu0 %v260
  %412 = vmatmul.bf16.gmra.mxu0 %v292
  %v413 = vpop.f32.mrf.mxu0
  %v414 = vadd.f32 %v139, %v413
  %v415 = vpop.f32.mrf.mxu0
  %v416 = vadd.f32 %v139, %v415
  %417 = vmatmul.bf16.gmra.mxu0 %v295
  %v418 = vpop.f32.mrf.mxu0
  %v419 = vadd.f32 %v139, %v418
  %v420 = vpop.f32.mrf.mxu0
  %v421 = vadd.f32 %v139, %v420
  %422 = vmatmul.bf16.gmra.mxu0 %v298
  %v423 = vpop.f32.mrf.mxu0
  %v424 = vadd.f32 %v139, %v423
  %v425 = vpop.f32.mrf.mxu0
  %v426 = vadd.f32 %v139, %v425
  %427 = vmatmul.bf16.gmra.mxu0 %v301
  %v428 = vpop.f32.mrf.mxu0
  %v429 = vadd.f32 %v139, %v428
  %v430 = vpop.f32.mrf.mxu0
  %v431 = vadd.f32 %v139, %v430
  %432 = vmatmul.bf16.gmra.mxu0 %v304
  %v433 = vpop.f32.mrf.mxu0
  %v434 = vadd.f32 %v139, %v433
  %v435 = vpop.f32.mrf.mxu0
  %v436 = vadd.f32 %v139, %v435
  %437 = vmatmul.bf16.gmra.mxu0 %v307
  %v438 = vpop.f32.mrf.mxu0
  %v439 = vadd.f32 %v139, %v438
  %v440 = vpop.f32.mrf.mxu0
  %v441 = vadd.f32 %v139, %v440
  %442 = vmatmul.bf16.gmra.mxu0 %v310
  %v443 = vpop.f32.mrf.mxu0
  %v444 = vadd.f32 %v139, %v443
  %v445 = vpop.f32.mrf.mxu0
  %v446 = vadd.f32 %v139, %v445
  %447 = vmatmul.bf16.gmra.mxu0 %v313
  %v448 = vpop.f32.mrf.mxu0
  %v449 = vadd.f32 %v139, %v448
  %v450 = vpop.f32.mrf.mxu0
  %v451 = vadd.f32 %v139, %v450
  %452 = vmatmul.bf16.gmra.mxu0 %v316
  %v453 = vpop.f32.mrf.mxu0
  %v454 = vadd.f32 %v139, %v453
  %v455 = vpop.f32.mrf.mxu0
  %v456 = vadd.f32 %v139, %v455
  %457 = vmatmul.bf16.gmra.mxu0 %v319
  %v458 = vpop.f32.mrf.mxu0
  %v459 = vadd.f32 %v139, %v458
  %v460 = vpop.f32.mrf.mxu0
  %v461 = vadd.f32 %v139, %v460
  %462 = vmatmul.bf16.gmra.mxu0 %v322
  %v463 = vpop.f32.mrf.mxu0
  %v464 = vadd.f32 %v139, %v463
  %v465 = vpop.f32.mrf.mxu0
  %v466 = vadd.f32 %v139, %v465
  %467 = vmatmul.bf16.gmra.mxu0 %v325
  %v468 = vpop.f32.mrf.mxu0
  %v469 = vadd.f32 %v139, %v468
  %v470 = vpop.f32.mrf.mxu0
  %v471 = vadd.f32 %v139, %v470
  %472 = vmatmul.bf16.gmra.mxu0 %v328
  %v473 = vpop.f32.mrf.mxu0
  %v474 = vadd.f32 %v139, %v473
  %v475 = vpop.f32.mrf.mxu0
  %v476 = vadd.f32 %v139, %v475
  %477 = vdwg.mxu0
  %478 = vmatpush.bf16.msra.mxu0 0
  %479 = vmatpush.bf16.msra.mxu0 0
  %480 = vmatpush.bf16.msra.mxu0 0
  %481 = vmatpush.bf16.msra.mxu0 0
  %482 = vmatpush.bf16.msra.mxu0 %v273
  %483 = vmatpush.bf16.msra.mxu0 %v269
  %484 = vmatpush.bf16.msra.mxu0 %v265
  %485 = vmatpush.bf16.msra.mxu0 %v261
  %486 = vmatmul.bf16.gmra.mxu0 %v292
  %v487 = vpop.f32.mrf.mxu0
  %v488 = vadd.f32 %v140, %v487
  %v489 = vpop.f32.mrf.mxu0
  %v490 = vadd.f32 %v140, %v489
  %491 = vmatmul.bf16.gmra.mxu0 %v295
  %v492 = vpop.f32.mrf.mxu0
  %v493 = vadd.f32 %v140, %v492
  %v494 = vpop.f32.mrf.mxu0
  %v495 = vadd.f32 %v140, %v494
  %496 = vmatmul.bf16.gmra.mxu0 %v298
  %v497 = vpop.f32.mrf.mxu0
  %v498 = vadd.f32 %v140, %v497
  %v499 = vpop.f32.mrf.mxu0
  %v500 = vadd.f32 %v140, %v499
  %501 = vmatmul.bf16.gmra.mxu0 %v301
  %v502 = vpop.f32.mrf.mxu0
  %v503 = vadd.f32 %v140, %v502
  %v504 = vpop.f32.mrf.mxu0
  %v505 = vadd.f32 %v140, %v504
  %506 = vmatmul.bf16.gmra.mxu0 %v304
  %v507 = vpop.f32.mrf.mxu0
  %v508 = vadd.f32 %v140, %v507
  %v509 = vpop.f32.mrf.mxu0
  %v510 = vadd.f32 %v140, %v509
  %511 = vmatmul.bf16.gmra.mxu0 %v307
  %v512 = vpop.f32.mrf.mxu0
  %v513 = vadd.f32 %v140, %v512
  %v514 = vpop.f32.mrf.mxu0
  %v515 = vadd.f32 %v140, %v514
  %516 = vmatmul.bf16.gmra.mxu0 %v310
  %v517 = vpop.f32.mrf.mxu0
  %v518 = vadd.f32 %v140, %v517
  %v519 = vpop.f32.mrf.mxu0
  %v520 = vadd.f32 %v140, %v519
  %521 = vmatmul.bf16.gmra.mxu0 %v313
  %v522 = vpop.f32.mrf.mxu0
  %v523 = vadd.f32 %v140, %v522
  %v524 = vpop.f32.mrf.mxu0
  %v525 = vadd.f32 %v140, %v524
  %526 = vmatmul.bf16.gmra.mxu0 %v316
  %v527 = vpop.f32.mrf.mxu0
  %v528 = vadd.f32 %v140, %v527
  %v529 = vpop.f32.mrf.mxu0
  %v530 = vadd.f32 %v140, %v529
  %531 = vmatmul.bf16.gmra.mxu0 %v319
  %v532 = vpop.f32.mrf.mxu0
  %v533 = vadd.f32 %v140, %v532
  %v534 = vpop.f32.mrf.mxu0
  %v535 = vadd.f32 %v140, %v534
  %536 = vmatmul.bf16.gmra.mxu0 %v322
  %v537 = vpop.f32.mrf.mxu0
  %v538 = vadd.f32 %v140, %v537
  %v539 = vpop.f32.mrf.mxu0
  %v540 = vadd.f32 %v140, %v539
  %541 = vmatmul.bf16.gmra.mxu0 %v325
  %v542 = vpop.f32.mrf.mxu0
  %v543 = vadd.f32 %v140, %v542
  %v544 = vpop.f32.mrf.mxu0
  %v545 = vadd.f32 %v140, %v544
  %546 = vmatmul.bf16.gmra.mxu0 %v328
  %v547 = vpop.f32.mrf.mxu0
  %v548 = vadd.f32 %v140, %v547
  %v549 = vpop.f32.mrf.mxu0
  %v550 = vadd.f32 %v140, %v549
  %551 = vdwg.mxu0
  %552 = vmatpush.bf16.msra.mxu0 0
  %553 = vmatpush.bf16.msra.mxu0 0
  %554 = vmatpush.bf16.msra.mxu0 0
  %555 = vmatpush.bf16.msra.mxu0 0
  %556 = vmatpush.bf16.msra.mxu0 %v274
  %557 = vmatpush.bf16.msra.mxu0 %v270
  %558 = vmatpush.bf16.msra.mxu0 %v266
  %559 = vmatpush.bf16.msra.mxu0 %v262
  %560 = vmatmul.bf16.gmra.mxu0 %v292
  %v561 = vpop.f32.mrf.mxu0
  %v562 = vadd.f32 %v141, %v561
  %v563 = vpop.f32.mrf.mxu0
  %v564 = vadd.f32 %v141, %v563
  %565 = vmatmul.bf16.gmra.mxu0 %v295
  %v566 = vpop.f32.mrf.mxu0
  %v567 = vadd.f32 %v141, %v566
  %v568 = vpop.f32.mrf.mxu0
  %v569 = vadd.f32 %v141, %v568
  %570 = vmatmul.bf16.gmra.mxu0 %v298
  %v571 = vpop.f32.mrf.mxu0
  %v572 = vadd.f32 %v141, %v571
  %v573 = vpop.f32.mrf.mxu0
  %v574 = vadd.f32 %v141, %v573
  %575 = vmatmul.bf16.gmra.mxu0 %v301
  %v576 = vpop.f32.mrf.mxu0
  %v577 = vadd.f32 %v141, %v576
  %v578 = vpop.f32.mrf.mxu0
  %v579 = vadd.f32 %v141, %v578
  %580 = vmatmul.bf16.gmra.mxu0 %v304
  %v581 = vpop.f32.mrf.mxu0
  %v582 = vadd.f32 %v141, %v581
  %v583 = vpop.f32.mrf.mxu0
  %v584 = vadd.f32 %v141, %v583
  %585 = vmatmul.bf16.gmra.mxu0 %v307
  %v586 = vpop.f32.mrf.mxu0
  %v587 = vadd.f32 %v141, %v586
  %v588 = vpop.f32.mrf.mxu0
  %v589 = vadd.f32 %v141, %v588
  %590 = vmatmul.bf16.gmra.mxu0 %v310
  %v591 = vpop.f32.mrf.mxu0
  %v592 = vadd.f32 %v141, %v591
  %v593 = vpop.f32.mrf.mxu0
  %v594 = vadd.f32 %v141, %v593
  %595 = vmatmul.bf16.gmra.mxu0 %v313
  %v596 = vpop.f32.mrf.mxu0
  %v597 = vadd.f32 %v141, %v596
  %v598 = vpop.f32.mrf.mxu0
  %v599 = vadd.f32 %v141, %v598
  %600 = vmatmul.bf16.gmra.mxu0 %v316
  %v601 = vpop.f32.mrf.mxu0
  %v602 = vadd.f32 %v141, %v601
  %v603 = vpop.f32.mrf.mxu0
  %v604 = vadd.f32 %v141, %v603
  %605 = vmatmul.bf16.gmra.mxu0 %v319
  %v606 = vpop.f32.mrf.mxu0
  %v607 = vadd.f32 %v141, %v606
  %v608 = vpop.f32.mrf.mxu0
  %v609 = vadd.f32 %v141, %v608
  %610 = vmatmul.bf16.gmra.mxu0 %v322
  %v611 = vpop.f32.mrf.mxu0
  %v612 = vadd.f32 %v141, %v611
  %v613 = vpop.f32.mrf.mxu0
  %v614 = vadd.f32 %v141, %v613
  %615 = vmatmul.bf16.gmra.mxu0 %v325
  %v616 = vpop.f32.mrf.mxu0
  %v617 = vadd.f32 %v141, %v616
  %v618 = vpop.f32.mrf.mxu0
  %v619 = vadd.f32 %v141, %v618
  %620 = vmatmul.bf16.gmra.mxu0 %v328
  %v621 = vpop.f32.mrf.mxu0
  %v622 = vadd.f32 %v141, %v621
  %v623 = vpop.f32.mrf.mxu0
  %v624 = vadd.f32 %v141, %v623
  %625 = vdwg.mxu0
  %626 = vst [vmem:[#allocation2] sm:$0xff] %v340
  %627 = vst [vmem:[#allocation2 + $0x8] sm:$0xff] %v414
  %628 = vst [vmem:[#allocation2 + $0x10] sm:$0xff] %v488
  %629 = vst [vmem:[#allocation2 + $0x18] sm:$0xff] %v562
  %630 = vst [vmem:[#allocation2 + $0x20] sm:$0xff] %v342
  %631 = vst [vmem:[#allocation2 + $0x28] sm:$0xff] %v416
  %632 = vst [vmem:[#allocation2 + $0x30] sm:$0xff] %v490
  %633 = vst [vmem:[#allocation2 + $0x38] sm:$0xff] %v564
  %634 = vst [vmem:[#allocation2 + $0x40] sm:$0xff] %v345
  %635 = vst [vmem:[#allocation2 + $0x48] sm:$0xff] %v419
  %636 = vst [vmem:[#allocation2 + $0x50] sm:$0xff] %v493
  %637 = vst [vmem:[#allocation2 + $0x58] sm:$0xff] %v567
  %638 = vst [vmem:[#allocation2 + $0x60] sm:$0xff] %v347
  %639 = vst [vmem:[#allocation2 + $0x68] sm:$0xff] %v421
  %640 = vst [vmem:[#allocation2 + $0x70] sm:$0xff] %v495
  %641 = vst [vmem:[#allocation2 + $0x78] sm:$0xff] %v569
  %642 = vst [vmem:[#allocation2 + $0x80] sm:$0xff] %v350
  %643 = vst [vmem:[#allocation2 + $0x88] sm:$0xff] %v424
  %644 = vst [vmem:[#allocation2 + $0x90] sm:$0xff] %v498
  %645 = vst [vmem:[#allocation2 + $0x98] sm:$0xff] %v572
  %646 = vst [vmem:[#allocation2 + $0xa0] sm:$0xff] %v352
  %647 = vst [vmem:[#allocation2 + $0xa8] sm:$0xff] %v426
  %648 = vst [vmem:[#allocation2 + $0xb0] sm:$0xff] %v500
  %649 = vst [vmem:[#allocation2 + $0xb8] sm:$0xff] %v574
  %650 = vst [vmem:[#allocation2 + $0xc0] sm:$0xff] %v355
  %651 = vst [vmem:[#allocation2 + $0xc8] sm:$0xff] %v429
  %652 = vst [vmem:[#allocation2 + $0xd0] sm:$0xff] %v503
  %653 = vst [vmem:[#allocation2 + $0xd8] sm:$0xff] %v577
  %654 = vst [vmem:[#allocation2 + $0xe0] sm:$0xff] %v357
  %655 = vst [vmem:[#allocation2 + $0xe8] sm:$0xff] %v431
  %656 = vst [vmem:[#allocation2 + $0xf0] sm:$0xff] %v505
  %657 = vst [vmem:[#allocation2 + $0xf8] sm:$0xff] %v579
  %658 = vst [vmem:[#allocation2 + $0x100] sm:$0xff] %v360
  %659 = vst [vmem:[#allocation2 + $0x108] sm:$0xff] %v434
  %660 = vst [vmem:[#allocation2 + $0x110] sm:$0xff] %v508
  %661 = vst [vmem:[#allocation2 + $0x118] sm:$0xff] %v582
  %662 = vst [vmem:[#allocation2 + $0x120] sm:$0xff] %v362
  %663 = vst [vmem:[#allocation2 + $0x128] sm:$0xff] %v436
  %664 = vst [vmem:[#allocation2 + $0x130] sm:$0xff] %v510
  %665 = vst [vmem:[#allocation2 + $0x138] sm:$0xff] %v584
  %666 = vst [vmem:[#allocation2 + $0x140] sm:$0xff] %v365
  %667 = vst [vmem:[#allocation2 + $0x148] sm:$0xff] %v439
  %668 = vst [vmem:[#allocation2 + $0x150] sm:$0xff] %v513
  %669 = vst [vmem:[#allocation2 + $0x158] sm:$0xff] %v587
  %670 = vst [vmem:[#allocation2 + $0x160] sm:$0xff] %v367
  %671 = vst [vmem:[#allocation2 + $0x168] sm:$0xff] %v441
  %672 = vst [vmem:[#allocation2 + $0x170] sm:$0xff] %v515
  %673 = vst [vmem:[#allocation2 + $0x178] sm:$0xff] %v589
  %674 = vst [vmem:[#allocation2 + $0x180] sm:$0xff] %v370
  %675 = vst [vmem:[#allocation2 + $0x188] sm:$0xff] %v444
  %676 = vst [vmem:[#allocation2 + $0x190] sm:$0xff] %v518
  %677 = vst [vmem:[#allocation2 + $0x198] sm:$0xff] %v592
  %678 = vst [vmem:[#allocation2 + $0x1a0] sm:$0xff] %v372
  %679 = vst [vmem:[#allocation2 + $0x1a8] sm:$0xff] %v446
  %680 = vst [vmem:[#allocation2 + $0x1b0] sm:$0xff] %v520
  %681 = vst [vmem:[#allocation2 + $0x1b8] sm:$0xff] %v594
  %682 = vst [vmem:[#allocation2 + $0x1c0] sm:$0xff] %v375
  %683 = vst [vmem:[#allocation2 + $0x1c8] sm:$0xff] %v449
  %684 = vst [vmem:[#allocation2 + $0x1d0] sm:$0xff] %v523
  %685 = vst [vmem:[#allocation2 + $0x1d8] sm:$0xff] %v597
  %686 = vst [vmem:[#allocation2 + $0x1e0] sm:$0xff] %v377
  %687 = vst [vmem:[#allocation2 + $0x1e8] sm:$0xff] %v451
  %688 = vst [vmem:[#allocation2 + $0x1f0] sm:$0xff] %v525
  %689 = vst [vmem:[#allocation2 + $0x1f8] sm:$0xff] %v599
  %690 = vst [vmem:[#allocation2 + $0x200] sm:$0xff] %v380
  %691 = vst [vmem:[#allocation2 + $0x208] sm:$0xff] %v454
  %692 = vst [vmem:[#allocation2 + $0x210] sm:$0xff] %v528
  %693 = vst [vmem:[#allocation2 + $0x218] sm:$0xff] %v602
  %694 = vst [vmem:[#allocation2 + $0x220] sm:$0xff] %v382
  %695 = vst [vmem:[#allocation2 + $0x228] sm:$0xff] %v456
  %696 = vst [vmem:[#allocation2 + $0x230] sm:$0xff] %v530
  %697 = vst [vmem:[#allocation2 + $0x238] sm:$0xff] %v604
  %698 = vst [vmem:[#allocation2 + $0x240] sm:$0xff] %v385
  %699 = vst [vmem:[#allocation2 + $0x248] sm:$0xff] %v459
  %700 = vst [vmem:[#allocation2 + $0x250] sm:$0xff] %v533
  %701 = vst [vmem:[#allocation2 + $0x258] sm:$0xff] %v607
  %702 = vst [vmem:[#allocation2 + $0x260] sm:$0xff] %v387
  %703 = vst [vmem:[#allocation2 + $0x268] sm:$0xff] %v461
  %704 = vst [vmem:[#allocation2 + $0x270] sm:$0xff] %v535
  %705 = vst [vmem:[#allocation2 + $0x278] sm:$0xff] %v609
  %706 = vst [vmem:[#allocation2 + $0x280] sm:$0xff] %v390
  %707 = vst [vmem:[#allocation2 + $0x288] sm:$0xff] %v464
  %708 = vst [vmem:[#allocation2 + $0x290] sm:$0xff] %v538
  %709 = vst [vmem:[#allocation2 + $0x298] sm:$0xff] %v612
  %710 = vst [vmem:[#allocation2 + $0x2a0] sm:$0xff] %v392
  %711 = vst [vmem:[#allocation2 + $0x2a8] sm:$0xff] %v466
  %712 = vst [vmem:[#allocation2 + $0x2b0] sm:$0xff] %v540
  %713 = vst [vmem:[#allocation2 + $0x2b8] sm:$0xff] %v614
  %714 = vst [vmem:[#allocation2 + $0x2c0] sm:$0xff] %v395
  %715 = vst [vmem:[#allocation2 + $0x2c8] sm:$0xff] %v469
  %716 = vst [vmem:[#allocation2 + $0x2d0] sm:$0xff] %v543
  %717 = vst [vmem:[#allocation2 + $0x2d8] sm:$0xff] %v617
  %718 = vst [vmem:[#allocation2 + $0x2e0] sm:$0xff] %v397
  %719 = vst [vmem:[#allocation2 + $0x2e8] sm:$0xff] %v471
  %720 = vst [vmem:[#allocation2 + $0x2f0] sm:$0xff] %v545
  %721 = vst [vmem:[#allocation2 + $0x2f8] sm:$0xff] %v619
  %722 = vst [vmem:[#allocation2 + $0x300] sm:$0xff] %v400
  %723 = vst [vmem:[#allocation2 + $0x308] sm:$0xff] %v474
  %724 = vst [vmem:[#allocation2 + $0x310] sm:$0xff] %v548
  %725 = vst [vmem:[#allocation2 + $0x318] sm:$0xff] %v622
  %726 = vst [vmem:[#allocation2 + $0x320] sm:$0xff] %v402
  %727 = vst [vmem:[#allocation2 + $0x328] sm:$0xff] %v476
  %728 = vst [vmem:[#allocation2 + $0x330] sm:$0xff] %v550
  %729 = vst [vmem:[#allocation2 + $0x338] sm:$0xff] %v624
  %v730 = vld [vmem:[%s3 + $0x80] sm:$0xff]
  %v731 = vld [vmem:[%s3 + $0x88] sm:$0xff]
  %v732 = vld [vmem:[%s3 + $0x90] sm:$0xff]
  %v733 = vld [vmem:[%s3 + $0x98] sm:$0xff]
  %v734 = vld [vmem:[%s3 + $0xa0] sm:$0xff]
  %v735 = vld [vmem:[%s3 + $0xa8] sm:$0xff]
  %v736 = vld [vmem:[%s3 + $0xb0] sm:$0xff]
  %v737 = vld [vmem:[%s3 + $0xb8] sm:$0xff]
  %v738 = vld [vmem:[%s3 + $0xc0] sm:$0xff]
  %v739 = vld [vmem:[%s3 + $0xc8] sm:$0xff]
  %v740 = vld [vmem:[%s3 + $0xd0] sm:$0xff]
  %v741 = vld [vmem:[%s3 + $0xd8] sm:$0xff]
  %v742 = vld [vmem:[%s3 + $0xe0] sm:$0xff]
  %v743 = vld [vmem:[%s3 + $0xe8] sm:$0xff]
  %v744 = vld [vmem:[%s3 + $0xf0] sm:$0xff]
  %v745 = vld [vmem:[%s3 + $0xf8] sm:$0xff]
  %v746 = vld [vmem:[%s3 + $0x100] sm:$0xff]
  %v747 = vld [vmem:[%s3 + $0x108] sm:$0xff]
  %v748 = vld [vmem:[%s3 + $0x110] sm:$0xff]
  %v749 = vld [vmem:[%s3 + $0x118] sm:$0xff]
  %v750 = vld [vmem:[%s3 + $0x120] sm:$0xff]
  %v751 = vld [vmem:[%s3 + $0x128] sm:$0xff]
  %v752 = vld [vmem:[%s3 + $0x130] sm:$0xff]
  %v753 = vld [vmem:[%s3 + $0x138] sm:$0xff]
  %v754 = vld [vmem:[%s3 + $0x140] sm:$0xff]
  %v755 = vld [vmem:[%s3 + $0x148] sm:$0xff]
  %v756 = vld [vmem:[%s3 + $0x150] sm:$0xff]
  %v757 = vld [vmem:[%s3 + $0x158] sm:$0xff]
  %v758 = vld [vmem:[%s3 + $0x160] sm:$0xff]
  %v759 = vld [vmem:[%s3 + $0x168] sm:$0xff]
  %v760 = vld [vmem:[%s3 + $0x170] sm:$0xff]
  %v761 = vld [vmem:[%s3 + $0x178] sm:$0xff]
  %v762 = vld [vmem:[#allocation2] sm:$0xff]
  %v763 = vld [vmem:[#allocation2 + $0x8] sm:$0xff]
  %v764 = vld [vmem:[#allocation2 + $0x10] sm:$0xff]
  %v765 = vld [vmem:[#allocation2 + $0x18] sm:$0xff]
  %v766 = vpack.c.bf16 %v91, %v91
  %v799 = vunpack.c.l.b16 %v730
  %v800 = vunpack.c.h.b16 %v730
  %v801 = vunpack.c.l.b16 %v731
  %v802 = vunpack.c.h.b16 %v731
  %v803 = vunpack.c.l.b16 %v732
  %v804 = vunpack.c.h.b16 %v732
  %v805 = vunpack.c.l.b16 %v733
  %v806 = vunpack.c.h.b16 %v733
  %v807 = vunpack.c.l.b16 %v734
  %v808 = vunpack.c.h.b16 %v734
  %v809 = vunpack.c.l.b16 %v735
  %v810 = vunpack.c.h.b16 %v735
  %v811 = vunpack.c.l.b16 %v736
  %v812 = vunpack.c.h.b16 %v736
  %v813 = vunpack.c.l.b16 %v737
  %v814 = vunpack.c.h.b16 %v737
  %v815 = vunpack.c.l.b16 %v738
  %v816 = vunpack.c.h.b16 %v738
  %v817 = vunpack.c.l.b16 %v739
  %v818 = vunpack.c.h.b16 %v739
  %v819 = vunpack.c.l.b16 %v740
  %v820 = vunpack.c.h.b16 %v740
  %v821 = vunpack.c.l.b16 %v741
  %v822 = vunpack.c.h.b16 %v741
  %v823 = vunpack.c.l.b16 %v742
  %v824 = vunpack.c.h.b16 %v742
  %v825 = vunpack.c.l.b16 %v743
  %v826 = vunpack.c.h.b16 %v743
  %v827 = vunpack.c.l.b16 %v744
  %v828 = vunpack.c.h.b16 %v744
  %v829 = vunpack.c.l.b16 %v745
  %v830 = vunpack.c.h.b16 %v745
  %v831 = vunpack.c.l.b16 %v746
  %v832 = vunpack.c.h.b16 %v746
  %v833 = vunpack.c.l.b16 %v747
  %v834 = vunpack.c.h.b16 %v747
  %v835 = vunpack.c.l.b16 %v748
  %v836 = vunpack.c.h.b16 %v748
  %v837 = vunpack.c.l.b16 %v749
  %v838 = vunpack.c.h.b16 %v749
  %v839 = vunpack.c.l.b16 %v750
  %v840 = vunpack.c.h.b16 %v750
  %v841 = vunpack.c.l.b16 %v751
  %v842 = vunpack.c.h.b16 %v751
  %v843 = vunpack.c.l.b16 %v752
  %v844 = vunpack.c.h.b16 %v752
  %v845 = vunpack.c.l.b16 %v753
  %v846 = vunpack.c.h.b16 %v753
  %v847 = vunpack.c.l.b16 %v754
  %v848 = vunpack.c.h.b16 %v754
  %v849 = vunpack.c.l.b16 %v755
  %v850 = vunpack.c.h.b16 %v755
  %v851 = vunpack.c.l.b16 %v756
  %v852 = vunpack.c.h.b16 %v756
  %v853 = vunpack.c.l.b16 %v757
  %v854 = vunpack.c.h.b16 %v757
  %v855 = vunpack.c.l.b16 %v758
  %v856 = vunpack.c.h.b16 %v758
  %v857 = vunpack.c.l.b16 %v759
  %v858 = vunpack.c.h.b16 %v759
  %v859 = vunpack.c.l.b16 %v760
  %v860 = vunpack.c.h.b16 %v760
  %v861 = vunpack.c.l.b16 %v761
  %v862 = vunpack.c.h.b16 %v761
  %v863 = vpack.c.b16 %v803, %v799
  %v864 = vpack.c.b16 %v804, %v800
  %v865 = vpack.c.b16 %v805, %v801
  %v866 = vpack.c.b16 %v806, %v802
  %v867 = vpack.c.b16 %v811, %v807
  %v868 = vpack.c.b16 %v812, %v808
  %v869 = vpack.c.b16 %v813, %v809
  %v870 = vpack.c.b16 %v814, %v810
  %v871 = vpack.c.b16 %v819, %v815
  %v872 = vpack.c.b16 %v820, %v816
  %v873 = vpack.c.b16 %v821, %v817
  %v874 = vpack.c.b16 %v822, %v818
  %v875 = vpack.c.b16 %v827, %v823
  %v876 = vpack.c.b16 %v828, %v824
  %v877 = vpack.c.b16 %v829, %v825
  %v878 = vpack.c.b16 %v830, %v826
  %v879 = vpack.c.b16 %v835, %v831
  %v880 = vpack.c.b16 %v836, %v832
  %v881 = vpack.c.b16 %v837, %v833
  %v882 = vpack.c.b16 %v838, %v834
  %v883 = vpack.c.b16 %v843, %v839
  %v884 = vpack.c.b16 %v844, %v840
  %v885 = vpack.c.b16 %v845, %v841
  %v886 = vpack.c.b16 %v846, %v842
  %v887 = vpack.c.b16 %v851, %v847
  %v888 = vpack.c.b16 %v852, %v848
  %v889 = vpack.c.b16 %v853, %v849
  %v890 = vpack.c.b16 %v854, %v850
  %v891 = vpack.c.b16 %v859, %v855
  %v892 = vpack.c.b16 %v860, %v856
  %v893 = vpack.c.b16 %v861, %v857
  %v894 = vpack.c.b16 %v862, %v858
  %927 = vmatpush.bf16.msra.mxu0 %v891
  %928 = vmatpush.bf16.msra.mxu0 %v887
  %929 = vmatpush.bf16.msra.mxu0 %v883
  %930 = vmatpush.bf16.msra.mxu0 %v879
  %931 = vmatpush.bf16.msra.mxu0 %v875
  %932 = vmatpush.bf16.msra.mxu0 %v871
  %933 = vmatpush.bf16.msra.mxu0 %v867
  %934 = vmatpush.bf16.msra.mxu0 %v863
  %935 = vmatmul.bf16.gmra.mxu0 %v766
  %v936 = vpop.f32.mrf.mxu0
  %v937 = vadd.f32 0.0, %v936
  %v938 = vpop.f32.mrf.mxu0
  %939 = vdwg.mxu0
  %940 = vmatpush.bf16.msra.mxu0 %v892
  %941 = vmatpush.bf16.msra.mxu0 %v888
  %942 = vmatpush.bf16.msra.mxu0 %v884
  %943 = vmatpush.bf16.msra.mxu0 %v880
  %944 = vmatpush.bf16.msra.mxu0 %v876
  %945 = vmatpush.bf16.msra.mxu0 %v872
  %946 = vmatpush.bf16.msra.mxu0 %v868
  %947 = vmatpush.bf16.msra.mxu0 %v864
  %948 = vmatmul.bf16.gmra.mxu0 %v766
  %v949 = vpop.f32.mrf.mxu0
  %v950 = vadd.f32 0.0, %v949
  %v951 = vpop.f32.mrf.mxu0
  %952 = vdwg.mxu0
  %953 = vmatpush.bf16.msra.mxu0 %v893
  %954 = vmatpush.bf16.msra.mxu0 %v889
  %955 = vmatpush.bf16.msra.mxu0 %v885
  %956 = vmatpush.bf16.msra.mxu0 %v881
  %957 = vmatpush.bf16.msra.mxu0 %v877
  %958 = vmatpush.bf16.msra.mxu0 %v873
  %959 = vmatpush.bf16.msra.mxu0 %v869
  %960 = vmatpush.bf16.msra.mxu0 %v865
  %961 = vmatmul.bf16.gmra.mxu0 %v766
  %v962 = vpop.f32.mrf.mxu0
  %v963 = vadd.f32 0.0, %v962
  %v964 = vpop.f32.mrf.mxu0
  %965 = vdwg.mxu0
  %966 = vmatpush.bf16.msra.mxu0 %v894
  %967 = vmatpush.bf16.msra.mxu0 %v890
  %968 = vmatpush.bf16.msra.mxu0 %v886
  %969 = vmatpush.bf16.msra.mxu0 %v882
  %970 = vmatpush.bf16.msra.mxu0 %v878
  %971 = vmatpush.bf16.msra.mxu0 %v874
  %972 = vmatpush.bf16.msra.mxu0 %v870
  %973 = vmatpush.bf16.msra.mxu0 %v866
  %974 = vmatmul.bf16.gmra.mxu0 %v766
  %v975 = vpop.f32.mrf.mxu0
  %v976 = vadd.f32 0.0, %v975
  %v977 = vpop.f32.mrf.mxu0
  %978 = vdwg.mxu0
  %v979 = vadd.f32 %v762, %v937
  %v980 = vadd.f32 %v763, %v950
  %v981 = vadd.f32 %v764, %v963
  %v982 = vadd.f32 %v765, %v976
  %v983 = vmul.f32 %v979, 0.5
  %v984 = vtanh.pop %v983
  %v985 = vmul.f32 %v984, 0.5
  %v986 = vadd.f32 %v985, 0.5
  %v987 = vmul.f32 %v980, 0.5
  %v988 = vtanh.pop %v987
  %v989 = vmul.f32 %v988, 0.5
  %v990 = vadd.f32 %v989, 0.5
  %v991 = vtanh.pop %v981
  %v992 = vmul.f32 %v982, 0.5
  %v993 = vtanh.pop %v992
  %v994 = vmul.f32 %v993, 0.5
  %v995 = vadd.f32 %v994, 0.5
  %v996 = vmul.f32 %v990, %v91
  %v997 = vmul.f32 %v986, %v991
  %v998 = vadd.f32 %v996, %v997
  %v999 = vtanh.pop %v998
  %v1000 = vmul.f32 %v995, %v999
  %v1001 = vld [vmem:[#allocation2 + $0x20] sm:$0xff]
  %v1002 = vld [vmem:[#allocation2 + $0x28] sm:$0xff]
  %v1003 = vld [vmem:[#allocation2 + $0x30] sm:$0xff]
  %v1004 = vld [vmem:[#allocation2 + $0x38] sm:$0xff]
  %v1005 = vpack.c.bf16 %v1000, %v1000
  %1006 = vmatpush.bf16.msra.mxu0 %v891
  %1007 = vmatpush.bf16.msra.mxu0 %v887
  %1008 = vmatpush.bf16.msra.mxu0 %v883
  %1009 = vmatpush.bf16.msra.mxu0 %v879
  %1010 = vmatpush.bf16.msra.mxu0 %v875
  %1011 = vmatpush.bf16.msra.mxu0 %v871
  %1012 = vmatpush.bf16.msra.mxu0 %v867
  %1013 = vmatpush.bf16.msra.mxu0 %v863
  %1014 = vmatmul.bf16.gmra.mxu0 %v1005
  %v1015 = vpop.f32.mrf.mxu0
  %v1016 = vadd.f32 0.0, %v1015
  %v1017 = vpop.f32.mrf.mxu0
  %1018 = vdwg.mxu0
  %1019 = vmatpush.bf16.msra.mxu0 %v892
  %1020 = vmatpush.bf16.msra.mxu0 %v888
  %1021 = vmatpush.bf16.msra.mxu0 %v884
  %1022 = vmatpush.bf16.msra.mxu0 %v880
  %1023 = vmatpush.bf16.msra.mxu0 %v876
  %1024 = vmatpush.bf16.msra.mxu0 %v872
  %1025 = vmatpush.bf16.msra.mxu0 %v868
  %1026 = vmatpush.bf16.msra.mxu0 %v864
  %1027 = vmatmul.bf16.gmra.mxu0 %v1005
  %v1028 = vpop.f32.mrf.mxu0
  %v1029 = vadd.f32 0.0, %v1028
  %v1030 = vpop.f32.mrf.mxu0
  %1031 = vdwg.mxu0
  %1032 = vmatpush.bf16.msra.mxu0 %v893
  %1033 = vmatpush.bf16.msra.mxu0 %v889
  %1034 = vmatpush.bf16.msra.mxu0 %v885
  %1035 = vmatpush.bf16.msra.mxu0 %v881
  %1036 = vmatpush.bf16.msra.mxu0 %v877
  %1037 = vmatpush.bf16.msra.mxu0 %v873
  %1038 = vmatpush.bf16.msra.mxu0 %v869
  %1039 = vmatpush.bf16.msra.mxu0 %v865
  %1040 = vmatmul.bf16.gmra.mxu0 %v1005
  %v1041 = vpop.f32.mrf.mxu0
  %v1042 = vadd.f32 0.0, %v1041
  %v1043 = vpop.f32.mrf.mxu0
  %1044 = vdwg.mxu0
  %1045 = vmatpush.bf16.msra.mxu0 %v894
  %1046 = vmatpush.bf16.msra.mxu0 %v890
  %1047 = vmatpush.bf16.msra.mxu0 %v886
  %1048 = vmatpush.bf16.msra.mxu0 %v882
  %1049 = vmatpush.bf16.msra.mxu0 %v878
  %1050 = vmatpush.bf16.msra.mxu0 %v874
  %1051 = vmatpush.bf16.msra.mxu0 %v870
  %1052 = vmatpush.bf16.msra.mxu0 %v866
  %1053 = vmatmul.bf16.gmra.mxu0 %v1005
  %v1054 = vpop.f32.mrf.mxu0
  %v1055 = vadd.f32 0.0, %v1054
  %v1056 = vpop.f32.mrf.mxu0
  %1057 = vdwg.mxu0
  %v1058 = vadd.f32 %v1001, %v1016
  %v1059 = vadd.f32 %v1002, %v1029
  %v1060 = vadd.f32 %v1003, %v1042
  %v1061 = vadd.f32 %v1004, %v1055
  %v1062 = vmul.f32 %v1058, 0.5
  %v1063 = vtanh.pop %v1062
  %v1064 = vmul.f32 %v1063, 0.5
  %v1065 = vadd.f32 %v1064, 0.5
  %v1066 = vmul.f32 %v1059, 0.5
  %v1067 = vtanh.pop %v1066
  %v1068 = vmul.f32 %v1067, 0.5
  %v1069 = vadd.f32 %v1068, 0.5
  %v1070 = vtanh.pop %v1060
  %v1071 = vmul.f32 %v1061, 0.5
  %v1072 = vtanh.pop %v1071
  %v1073 = vmul.f32 %v1072, 0.5
  %v1074 = vadd.f32 %v1073, 0.5
  %v1075 = vmul.f32 %v1069, %v998
  %v1076 = vmul.f32 %v1065, %v1070
  %v1077 = vadd.f32 %v1075, %v1076
  %v1078 = vtanh.pop %v1077
  %v1079 = vmul.f32 %v1074, %v1078
  %v1080 = vld [vmem:[#allocation2 + $0x40] sm:$0xff]
  %v1081 = vld [vmem:[#allocation2 + $0x48] sm:$0xff]
  %v1082 = vld [vmem:[#allocation2 + $0x50] sm:$0xff]
  %v1083 = vld [vmem:[#allocation2 + $0x58] sm:$0xff]
  %v1084 = vpack.c.bf16 %v1079, %v1079
  %1085 = vmatpush.bf16.msra.mxu0 %v891
  %1086 = vmatpush.bf16.msra.mxu0 %v887
  %1087 = vmatpush.bf16.msra.mxu0 %v883
  %1088 = vmatpush.bf16.msra.mxu0 %v879
  %1089 = vmatpush.bf16.msra.mxu0 %v875
  %1090 = vmatpush.bf16.msra.mxu0 %v871
  %1091 = vmatpush.bf16.msra.mxu0 %v867
  %1092 = vmatpush.bf16.msra.mxu0 %v863
  %1093 = vmatmul.bf16.gmra.mxu0 %v1084
  %v1094 = vpop.f32.mrf.mxu0
  %v1095 = vadd.f32 0.0, %v1094
  %v1096 = vpop.f32.mrf.mxu0
  %1097 = vdwg.mxu0
  %1098 = vmatpush.bf16.msra.mxu0 %v892
  %1099 = vmatpush.bf16.msra.mxu0 %v888
  %1100 = vmatpush.bf16.msra.mxu0 %v884
  %1101 = vmatpush.bf16.msra.mxu0 %v880
  %1102 = vmatpush.bf16.msra.mxu0 %v876
  %1103 = vmatpush.bf16.msra.mxu0 %v872
  %1104 = vmatpush.bf16.msra.mxu0 %v868
  %1105 = vmatpush.bf16.msra.mxu0 %v864
  %1106 = vmatmul.bf16.gmra.mxu0 %v1084
  %v1107 = vpop.f32.mrf.mxu0
  %v1108 = vadd.f32 0.0, %v1107
  %v1109 = vpop.f32.mrf.mxu0
  %1110 = vdwg.mxu0
  %1111 = vmatpush.bf16.msra.mxu0 %v893
  %1112 = vmatpush.bf16.msra.mxu0 %v889
  %1113 = vmatpush.bf16.msra.mxu0 %v885
  %1114 = vmatpush.bf16.msra.mxu0 %v881
  %1115 = vmatpush.bf16.msra.mxu0 %v877
  %1116 = vmatpush.bf16.msra.mxu0 %v873
  %1117 = vmatpush.bf16.msra.mxu0 %v869
  %1118 = vmatpush.bf16.msra.mxu0 %v865
  %1119 = vmatmul.bf16.gmra.mxu0 %v1084
  %v1120 = vpop.f32.mrf.mxu0
  %v1121 = vadd.f32 0.0, %v1120
  %v1122 = vpop.f32.mrf.mxu0
  %1123 = vdwg.mxu0
  %1124 = vmatpush.bf16.msra.mxu0 %v894
  %1125 = vmatpush.bf16.msra.mxu0 %v890
  %1126 = vmatpush.bf16.msra.mxu0 %v886
  %1127 = vmatpush.bf16.msra.mxu0 %v882
  %1128 = vmatpush.bf16.msra.mxu0 %v878
  %1129 = vmatpush.bf16.msra.mxu0 %v874
  %1130 = vmatpush.bf16.msra.mxu0 %v870
  %1131 = vmatpush.bf16.msra.mxu0 %v866
  %1132 = vmatmul.bf16.gmra.mxu0 %v1084
  %v1133 = vpop.f32.mrf.mxu0
  %v1134 = vadd.f32 0.0, %v1133
  %v1135 = vpop.f32.mrf.mxu0
  %1136 = vdwg.mxu0
  %v1137 = vadd.f32 %v1080, %v1095
  %v1138 = vadd.f32 %v1081, %v1108
  %v1139 = vadd.f32 %v1082, %v1121
  %v1140 = vadd.f32 %v1083, %v1134
  %v1141 = vmul.f32 %v1137, 0.5
  %v1142 = vtanh.pop %v1141
  %v1143 = vmul.f32 %v1142, 0.5
  %v1144 = vadd.f32 %v1143, 0.5
  %v1145 = vmul.f32 %v1138, 0.5
  %v1146 = vtanh.pop %v1145
  %v1147 = vmul.f32 %v1146, 0.5
  %v1148 = vadd.f32 %v1147, 0.5
  %v1149 = vtanh.pop %v1139
  %v1150 = vmul.f32 %v1140, 0.5
  %v1151 = vtanh.pop %v1150
  %v1152 = vmul.f32 %v1151, 0.5
  %v1153 = vadd.f32 %v1152, 0.5
  %v1154 = vmul.f32 %v1148, %v1077
  %v1155 = vmul.f32 %v1144, %v1149
  %v1156 = vadd.f32 %v1154, %v1155
  %v1157 = vtanh.pop %v1156
  %v1158 = vmul.f32 %v1153, %v1157
  %v1159 = vld [vmem:[#allocation2 + $0x60] sm:$0xff]
  %v1160 = vld [vmem:[#allocation2 + $0x68] sm:$0xff]
  %v1161 = vld [vmem:[#allocation2 + $0x70] sm:$0xff]
  %v1162 = vld [vmem:[#allocation2 + $0x78] sm:$0xff]
  %v1163 = vpack.c.bf16 %v1158, %v1158
  %1164 = vmatpush.bf16.msra.mxu0 %v891
  %1165 = vmatpush.bf16.msra.mxu0 %v887
  %1166 = vmatpush.bf16.msra.mxu0 %v883
  %1167 = vmatpush.bf16.msra.mxu0 %v879
  %1168 = vmatpush.bf16.msra.mxu0 %v875
  %1169 = vmatpush.bf16.msra.mxu0 %v871
  %1170 = vmatpush.bf16.msra.mxu0 %v867
  %1171 = vmatpush.bf16.msra.mxu0 %v863
  %1172 = vmatmul.bf16.gmra.mxu0 %v1163
  %v1173 = vpop.f32.mrf.mxu0
  %v1174 = vadd.f32 0.0, %v1173
  %v1175 = vpop.f32.mrf.mxu0
  %1176 = vdwg.mxu0
  %1177 = vmatpush.bf16.msra.mxu0 %v892
  %1178 = vmatpush.bf16.msra.mxu0 %v888
  %1179 = vmatpush.bf16.msra.mxu0 %v884
  %1180 = vmatpush.bf16.msra.mxu0 %v880
  %1181 = vmatpush.bf16.msra.mxu0 %v876
  %1182 = vmatpush.bf16.msra.mxu0 %v872
  %1183 = vmatpush.bf16.msra.mxu0 %v868
  %1184 = vmatpush.bf16.msra.mxu0 %v864
  %1185 = vmatmul.bf16.gmra.mxu0 %v1163
  %v1186 = vpop.f32.mrf.mxu0
  %v1187 = vadd.f32 0.0, %v1186
  %v1188 = vpop.f32.mrf.mxu0
  %1189 = vdwg.mxu0
  %1190 = vmatpush.bf16.msra.mxu0 %v893
  %1191 = vmatpush.bf16.msra.mxu0 %v889
  %1192 = vmatpush.bf16.msra.mxu0 %v885
  %1193 = vmatpush.bf16.msra.mxu0 %v881
  %1194 = vmatpush.bf16.msra.mxu0 %v877
  %1195 = vmatpush.bf16.msra.mxu0 %v873
  %1196 = vmatpush.bf16.msra.mxu0 %v869
  %1197 = vmatpush.bf16.msra.mxu0 %v865
  %1198 = vmatmul.bf16.gmra.mxu0 %v1163
  %v1199 = vpop.f32.mrf.mxu0
  %v1200 = vadd.f32 0.0, %v1199
  %v1201 = vpop.f32.mrf.mxu0
  %1202 = vdwg.mxu0
  %1203 = vmatpush.bf16.msra.mxu0 %v894
  %1204 = vmatpush.bf16.msra.mxu0 %v890
  %1205 = vmatpush.bf16.msra.mxu0 %v886
  %1206 = vmatpush.bf16.msra.mxu0 %v882
  %1207 = vmatpush.bf16.msra.mxu0 %v878
  %1208 = vmatpush.bf16.msra.mxu0 %v874
  %1209 = vmatpush.bf16.msra.mxu0 %v870
  %1210 = vmatpush.bf16.msra.mxu0 %v866
  %1211 = vmatmul.bf16.gmra.mxu0 %v1163
  %v1212 = vpop.f32.mrf.mxu0
  %v1213 = vadd.f32 0.0, %v1212
  %v1214 = vpop.f32.mrf.mxu0
  %1215 = vdwg.mxu0
  %v1216 = vadd.f32 %v1159, %v1174
  %v1217 = vadd.f32 %v1160, %v1187
  %v1218 = vadd.f32 %v1161, %v1200
  %v1219 = vadd.f32 %v1162, %v1213
  %v1220 = vmul.f32 %v1216, 0.5
  %v1221 = vtanh.pop %v1220
  %v1222 = vmul.f32 %v1221, 0.5
  %v1223 = vadd.f32 %v1222, 0.5
  %v1224 = vmul.f32 %v1217, 0.5
  %v1225 = vtanh.pop %v1224
  %v1226 = vmul.f32 %v1225, 0.5
  %v1227 = vadd.f32 %v1226, 0.5
  %v1228 = vtanh.pop %v1218
  %v1229 = vmul.f32 %v1219, 0.5
  %v1230 = vtanh.pop %v1229
  %v1231 = vmul.f32 %v1230, 0.5
  %v1232 = vadd.f32 %v1231, 0.5
  %v1233 = vmul.f32 %v1227, %v1156
  %v1234 = vmul.f32 %v1223, %v1228
  %v1235 = vadd.f32 %v1233, %v1234
  %v1236 = vtanh.pop %v1235
  %v1237 = vmul.f32 %v1232, %v1236
  %v1238 = vld [vmem:[#allocation2 + $0x80] sm:$0xff]
  %v1239 = vld [vmem:[#allocation2 + $0x88] sm:$0xff]
  %v1240 = vld [vmem:[#allocation2 + $0x90] sm:$0xff]
  %v1241 = vld [vmem:[#allocation2 + $0x98] sm:$0xff]
  %v1242 = vpack.c.bf16 %v1237, %v1237
  %1243 = vmatpush.bf16.msra.mxu0 %v891
  %1244 = vmatpush.bf16.msra.mxu0 %v887
  %1245 = vmatpush.bf16.msra.mxu0 %v883
  %1246 = vmatpush.bf16.msra.mxu0 %v879
  %1247 = vmatpush.bf16.msra.mxu0 %v875
  %1248 = vmatpush.bf16.msra.mxu0 %v871
  %1249 = vmatpush.bf16.msra.mxu0 %v867
  %1250 = vmatpush.bf16.msra.mxu0 %v863
  %1251 = vmatmul.bf16.gmra.mxu0 %v1242
  %v1252 = vpop.f32.mrf.mxu0
  %v1253 = vadd.f32 0.0, %v1252
  %v1254 = vpop.f32.mrf.mxu0
  %1255 = vdwg.mxu0
  %1256 = vmatpush.bf16.msra.mxu0 %v892
  %1257 = vmatpush.bf16.msra.mxu0 %v888
  %1258 = vmatpush.bf16.msra.mxu0 %v884
  %1259 = vmatpush.bf16.msra.mxu0 %v880
  %1260 = vmatpush.bf16.msra.mxu0 %v876
  %1261 = vmatpush.bf16.msra.mxu0 %v872
  %1262 = vmatpush.bf16.msra.mxu0 %v868
  %1263 = vmatpush.bf16.msra.mxu0 %v864
  %1264 = vmatmul.bf16.gmra.mxu0 %v1242
  %v1265 = vpop.f32.mrf.mxu0
  %v1266 = vadd.f32 0.0, %v1265
  %v1267 = vpop.f32.mrf.mxu0
  %1268 = vdwg.mxu0
  %1269 = vmatpush.bf16.msra.mxu0 %v893
  %1270 = vmatpush.bf16.msra.mxu0 %v889
  %1271 = vmatpush.bf16.msra.mxu0 %v885
  %1272 = vmatpush.bf16.msra.mxu0 %v881
  %1273 = vmatpush.bf16.msra.mxu0 %v877
  %1274 = vmatpush.bf16.msra.mxu0 %v873
  %1275 = vmatpush.bf16.msra.mxu0 %v869
  %1276 = vmatpush.bf16.msra.mxu0 %v865
  %1277 = vmatmul.bf16.gmra.mxu0 %v1242
  %v1278 = vpop.f32.mrf.mxu0
  %v1279 = vadd.f32 0.0, %v1278
  %v1280 = vpop.f32.mrf.mxu0
  %1281 = vdwg.mxu0
  %1282 = vmatpush.bf16.msra.mxu0 %v894
  %1283 = vmatpush.bf16.msra.mxu0 %v890
  %1284 = vmatpush.bf16.msra.mxu0 %v886
  %1285 = vmatpush.bf16.msra.mxu0 %v882
  %1286 = vmatpush.bf16.msra.mxu0 %v878
  %1287 = vmatpush.bf16.msra.mxu0 %v874
  %1288 = vmatpush.bf16.msra.mxu0 %v870
  %1289 = vmatpush.bf16.msra.mxu0 %v866
  %1290 = vmatmul.bf16.gmra.mxu0 %v1242
  %v1291 = vpop.f32.mrf.mxu0
  %v1292 = vadd.f32 0.0, %v1291
  %v1293 = vpop.f32.mrf.mxu0
  %1294 = vdwg.mxu0
  %v1295 = vadd.f32 %v1238, %v1253
  %v1296 = vadd.f32 %v1239, %v1266
  %v1297 = vadd.f32 %v1240, %v1279
  %v1298 = vadd.f32 %v1241, %v1292
  %v1299 = vmul.f32 %v1295, 0.5
  %v1300 = vtanh.pop %v1299
  %v1301 = vmul.f32 %v1300, 0.5
  %v1302 = vadd.f32 %v1301, 0.5
  %v1303 = vmul.f32 %v1296, 0.5
  %v1304 = vtanh.pop %v1303
  %v1305 = vmul.f32 %v1304, 0.5
  %v1306 = vadd.f32 %v1305, 0.5
  %v1307 = vtanh.pop %v1297
  %v1308 = vmul.f32 %v1298, 0.5
  %v1309 = vtanh.pop %v1308
  %v1310 = vmul.f32 %v1309, 0.5
  %v1311 = vadd.f32 %v1310, 0.5
  %v1312 = vmul.f32 %v1306, %v1235
  %v1313 = vmul.f32 %v1302, %v1307
  %v1314 = vadd.f32 %v1312, %v1313
  %v1315 = vtanh.pop %v1314
  %v1316 = vmul.f32 %v1311, %v1315
  %v1317 = vld [vmem:[#allocation2 + $0xa0] sm:$0xff]
  %v1318 = vld [vmem:[#allocation2 + $0xa8] sm:$0xff]
  %v1319 = vld [vmem:[#allocation2 + $0xb0] sm:$0xff]
  %v1320 = vld [vmem:[#allocation2 + $0xb8] sm:$0xff]
  %v1321 = vpack.c.bf16 %v1316, %v1316
  %1322 = vmatpush.bf16.msra.mxu0 %v891
  %1323 = vmatpush.bf16.msra.mxu0 %v887
  %1324 = vmatpush.bf16.msra.mxu0 %v883
  %1325 = vmatpush.bf16.msra.mxu0 %v879
  %1326 = vmatpush.bf16.msra.mxu0 %v875
  %1327 = vmatpush.bf16.msra.mxu0 %v871
  %1328 = vmatpush.bf16.msra.mxu0 %v867
  %1329 = vmatpush.bf16.msra.mxu0 %v863
  %1330 = vmatmul.bf16.gmra.mxu0 %v1321
  %v1331 = vpop.f32.mrf.mxu0
  %v1332 = vadd.f32 0.0, %v1331
  %v1333 = vpop.f32.mrf.mxu0
  %1334 = vdwg.mxu0
  %1335 = vmatpush.bf16.msra.mxu0 %v892
  %1336 = vmatpush.bf16.msra.mxu0 %v888
  %1337 = vmatpush.bf16.msra.mxu0 %v884
  %1338 = vmatpush.bf16.msra.mxu0 %v880
  %1339 = vmatpush.bf16.msra.mxu0 %v876
  %1340 = vmatpush.bf16.msra.mxu0 %v872
  %1341 = vmatpush.bf16.msra.mxu0 %v868
  %1342 = vmatpush.bf16.msra.mxu0 %v864
  %1343 = vmatmul.bf16.gmra.mxu0 %v1321
  %v1344 = vpop.f32.mrf.mxu0
  %v1345 = vadd.f32 0.0, %v1344
  %v1346 = vpop.f32.mrf.mxu0
  %1347 = vdwg.mxu0
  %1348 = vmatpush.bf16.msra.mxu0 %v893
  %1349 = vmatpush.bf16.msra.mxu0 %v889
  %1350 = vmatpush.bf16.msra.mxu0 %v885
  %1351 = vmatpush.bf16.msra.mxu0 %v881
  %1352 = vmatpush.bf16.msra.mxu0 %v877
  %1353 = vmatpush.bf16.msra.mxu0 %v873
  %1354 = vmatpush.bf16.msra.mxu0 %v869
  %1355 = vmatpush.bf16.msra.mxu0 %v865
  %1356 = vmatmul.bf16.gmra.mxu0 %v1321
  %v1357 = vpop.f32.mrf.mxu0
  %v1358 = vadd.f32 0.0, %v1357
  %v1359 = vpop.f32.mrf.mxu0
  %1360 = vdwg.mxu0
  %1361 = vmatpush.bf16.msra.mxu0 %v894
  %1362 = vmatpush.bf16.msra.mxu0 %v890
  %1363 = vmatpush.bf16.msra.mxu0 %v886
  %1364 = vmatpush.bf16.msra.mxu0 %v882
  %1365 = vmatpush.bf16.msra.mxu0 %v878
  %1366 = vmatpush.bf16.msra.mxu0 %v874
  %1367 = vmatpush.bf16.msra.mxu0 %v870
  %1368 = vmatpush.bf16.msra.mxu0 %v866
  %1369 = vmatmul.bf16.gmra.mxu0 %v1321
  %v1370 = vpop.f32.mrf.mxu0
  %v1371 = vadd.f32 0.0, %v1370
  %v1372 = vpop.f32.mrf.mxu0
  %1373 = vdwg.mxu0
  %v1374 = vadd.f32 %v1317, %v1332
  %v1375 = vadd.f32 %v1318, %v1345
  %v1376 = vadd.f32 %v1319, %v1358
  %v1377 = vadd.f32 %v1320, %v1371
  %v1378 = vmul.f32 %v1374, 0.5
  %v1379 = vtanh.pop %v1378
  %v1380 = vmul.f32 %v1379, 0.5
  %v1381 = vadd.f32 %v1380, 0.5
  %v1382 = vmul.f32 %v1375, 0.5
  %v1383 = vtanh.pop %v1382
  %v1384 = vmul.f32 %v1383, 0.5
  %v1385 = vadd.f32 %v1384, 0.5
  %v1386 = vtanh.pop %v1376
  %v1387 = vmul.f32 %v1377, 0.5
  %v1388 = vtanh.pop %v1387
  %v1389 = vmul.f32 %v1388, 0.5
  %v1390 = vadd.f32 %v1389, 0.5
  %v1391 = vmul.f32 %v1385, %v1314
  %v1392 = vmul.f32 %v1381, %v1386
  %v1393 = vadd.f32 %v1391, %v1392
  %v1394 = vtanh.pop %v1393
  %v1395 = vmul.f32 %v1390, %v1394
  %v1396 = vld [vmem:[#allocation2 + $0xc0] sm:$0xff]
  %v1397 = vld [vmem:[#allocation2 + $0xc8] sm:$0xff]
  %v1398 = vld [vmem:[#allocation2 + $0xd0] sm:$0xff]
  %v1399 = vld [vmem:[#allocation2 + $0xd8] sm:$0xff]
  %v1400 = vpack.c.bf16 %v1395, %v1395
  %1401 = vmatpush.bf16.msra.mxu0 %v891
  %1402 = vmatpush.bf16.msra.mxu0 %v887
  %1403 = vmatpush.bf16.msra.mxu0 %v883
  %1404 = vmatpush.bf16.msra.mxu0 %v879
  %1405 = vmatpush.bf16.msra.mxu0 %v875
  %1406 = vmatpush.bf16.msra.mxu0 %v871
  %1407 = vmatpush.bf16.msra.mxu0 %v867
  %1408 = vmatpush.bf16.msra.mxu0 %v863
  %1409 = vmatmul.bf16.gmra.mxu0 %v1400
  %v1410 = vpop.f32.mrf.mxu0
  %v1411 = vadd.f32 0.0, %v1410
  %v1412 = vpop.f32.mrf.mxu0
  %1413 = vdwg.mxu0
  %1414 = vmatpush.bf16.msra.mxu0 %v892
  %1415 = vmatpush.bf16.msra.mxu0 %v888
  %1416 = vmatpush.bf16.msra.mxu0 %v884
  %1417 = vmatpush.bf16.msra.mxu0 %v880
  %1418 = vmatpush.bf16.msra.mxu0 %v876
  %1419 = vmatpush.bf16.msra.mxu0 %v872
  %1420 = vmatpush.bf16.msra.mxu0 %v868
  %1421 = vmatpush.bf16.msra.mxu0 %v864
  %1422 = vmatmul.bf16.gmra.mxu0 %v1400
  %v1423 = vpop.f32.mrf.mxu0
  %v1424 = vadd.f32 0.0, %v1423
  %v1425 = vpop.f32.mrf.mxu0
  %1426 = vdwg.mxu0
  %1427 = vmatpush.bf16.msra.mxu0 %v893
  %1428 = vmatpush.bf16.msra.mxu0 %v889
  %1429 = vmatpush.bf16.msra.mxu0 %v885
  %1430 = vmatpush.bf16.msra.mxu0 %v881
  %1431 = vmatpush.bf16.msra.mxu0 %v877
  %1432 = vmatpush.bf16.msra.mxu0 %v873
  %1433 = vmatpush.bf16.msra.mxu0 %v869
  %1434 = vmatpush.bf16.msra.mxu0 %v865
  %1435 = vmatmul.bf16.gmra.mxu0 %v1400
  %v1436 = vpop.f32.mrf.mxu0
  %v1437 = vadd.f32 0.0, %v1436
  %v1438 = vpop.f32.mrf.mxu0
  %1439 = vdwg.mxu0
  %1440 = vmatpush.bf16.msra.mxu0 %v894
  %1441 = vmatpush.bf16.msra.mxu0 %v890
  %1442 = vmatpush.bf16.msra.mxu0 %v886
  %1443 = vmatpush.bf16.msra.mxu0 %v882
  %1444 = vmatpush.bf16.msra.mxu0 %v878
  %1445 = vmatpush.bf16.msra.mxu0 %v874
  %1446 = vmatpush.bf16.msra.mxu0 %v870
  %1447 = vmatpush.bf16.msra.mxu0 %v866
  %1448 = vmatmul.bf16.gmra.mxu0 %v1400
  %v1449 = vpop.f32.mrf.mxu0
  %v1450 = vadd.f32 0.0, %v1449
  %v1451 = vpop.f32.mrf.mxu0
  %1452 = vdwg.mxu0
  %v1453 = vadd.f32 %v1396, %v1411
  %v1454 = vadd.f32 %v1397, %v1424
  %v1455 = vadd.f32 %v1398, %v1437
  %v1456 = vadd.f32 %v1399, %v1450
  %v1457 = vmul.f32 %v1453, 0.5
  %v1458 = vtanh.pop %v1457
  %v1459 = vmul.f32 %v1458, 0.5
  %v1460 = vadd.f32 %v1459, 0.5
  %v1461 = vmul.f32 %v1454, 0.5
  %v1462 = vtanh.pop %v1461
  %v1463 = vmul.f32 %v1462, 0.5
  %v1464 = vadd.f32 %v1463, 0.5
  %v1465 = vtanh.pop %v1455
  %v1466 = vmul.f32 %v1456, 0.5
  %v1467 = vtanh.pop %v1466
  %v1468 = vmul.f32 %v1467, 0.5
  %v1469 = vadd.f32 %v1468, 0.5
  %v1470 = vmul.f32 %v1464, %v1393
  %v1471 = vmul.f32 %v1460, %v1465
  %v1472 = vadd.f32 %v1470, %v1471
  %v1473 = vtanh.pop %v1472
  %v1474 = vmul.f32 %v1469, %v1473
  %v1475 = vld [vmem:[#allocation2 + $0xe0] sm:$0xff]
  %v1476 = vld [vmem:[#allocation2 + $0xe8] sm:$0xff]
  %v1477 = vld [vmem:[#allocation2 + $0xf0] sm:$0xff]
  %v1478 = vld [vmem:[#allocation2 + $0xf8] sm:$0xff]
  %v1479 = vpack.c.bf16 %v1474, %v1474
  %1480 = vmatpush.bf16.msra.mxu0 %v891
  %1481 = vmatpush.bf16.msra.mxu0 %v887
  %1482 = vmatpush.bf16.msra.mxu0 %v883
  %1483 = vmatpush.bf16.msra.mxu0 %v879
  %1484 = vmatpush.bf16.msra.mxu0 %v875
  %1485 = vmatpush.bf16.msra.mxu0 %v871
  %1486 = vmatpush.bf16.msra.mxu0 %v867
  %1487 = vmatpush.bf16.msra.mxu0 %v863
  %1488 = vmatmul.bf16.gmra.mxu0 %v1479
  %v1489 = vpop.f32.mrf.mxu0
  %v1490 = vadd.f32 0.0, %v1489
  %v1491 = vpop.f32.mrf.mxu0
  %1492 = vdwg.mxu0
  %1493 = vmatpush.bf16.msra.mxu0 %v892
  %1494 = vmatpush.bf16.msra.mxu0 %v888
  %1495 = vmatpush.bf16.msra.mxu0 %v884
  %1496 = vmatpush.bf16.msra.mxu0 %v880
  %1497 = vmatpush.bf16.msra.mxu0 %v876
  %1498 = vmatpush.bf16.msra.mxu0 %v872
  %1499 = vmatpush.bf16.msra.mxu0 %v868
  %1500 = vmatpush.bf16.msra.mxu0 %v864
  %1501 = vmatmul.bf16.gmra.mxu0 %v1479
  %v1502 = vpop.f32.mrf.mxu0
  %v1503 = vadd.f32 0.0, %v1502
  %v1504 = vpop.f32.mrf.mxu0
  %1505 = vdwg.mxu0
  %1506 = vmatpush.bf16.msra.mxu0 %v893
  %1507 = vmatpush.bf16.msra.mxu0 %v889
  %1508 = vmatpush.bf16.msra.mxu0 %v885
  %1509 = vmatpush.bf16.msra.mxu0 %v881
  %1510 = vmatpush.bf16.msra.mxu0 %v877
  %1511 = vmatpush.bf16.msra.mxu0 %v873
  %1512 = vmatpush.bf16.msra.mxu0 %v869
  %1513 = vmatpush.bf16.msra.mxu0 %v865
  %1514 = vmatmul.bf16.gmra.mxu0 %v1479
  %v1515 = vpop.f32.mrf.mxu0
  %v1516 = vadd.f32 0.0, %v1515
  %v1517 = vpop.f32.mrf.mxu0
  %1518 = vdwg.mxu0
  %1519 = vmatpush.bf16.msra.mxu0 %v894
  %1520 = vmatpush.bf16.msra.mxu0 %v890
  %1521 = vmatpush.bf16.msra.mxu0 %v886
  %1522 = vmatpush.bf16.msra.mxu0 %v882
  %1523 = vmatpush.bf16.msra.mxu0 %v878
  %1524 = vmatpush.bf16.msra.mxu0 %v874
  %1525 = vmatpush.bf16.msra.mxu0 %v870
  %1526 = vmatpush.bf16.msra.mxu0 %v866
  %1527 = vmatmul.bf16.gmra.mxu0 %v1479
  %v1528 = vpop.f32.mrf.mxu0
  %v1529 = vadd.f32 0.0, %v1528
  %v1530 = vpop.f32.mrf.mxu0
  %1531 = vdwg.mxu0
  %v1532 = vadd.f32 %v1475, %v1490
  %v1533 = vadd.f32 %v1476, %v1503
  %v1534 = vadd.f32 %v1477, %v1516
  %v1535 = vadd.f32 %v1478, %v1529
  %v1536 = vmul.f32 %v1532, 0.5
  %v1537 = vtanh.pop %v1536
  %v1538 = vmul.f32 %v1537, 0.5
  %v1539 = vadd.f32 %v1538, 0.5
  %v1540 = vmul.f32 %v1533, 0.5
  %v1541 = vtanh.pop %v1540
  %v1542 = vmul.f32 %v1541, 0.5
  %v1543 = vadd.f32 %v1542, 0.5
  %v1544 = vtanh.pop %v1534
  %v1545 = vmul.f32 %v1535, 0.5
  %v1546 = vtanh.pop %v1545
  %v1547 = vmul.f32 %v1546, 0.5
  %v1548 = vadd.f32 %v1547, 0.5
  %v1549 = vmul.f32 %v1543, %v1472
  %v1550 = vmul.f32 %v1539, %v1544
  %v1551 = vadd.f32 %v1549, %v1550
  %v1552 = vtanh.pop %v1551
  %v1553 = vmul.f32 %v1548, %v1552
  %v1554 = vld [vmem:[#allocation2 + $0x100] sm:$0xff]
  %v1555 = vld [vmem:[#allocation2 + $0x108] sm:$0xff]
  %v1556 = vld [vmem:[#allocation2 + $0x110] sm:$0xff]
  %v1557 = vld [vmem:[#allocation2 + $0x118] sm:$0xff]
  %v1558 = vpack.c.bf16 %v1553, %v1553
  %1559 = vmatpush.bf16.msra.mxu0 %v891
  %1560 = vmatpush.bf16.msra.mxu0 %v887
  %1561 = vmatpush.bf16.msra.mxu0 %v883
  %1562 = vmatpush.bf16.msra.mxu0 %v879
  %1563 = vmatpush.bf16.msra.mxu0 %v875
  %1564 = vmatpush.bf16.msra.mxu0 %v871
  %1565 = vmatpush.bf16.msra.mxu0 %v867
  %1566 = vmatpush.bf16.msra.mxu0 %v863
  %1567 = vmatmul.bf16.gmra.mxu0 %v1558
  %v1568 = vpop.f32.mrf.mxu0
  %v1569 = vadd.f32 0.0, %v1568
  %v1570 = vpop.f32.mrf.mxu0
  %1571 = vdwg.mxu0
  %1572 = vmatpush.bf16.msra.mxu0 %v892
  %1573 = vmatpush.bf16.msra.mxu0 %v888
  %1574 = vmatpush.bf16.msra.mxu0 %v884
  %1575 = vmatpush.bf16.msra.mxu0 %v880
  %1576 = vmatpush.bf16.msra.mxu0 %v876
  %1577 = vmatpush.bf16.msra.mxu0 %v872
  %1578 = vmatpush.bf16.msra.mxu0 %v868
  %1579 = vmatpush.bf16.msra.mxu0 %v864
  %1580 = vmatmul.bf16.gmra.mxu0 %v1558
  %v1581 = vpop.f32.mrf.mxu0
  %v1582 = vadd.f32 0.0, %v1581
  %v1583 = vpop.f32.mrf.mxu0
  %1584 = vdwg.mxu0
  %1585 = vmatpush.bf16.msra.mxu0 %v893
  %1586 = vmatpush.bf16.msra.mxu0 %v889
  %1587 = vmatpush.bf16.msra.mxu0 %v885
  %1588 = vmatpush.bf16.msra.mxu0 %v881
  %1589 = vmatpush.bf16.msra.mxu0 %v877
  %1590 = vmatpush.bf16.msra.mxu0 %v873
  %1591 = vmatpush.bf16.msra.mxu0 %v869
  %1592 = vmatpush.bf16.msra.mxu0 %v865
  %1593 = vmatmul.bf16.gmra.mxu0 %v1558
  %v1594 = vpop.f32.mrf.mxu0
  %v1595 = vadd.f32 0.0, %v1594
  %v1596 = vpop.f32.mrf.mxu0
  %1597 = vdwg.mxu0
  %1598 = vmatpush.bf16.msra.mxu0 %v894
  %1599 = vmatpush.bf16.msra.mxu0 %v890
  %1600 = vmatpush.bf16.msra.mxu0 %v886
  %1601 = vmatpush.bf16.msra.mxu0 %v882
  %1602 = vmatpush.bf16.msra.mxu0 %v878
  %1603 = vmatpush.bf16.msra.mxu0 %v874
  %1604 = vmatpush.bf16.msra.mxu0 %v870
  %1605 = vmatpush.bf16.msra.mxu0 %v866
  %1606 = vmatmul.bf16.gmra.mxu0 %v1558
  %v1607 = vpop.f32.mrf.mxu0
  %v1608 = vadd.f32 0.0, %v1607
  %v1609 = vpop.f32.mrf.mxu0
  %1610 = vdwg.mxu0
  %v1611 = vadd.f32 %v1554, %v1569
  %v1612 = vadd.f32 %v1555, %v1582
  %v1613 = vadd.f32 %v1556, %v1595
  %v1614 = vadd.f32 %v1557, %v1608
  %v1615 = vmul.f32 %v1611, 0.5
  %v1616 = vtanh.pop %v1615
  %v1617 = vmul.f32 %v1616, 0.5
  %v1618 = vadd.f32 %v1617, 0.5
  %v1619 = vmul.f32 %v1612, 0.5
  %v1620 = vtanh.pop %v1619
  %v1621 = vmul.f32 %v1620, 0.5
  %v1622 = vadd.f32 %v1621, 0.5
  %v1623 = vtanh.pop %v1613
  %v1624 = vmul.f32 %v1614, 0.5
  %v1625 = vtanh.pop %v1624
  %v1626 = vmul.f32 %v1625, 0.5
  %v1627 = vadd.f32 %v1626, 0.5
  %v1628 = vmul.f32 %v1622, %v1551
  %v1629 = vmul.f32 %v1618, %v1623
  %v1630 = vadd.f32 %v1628, %v1629
  %v1631 = vtanh.pop %v1630
  %v1632 = vmul.f32 %v1627, %v1631
  %v1633 = vld [vmem:[#allocation2 + $0x120] sm:$0xff]
  %v1634 = vld [vmem:[#allocation2 + $0x128] sm:$0xff]
  %v1635 = vld [vmem:[#allocation2 + $0x130] sm:$0xff]
  %v1636 = vld [vmem:[#allocation2 + $0x138] sm:$0xff]
  %v1637 = vpack.c.bf16 %v1632, %v1632
  %1638 = vmatpush.bf16.msra.mxu0 %v891
  %1639 = vmatpush.bf16.msra.mxu0 %v887
  %1640 = vmatpush.bf16.msra.mxu0 %v883
  %1641 = vmatpush.bf16.msra.mxu0 %v879
  %1642 = vmatpush.bf16.msra.mxu0 %v875
  %1643 = vmatpush.bf16.msra.mxu0 %v871
  %1644 = vmatpush.bf16.msra.mxu0 %v867
  %1645 = vmatpush.bf16.msra.mxu0 %v863
  %1646 = vmatmul.bf16.gmra.mxu0 %v1637
  %v1647 = vpop.f32.mrf.mxu0
  %v1648 = vadd.f32 0.0, %v1647
  %v1649 = vpop.f32.mrf.mxu0
  %1650 = vdwg.mxu0
  %1651 = vmatpush.bf16.msra.mxu0 %v892
  %1652 = vmatpush.bf16.msra.mxu0 %v888
  %1653 = vmatpush.bf16.msra.mxu0 %v884
  %1654 = vmatpush.bf16.msra.mxu0 %v880
  %1655 = vmatpush.bf16.msra.mxu0 %v876
  %1656 = vmatpush.bf16.msra.mxu0 %v872
  %1657 = vmatpush.bf16.msra.mxu0 %v868
  %1658 = vmatpush.bf16.msra.mxu0 %v864
  %1659 = vmatmul.bf16.gmra.mxu0 %v1637
  %v1660 = vpop.f32.mrf.mxu0
  %v1661 = vadd.f32 0.0, %v1660
  %v1662 = vpop.f32.mrf.mxu0
  %1663 = vdwg.mxu0
  %1664 = vmatpush.bf16.msra.mxu0 %v893
  %1665 = vmatpush.bf16.msra.mxu0 %v889
  %1666 = vmatpush.bf16.msra.mxu0 %v885
  %1667 = vmatpush.bf16.msra.mxu0 %v881
  %1668 = vmatpush.bf16.msra.mxu0 %v877
  %1669 = vmatpush.bf16.msra.mxu0 %v873
  %1670 = vmatpush.bf16.msra.mxu0 %v869
  %1671 = vmatpush.bf16.msra.mxu0 %v865
  %1672 = vmatmul.bf16.gmra.mxu0 %v1637
  %v1673 = vpop.f32.mrf.mxu0
  %v1674 = vadd.f32 0.0, %v1673
  %v1675 = vpop.f32.mrf.mxu0
  %1676 = vdwg.mxu0
  %1677 = vmatpush.bf16.msra.mxu0 %v894
  %1678 = vmatpush.bf16.msra.mxu0 %v890
  %1679 = vmatpush.bf16.msra.mxu0 %v886
  %1680 = vmatpush.bf16.msra.mxu0 %v882
  %1681 = vmatpush.bf16.msra.mxu0 %v878
  %1682 = vmatpush.bf16.msra.mxu0 %v874
  %1683 = vmatpush.bf16.msra.mxu0 %v870
  %1684 = vmatpush.bf16.msra.mxu0 %v866
  %1685 = vmatmul.bf16.gmra.mxu0 %v1637
  %v1686 = vpop.f32.mrf.mxu0
  %v1687 = vadd.f32 0.0, %v1686
  %v1688 = vpop.f32.mrf.mxu0
  %1689 = vdwg.mxu0
  %v1690 = vadd.f32 %v1633, %v1648
  %v1691 = vadd.f32 %v1634, %v1661
  %v1692 = vadd.f32 %v1635, %v1674
  %v1693 = vadd.f32 %v1636, %v1687
  %v1694 = vmul.f32 %v1690, 0.5
  %v1695 = vtanh.pop %v1694
  %v1696 = vmul.f32 %v1695, 0.5
  %v1697 = vadd.f32 %v1696, 0.5
  %v1698 = vmul.f32 %v1691, 0.5
  %v1699 = vtanh.pop %v1698
  %v1700 = vmul.f32 %v1699, 0.5
  %v1701 = vadd.f32 %v1700, 0.5
  %v1702 = vtanh.pop %v1692
  %v1703 = vmul.f32 %v1693, 0.5
  %v1704 = vtanh.pop %v1703
  %v1705 = vmul.f32 %v1704, 0.5
  %v1706 = vadd.f32 %v1705, 0.5
  %v1707 = vmul.f32 %v1701, %v1630
  %v1708 = vmul.f32 %v1697, %v1702
  %v1709 = vadd.f32 %v1707, %v1708
  %v1710 = vtanh.pop %v1709
  %v1711 = vmul.f32 %v1706, %v1710
  %v1712 = vld [vmem:[#allocation2 + $0x140] sm:$0xff]
  %v1713 = vld [vmem:[#allocation2 + $0x148] sm:$0xff]
  %v1714 = vld [vmem:[#allocation2 + $0x150] sm:$0xff]
  %v1715 = vld [vmem:[#allocation2 + $0x158] sm:$0xff]
  %v1716 = vpack.c.bf16 %v1711, %v1711
  %1717 = vmatpush.bf16.msra.mxu0 %v891
  %1718 = vmatpush.bf16.msra.mxu0 %v887
  %1719 = vmatpush.bf16.msra.mxu0 %v883
  %1720 = vmatpush.bf16.msra.mxu0 %v879
  %1721 = vmatpush.bf16.msra.mxu0 %v875
  %1722 = vmatpush.bf16.msra.mxu0 %v871
  %1723 = vmatpush.bf16.msra.mxu0 %v867
  %1724 = vmatpush.bf16.msra.mxu0 %v863
  %1725 = vmatmul.bf16.gmra.mxu0 %v1716
  %v1726 = vpop.f32.mrf.mxu0
  %v1727 = vadd.f32 0.0, %v1726
  %v1728 = vpop.f32.mrf.mxu0
  %1729 = vdwg.mxu0
  %1730 = vmatpush.bf16.msra.mxu0 %v892
  %1731 = vmatpush.bf16.msra.mxu0 %v888
  %1732 = vmatpush.bf16.msra.mxu0 %v884
  %1733 = vmatpush.bf16.msra.mxu0 %v880
  %1734 = vmatpush.bf16.msra.mxu0 %v876
  %1735 = vmatpush.bf16.msra.mxu0 %v872
  %1736 = vmatpush.bf16.msra.mxu0 %v868
  %1737 = vmatpush.bf16.msra.mxu0 %v864
  %1738 = vmatmul.bf16.gmra.mxu0 %v1716
  %v1739 = vpop.f32.mrf.mxu0
  %v1740 = vadd.f32 0.0, %v1739
  %v1741 = vpop.f32.mrf.mxu0
  %1742 = vdwg.mxu0
  %1743 = vmatpush.bf16.msra.mxu0 %v893
  %1744 = vmatpush.bf16.msra.mxu0 %v889
  %1745 = vmatpush.bf16.msra.mxu0 %v885
  %1746 = vmatpush.bf16.msra.mxu0 %v881
  %1747 = vmatpush.bf16.msra.mxu0 %v877
  %1748 = vmatpush.bf16.msra.mxu0 %v873
  %1749 = vmatpush.bf16.msra.mxu0 %v869
  %1750 = vmatpush.bf16.msra.mxu0 %v865
  %1751 = vmatmul.bf16.gmra.mxu0 %v1716
  %v1752 = vpop.f32.mrf.mxu0
  %v1753 = vadd.f32 0.0, %v1752
  %v1754 = vpop.f32.mrf.mxu0
  %1755 = vdwg.mxu0
  %1756 = vmatpush.bf16.msra.mxu0 %v894
  %1757 = vmatpush.bf16.msra.mxu0 %v890
  %1758 = vmatpush.bf16.msra.mxu0 %v886
  %1759 = vmatpush.bf16.msra.mxu0 %v882
  %1760 = vmatpush.bf16.msra.mxu0 %v878
  %1761 = vmatpush.bf16.msra.mxu0 %v874
  %1762 = vmatpush.bf16.msra.mxu0 %v870
  %1763 = vmatpush.bf16.msra.mxu0 %v866
  %1764 = vmatmul.bf16.gmra.mxu0 %v1716
  %v1765 = vpop.f32.mrf.mxu0
  %v1766 = vadd.f32 0.0, %v1765
  %v1767 = vpop.f32.mrf.mxu0
  %1768 = vdwg.mxu0
  %v1769 = vadd.f32 %v1712, %v1727
  %v1770 = vadd.f32 %v1713, %v1740
  %v1771 = vadd.f32 %v1714, %v1753
  %v1772 = vadd.f32 %v1715, %v1766
  %v1773 = vmul.f32 %v1769, 0.5
  %v1774 = vtanh.pop %v1773
  %v1775 = vmul.f32 %v1774, 0.5
  %v1776 = vadd.f32 %v1775, 0.5
  %v1777 = vmul.f32 %v1770, 0.5
  %v1778 = vtanh.pop %v1777
  %v1779 = vmul.f32 %v1778, 0.5
  %v1780 = vadd.f32 %v1779, 0.5
  %v1781 = vtanh.pop %v1771
  %v1782 = vmul.f32 %v1772, 0.5
  %v1783 = vtanh.pop %v1782
  %v1784 = vmul.f32 %v1783, 0.5
  %v1785 = vadd.f32 %v1784, 0.5
  %v1786 = vmul.f32 %v1780, %v1709
  %v1787 = vmul.f32 %v1776, %v1781
  %v1788 = vadd.f32 %v1786, %v1787
  %v1789 = vtanh.pop %v1788
  %v1790 = vmul.f32 %v1785, %v1789
  %v1791 = vld [vmem:[#allocation2 + $0x160] sm:$0xff]
  %v1792 = vld [vmem:[#allocation2 + $0x168] sm:$0xff]
  %v1793 = vld [vmem:[#allocation2 + $0x170] sm:$0xff]
  %v1794 = vld [vmem:[#allocation2 + $0x178] sm:$0xff]
  %v1795 = vpack.c.bf16 %v1790, %v1790
  %1796 = vmatpush.bf16.msra.mxu0 %v891
  %1797 = vmatpush.bf16.msra.mxu0 %v887
  %1798 = vmatpush.bf16.msra.mxu0 %v883
  %1799 = vmatpush.bf16.msra.mxu0 %v879
  %1800 = vmatpush.bf16.msra.mxu0 %v875
  %1801 = vmatpush.bf16.msra.mxu0 %v871
  %1802 = vmatpush.bf16.msra.mxu0 %v867
  %1803 = vmatpush.bf16.msra.mxu0 %v863
  %1804 = vmatmul.bf16.gmra.mxu0 %v1795
  %v1805 = vpop.f32.mrf.mxu0
  %v1806 = vadd.f32 0.0, %v1805
  %v1807 = vpop.f32.mrf.mxu0
  %1808 = vdwg.mxu0
  %1809 = vmatpush.bf16.msra.mxu0 %v892
  %1810 = vmatpush.bf16.msra.mxu0 %v888
  %1811 = vmatpush.bf16.msra.mxu0 %v884
  %1812 = vmatpush.bf16.msra.mxu0 %v880
  %1813 = vmatpush.bf16.msra.mxu0 %v876
  %1814 = vmatpush.bf16.msra.mxu0 %v872
  %1815 = vmatpush.bf16.msra.mxu0 %v868
  %1816 = vmatpush.bf16.msra.mxu0 %v864
  %1817 = vmatmul.bf16.gmra.mxu0 %v1795
  %v1818 = vpop.f32.mrf.mxu0
  %v1819 = vadd.f32 0.0, %v1818
  %v1820 = vpop.f32.mrf.mxu0
  %1821 = vdwg.mxu0
  %1822 = vmatpush.bf16.msra.mxu0 %v893
  %1823 = vmatpush.bf16.msra.mxu0 %v889
  %1824 = vmatpush.bf16.msra.mxu0 %v885
  %1825 = vmatpush.bf16.msra.mxu0 %v881
  %1826 = vmatpush.bf16.msra.mxu0 %v877
  %1827 = vmatpush.bf16.msra.mxu0 %v873
  %1828 = vmatpush.bf16.msra.mxu0 %v869
  %1829 = vmatpush.bf16.msra.mxu0 %v865
  %1830 = vmatmul.bf16.gmra.mxu0 %v1795
  %v1831 = vpop.f32.mrf.mxu0
  %v1832 = vadd.f32 0.0, %v1831
  %v1833 = vpop.f32.mrf.mxu0
  %1834 = vdwg.mxu0
  %1835 = vmatpush.bf16.msra.mxu0 %v894
  %1836 = vmatpush.bf16.msra.mxu0 %v890
  %1837 = vmatpush.bf16.msra.mxu0 %v886
  %1838 = vmatpush.bf16.msra.mxu0 %v882
  %1839 = vmatpush.bf16.msra.mxu0 %v878
  %1840 = vmatpush.bf16.msra.mxu0 %v874
  %1841 = vmatpush.bf16.msra.mxu0 %v870
  %1842 = vmatpush.bf16.msra.mxu0 %v866
  %1843 = vmatmul.bf16.gmra.mxu0 %v1795
  %v1844 = vpop.f32.mrf.mxu0
  %v1845 = vadd.f32 0.0, %v1844
  %v1846 = vpop.f32.mrf.mxu0
  %1847 = vdwg.mxu0
  %v1848 = vadd.f32 %v1791, %v1806
  %v1849 = vadd.f32 %v1792, %v1819
  %v1850 = vadd.f32 %v1793, %v1832
  %v1851 = vadd.f32 %v1794, %v1845
  %v1852 = vmul.f32 %v1848, 0.5
  %v1853 = vtanh.pop %v1852
  %v1854 = vmul.f32 %v1853, 0.5
  %v1855 = vadd.f32 %v1854, 0.5
  %v1856 = vmul.f32 %v1849, 0.5
  %v1857 = vtanh.pop %v1856
  %v1858 = vmul.f32 %v1857, 0.5
  %v1859 = vadd.f32 %v1858, 0.5
  %v1860 = vtanh.pop %v1850
  %v1861 = vmul.f32 %v1851, 0.5
  %v1862 = vtanh.pop %v1861
  %v1863 = vmul.f32 %v1862, 0.5
  %v1864 = vadd.f32 %v1863, 0.5
  %v1865 = vmul.f32 %v1859, %v1788
  %v1866 = vmul.f32 %v1855, %v1860
  %v1867 = vadd.f32 %v1865, %v1866
  %v1868 = vtanh.pop %v1867
  %v1869 = vmul.f32 %v1864, %v1868
  %v1870 = vld [vmem:[#allocation2 + $0x180] sm:$0xff]
  %v1871 = vld [vmem:[#allocation2 + $0x188] sm:$0xff]
  %v1872 = vld [vmem:[#allocation2 + $0x190] sm:$0xff]
  %v1873 = vld [vmem:[#allocation2 + $0x198] sm:$0xff]
  %v1874 = vpack.c.bf16 %v1869, %v1869
  %1875 = vmatpush.bf16.msra.mxu0 %v891
  %1876 = vmatpush.bf16.msra.mxu0 %v887
  %1877 = vmatpush.bf16.msra.mxu0 %v883
  %1878 = vmatpush.bf16.msra.mxu0 %v879
  %1879 = vmatpush.bf16.msra.mxu0 %v875
  %1880 = vmatpush.bf16.msra.mxu0 %v871
  %1881 = vmatpush.bf16.msra.mxu0 %v867
  %1882 = vmatpush.bf16.msra.mxu0 %v863
  %1883 = vmatmul.bf16.gmra.mxu0 %v1874
  %v1884 = vpop.f32.mrf.mxu0
  %v1885 = vadd.f32 0.0, %v1884
  %v1886 = vpop.f32.mrf.mxu0
  %1887 = vdwg.mxu0
  %1888 = vmatpush.bf16.msra.mxu0 %v892
  %1889 = vmatpush.bf16.msra.mxu0 %v888
  %1890 = vmatpush.bf16.msra.mxu0 %v884
  %1891 = vmatpush.bf16.msra.mxu0 %v880
  %1892 = vmatpush.bf16.msra.mxu0 %v876
  %1893 = vmatpush.bf16.msra.mxu0 %v872
  %1894 = vmatpush.bf16.msra.mxu0 %v868
  %1895 = vmatpush.bf16.msra.mxu0 %v864
  %1896 = vmatmul.bf16.gmra.mxu0 %v1874
  %v1897 = vpop.f32.mrf.mxu0
  %v1898 = vadd.f32 0.0, %v1897
  %v1899 = vpop.f32.mrf.mxu0
  %1900 = vdwg.mxu0
  %1901 = vmatpush.bf16.msra.mxu0 %v893
  %1902 = vmatpush.bf16.msra.mxu0 %v889
  %1903 = vmatpush.bf16.msra.mxu0 %v885
  %1904 = vmatpush.bf16.msra.mxu0 %v881
  %1905 = vmatpush.bf16.msra.mxu0 %v877
  %1906 = vmatpush.bf16.msra.mxu0 %v873
  %1907 = vmatpush.bf16.msra.mxu0 %v869
  %1908 = vmatpush.bf16.msra.mxu0 %v865
  %1909 = vmatmul.bf16.gmra.mxu0 %v1874
  %v1910 = vpop.f32.mrf.mxu0
  %v1911 = vadd.f32 0.0, %v1910
  %v1912 = vpop.f32.mrf.mxu0
  %1913 = vdwg.mxu0
  %1914 = vmatpush.bf16.msra.mxu0 %v894
  %1915 = vmatpush.bf16.msra.mxu0 %v890
  %1916 = vmatpush.bf16.msra.mxu0 %v886
  %1917 = vmatpush.bf16.msra.mxu0 %v882
  %1918 = vmatpush.bf16.msra.mxu0 %v878
  %1919 = vmatpush.bf16.msra.mxu0 %v874
  %1920 = vmatpush.bf16.msra.mxu0 %v870
  %1921 = vmatpush.bf16.msra.mxu0 %v866
  %1922 = vmatmul.bf16.gmra.mxu0 %v1874
  %v1923 = vpop.f32.mrf.mxu0
  %v1924 = vadd.f32 0.0, %v1923
  %v1925 = vpop.f32.mrf.mxu0
  %1926 = vdwg.mxu0
  %v1927 = vadd.f32 %v1870, %v1885
  %v1928 = vadd.f32 %v1871, %v1898
  %v1929 = vadd.f32 %v1872, %v1911
  %v1930 = vadd.f32 %v1873, %v1924
  %v1931 = vmul.f32 %v1927, 0.5
  %v1932 = vtanh.pop %v1931
  %v1933 = vmul.f32 %v1932, 0.5
  %v1934 = vadd.f32 %v1933, 0.5
  %v1935 = vmul.f32 %v1928, 0.5
  %v1936 = vtanh.pop %v1935
  %v1937 = vmul.f32 %v1936, 0.5
  %v1938 = vadd.f32 %v1937, 0.5
  %v1939 = vtanh.pop %v1929
  %v1940 = vmul.f32 %v1930, 0.5
  %v1941 = vtanh.pop %v1940
  %v1942 = vmul.f32 %v1941, 0.5
  %v1943 = vadd.f32 %v1942, 0.5
  %v1944 = vmul.f32 %v1938, %v1867
  %v1945 = vmul.f32 %v1934, %v1939
  %v1946 = vadd.f32 %v1944, %v1945
  %v1947 = vtanh.pop %v1946
  %v1948 = vmul.f32 %v1943, %v1947
  %v1949 = vld [vmem:[#allocation2 + $0x1a0] sm:$0xff]
  %v1950 = vld [vmem:[#allocation2 + $0x1a8] sm:$0xff]
  %v1951 = vld [vmem:[#allocation2 + $0x1b0] sm:$0xff]
  %v1952 = vld [vmem:[#allocation2 + $0x1b8] sm:$0xff]
  %v1953 = vpack.c.bf16 %v1948, %v1948
  %1954 = vmatpush.bf16.msra.mxu0 %v891
  %1955 = vmatpush.bf16.msra.mxu0 %v887
  %1956 = vmatpush.bf16.msra.mxu0 %v883
  %1957 = vmatpush.bf16.msra.mxu0 %v879
  %1958 = vmatpush.bf16.msra.mxu0 %v875
  %1959 = vmatpush.bf16.msra.mxu0 %v871
  %1960 = vmatpush.bf16.msra.mxu0 %v867
  %1961 = vmatpush.bf16.msra.mxu0 %v863
  %1962 = vmatmul.bf16.gmra.mxu0 %v1953
  %v1963 = vpop.f32.mrf.mxu0
  %v1964 = vadd.f32 0.0, %v1963
  %v1965 = vpop.f32.mrf.mxu0
  %1966 = vdwg.mxu0
  %1967 = vmatpush.bf16.msra.mxu0 %v892
  %1968 = vmatpush.bf16.msra.mxu0 %v888
  %1969 = vmatpush.bf16.msra.mxu0 %v884
  %1970 = vmatpush.bf16.msra.mxu0 %v880
  %1971 = vmatpush.bf16.msra.mxu0 %v876
  %1972 = vmatpush.bf16.msra.mxu0 %v872
  %1973 = vmatpush.bf16.msra.mxu0 %v868
  %1974 = vmatpush.bf16.msra.mxu0 %v864
  %1975 = vmatmul.bf16.gmra.mxu0 %v1953
  %v1976 = vpop.f32.mrf.mxu0
  %v1977 = vadd.f32 0.0, %v1976
  %v1978 = vpop.f32.mrf.mxu0
  %1979 = vdwg.mxu0
  %1980 = vmatpush.bf16.msra.mxu0 %v893
  %1981 = vmatpush.bf16.msra.mxu0 %v889
  %1982 = vmatpush.bf16.msra.mxu0 %v885
  %1983 = vmatpush.bf16.msra.mxu0 %v881
  %1984 = vmatpush.bf16.msra.mxu0 %v877
  %1985 = vmatpush.bf16.msra.mxu0 %v873
  %1986 = vmatpush.bf16.msra.mxu0 %v869
  %1987 = vmatpush.bf16.msra.mxu0 %v865
  %1988 = vmatmul.bf16.gmra.mxu0 %v1953
  %v1989 = vpop.f32.mrf.mxu0
  %v1990 = vadd.f32 0.0, %v1989
  %v1991 = vpop.f32.mrf.mxu0
  %1992 = vdwg.mxu0
  %1993 = vmatpush.bf16.msra.mxu0 %v894
  %1994 = vmatpush.bf16.msra.mxu0 %v890
  %1995 = vmatpush.bf16.msra.mxu0 %v886
  %1996 = vmatpush.bf16.msra.mxu0 %v882
  %1997 = vmatpush.bf16.msra.mxu0 %v878
  %1998 = vmatpush.bf16.msra.mxu0 %v874
  %1999 = vmatpush.bf16.msra.mxu0 %v870
  %2000 = vmatpush.bf16.msra.mxu0 %v866
  %2001 = vmatmul.bf16.gmra.mxu0 %v1953
  %v2002 = vpop.f32.mrf.mxu0
  %v2003 = vadd.f32 0.0, %v2002
  %v2004 = vpop.f32.mrf.mxu0
  %2005 = vdwg.mxu0
  %v2006 = vadd.f32 %v1949, %v1964
  %v2007 = vadd.f32 %v1950, %v1977
  %v2008 = vadd.f32 %v1951, %v1990
  %v2009 = vadd.f32 %v1952, %v2003
  %v2010 = vmul.f32 %v2006, 0.5
  %v2011 = vtanh.pop %v2010
  %v2012 = vmul.f32 %v2011, 0.5
  %v2013 = vadd.f32 %v2012, 0.5
  %v2014 = vmul.f32 %v2007, 0.5
  %v2015 = vtanh.pop %v2014
  %v2016 = vmul.f32 %v2015, 0.5
  %v2017 = vadd.f32 %v2016, 0.5
  %v2018 = vtanh.pop %v2008
  %v2019 = vmul.f32 %v2009, 0.5
  %v2020 = vtanh.pop %v2019
  %v2021 = vmul.f32 %v2020, 0.5
  %v2022 = vadd.f32 %v2021, 0.5
  %v2023 = vmul.f32 %v2017, %v1946
  %v2024 = vmul.f32 %v2013, %v2018
  %v2025 = vadd.f32 %v2023, %v2024
  %v2026 = vtanh.pop %v2025
  %v2027 = vmul.f32 %v2022, %v2026
  %v2028 = vld [vmem:[#allocation2 + $0x1c0] sm:$0xff]
  %v2029 = vld [vmem:[#allocation2 + $0x1c8] sm:$0xff]
  %v2030 = vld [vmem:[#allocation2 + $0x1d0] sm:$0xff]
  %v2031 = vld [vmem:[#allocation2 + $0x1d8] sm:$0xff]
  %v2032 = vpack.c.bf16 %v2027, %v2027
  %2033 = vmatpush.bf16.msra.mxu0 %v891
  %2034 = vmatpush.bf16.msra.mxu0 %v887
  %2035 = vmatpush.bf16.msra.mxu0 %v883
  %2036 = vmatpush.bf16.msra.mxu0 %v879
  %2037 = vmatpush.bf16.msra.mxu0 %v875
  %2038 = vmatpush.bf16.msra.mxu0 %v871
  %2039 = vmatpush.bf16.msra.mxu0 %v867
  %2040 = vmatpush.bf16.msra.mxu0 %v863
  %2041 = vmatmul.bf16.gmra.mxu0 %v2032
  %v2042 = vpop.f32.mrf.mxu0
  %v2043 = vadd.f32 0.0, %v2042
  %v2044 = vpop.f32.mrf.mxu0
  %2045 = vdwg.mxu0
  %2046 = vmatpush.bf16.msra.mxu0 %v892
  %2047 = vmatpush.bf16.msra.mxu0 %v888
  %2048 = vmatpush.bf16.msra.mxu0 %v884
  %2049 = vmatpush.bf16.msra.mxu0 %v880
  %2050 = vmatpush.bf16.msra.mxu0 %v876
  %2051 = vmatpush.bf16.msra.mxu0 %v872
  %2052 = vmatpush.bf16.msra.mxu0 %v868
  %2053 = vmatpush.bf16.msra.mxu0 %v864
  %2054 = vmatmul.bf16.gmra.mxu0 %v2032
  %v2055 = vpop.f32.mrf.mxu0
  %v2056 = vadd.f32 0.0, %v2055
  %v2057 = vpop.f32.mrf.mxu0
  %2058 = vdwg.mxu0
  %2059 = vmatpush.bf16.msra.mxu0 %v893
  %2060 = vmatpush.bf16.msra.mxu0 %v889
  %2061 = vmatpush.bf16.msra.mxu0 %v885
  %2062 = vmatpush.bf16.msra.mxu0 %v881
  %2063 = vmatpush.bf16.msra.mxu0 %v877
  %2064 = vmatpush.bf16.msra.mxu0 %v873
  %2065 = vmatpush.bf16.msra.mxu0 %v869
  %2066 = vmatpush.bf16.msra.mxu0 %v865
  %2067 = vmatmul.bf16.gmra.mxu0 %v2032
  %v2068 = vpop.f32.mrf.mxu0
  %v2069 = vadd.f32 0.0, %v2068
  %v2070 = vpop.f32.mrf.mxu0
  %2071 = vdwg.mxu0
  %2072 = vmatpush.bf16.msra.mxu0 %v894
  %2073 = vmatpush.bf16.msra.mxu0 %v890
  %2074 = vmatpush.bf16.msra.mxu0 %v886
  %2075 = vmatpush.bf16.msra.mxu0 %v882
  %2076 = vmatpush.bf16.msra.mxu0 %v878
  %2077 = vmatpush.bf16.msra.mxu0 %v874
  %2078 = vmatpush.bf16.msra.mxu0 %v870
  %2079 = vmatpush.bf16.msra.mxu0 %v866
  %2080 = vmatmul.bf16.gmra.mxu0 %v2032
  %v2081 = vpop.f32.mrf.mxu0
  %v2082 = vadd.f32 0.0, %v2081
  %v2083 = vpop.f32.mrf.mxu0
  %2084 = vdwg.mxu0
  %v2085 = vadd.f32 %v2028, %v2043
  %v2086 = vadd.f32 %v2029, %v2056
  %v2087 = vadd.f32 %v2030, %v2069
  %v2088 = vadd.f32 %v2031, %v2082
  %v2089 = vmul.f32 %v2085, 0.5
  %v2090 = vtanh.pop %v2089
  %v2091 = vmul.f32 %v2090, 0.5
  %v2092 = vadd.f32 %v2091, 0.5
  %v2093 = vmul.f32 %v2086, 0.5
  %v2094 = vtanh.pop %v2093
  %v2095 = vmul.f32 %v2094, 0.5
  %v2096 = vadd.f32 %v2095, 0.5
  %v2097 = vtanh.pop %v2087
  %v2098 = vmul.f32 %v2088, 0.5
  %v2099 = vtanh.pop %v2098
  %v2100 = vmul.f32 %v2099, 0.5
  %v2101 = vadd.f32 %v2100, 0.5
  %v2102 = vmul.f32 %v2096, %v2025
  %v2103 = vmul.f32 %v2092, %v2097
  %v2104 = vadd.f32 %v2102, %v2103
  %v2105 = vtanh.pop %v2104
  %v2106 = vmul.f32 %v2101, %v2105
  %v2107 = vld [vmem:[#allocation2 + $0x1e0] sm:$0xff]
  %v2108 = vld [vmem:[#allocation2 + $0x1e8] sm:$0xff]
  %v2109 = vld [vmem:[#allocation2 + $0x1f0] sm:$0xff]
  %v2110 = vld [vmem:[#allocation2 + $0x1f8] sm:$0xff]
  %v2111 = vpack.c.bf16 %v2106, %v2106
  %2112 = vmatpush.bf16.msra.mxu0 %v891
  %2113 = vmatpush.bf16.msra.mxu0 %v887
  %2114 = vmatpush.bf16.msra.mxu0 %v883
  %2115 = vmatpush.bf16.msra.mxu0 %v879
  %2116 = vmatpush.bf16.msra.mxu0 %v875
  %2117 = vmatpush.bf16.msra.mxu0 %v871
  %2118 = vmatpush.bf16.msra.mxu0 %v867
  %2119 = vmatpush.bf16.msra.mxu0 %v863
  %2120 = vmatmul.bf16.gmra.mxu0 %v2111
  %v2121 = vpop.f32.mrf.mxu0
  %v2122 = vadd.f32 0.0, %v2121
  %v2123 = vpop.f32.mrf.mxu0
  %2124 = vdwg.mxu0
  %2125 = vmatpush.bf16.msra.mxu0 %v892
  %2126 = vmatpush.bf16.msra.mxu0 %v888
  %2127 = vmatpush.bf16.msra.mxu0 %v884
  %2128 = vmatpush.bf16.msra.mxu0 %v880
  %2129 = vmatpush.bf16.msra.mxu0 %v876
  %2130 = vmatpush.bf16.msra.mxu0 %v872
  %2131 = vmatpush.bf16.msra.mxu0 %v868
  %2132 = vmatpush.bf16.msra.mxu0 %v864
  %2133 = vmatmul.bf16.gmra.mxu0 %v2111
  %v2134 = vpop.f32.mrf.mxu0
  %v2135 = vadd.f32 0.0, %v2134
  %v2136 = vpop.f32.mrf.mxu0
  %2137 = vdwg.mxu0
  %2138 = vmatpush.bf16.msra.mxu0 %v893
  %2139 = vmatpush.bf16.msra.mxu0 %v889
  %2140 = vmatpush.bf16.msra.mxu0 %v885
  %2141 = vmatpush.bf16.msra.mxu0 %v881
  %2142 = vmatpush.bf16.msra.mxu0 %v877
  %2143 = vmatpush.bf16.msra.mxu0 %v873
  %2144 = vmatpush.bf16.msra.mxu0 %v869
  %2145 = vmatpush.bf16.msra.mxu0 %v865
  %2146 = vmatmul.bf16.gmra.mxu0 %v2111
  %v2147 = vpop.f32.mrf.mxu0
  %v2148 = vadd.f32 0.0, %v2147
  %v2149 = vpop.f32.mrf.mxu0
  %2150 = vdwg.mxu0
  %2151 = vmatpush.bf16.msra.mxu0 %v894
  %2152 = vmatpush.bf16.msra.mxu0 %v890
  %2153 = vmatpush.bf16.msra.mxu0 %v886
  %2154 = vmatpush.bf16.msra.mxu0 %v882
  %2155 = vmatpush.bf16.msra.mxu0 %v878
  %2156 = vmatpush.bf16.msra.mxu0 %v874
  %2157 = vmatpush.bf16.msra.mxu0 %v870
  %2158 = vmatpush.bf16.msra.mxu0 %v866
  %2159 = vmatmul.bf16.gmra.mxu0 %v2111
  %v2160 = vpop.f32.mrf.mxu0
  %v2161 = vadd.f32 0.0, %v2160
  %v2162 = vpop.f32.mrf.mxu0
  %2163 = vdwg.mxu0
  %v2164 = vadd.f32 %v2107, %v2122
  %v2165 = vadd.f32 %v2108, %v2135
  %v2166 = vadd.f32 %v2109, %v2148
  %v2167 = vadd.f32 %v2110, %v2161
  %v2168 = vmul.f32 %v2164, 0.5
  %v2169 = vtanh.pop %v2168
  %v2170 = vmul.f32 %v2169, 0.5
  %v2171 = vadd.f32 %v2170, 0.5
  %v2172 = vmul.f32 %v2165, 0.5
  %v2173 = vtanh.pop %v2172
  %v2174 = vmul.f32 %v2173, 0.5
  %v2175 = vadd.f32 %v2174, 0.5
  %v2176 = vtanh.pop %v2166
  %v2177 = vmul.f32 %v2167, 0.5
  %v2178 = vtanh.pop %v2177
  %v2179 = vmul.f32 %v2178, 0.5
  %v2180 = vadd.f32 %v2179, 0.5
  %v2181 = vmul.f32 %v2175, %v2104
  %v2182 = vmul.f32 %v2171, %v2176
  %v2183 = vadd.f32 %v2181, %v2182
  %v2184 = vtanh.pop %v2183
  %v2185 = vmul.f32 %v2180, %v2184
  %v2186 = vld [vmem:[#allocation2 + $0x200] sm:$0xff]
  %v2187 = vld [vmem:[#allocation2 + $0x208] sm:$0xff]
  %v2188 = vld [vmem:[#allocation2 + $0x210] sm:$0xff]
  %v2189 = vld [vmem:[#allocation2 + $0x218] sm:$0xff]
  %v2190 = vpack.c.bf16 %v2185, %v2185
  %2191 = vmatpush.bf16.msra.mxu0 %v891
  %2192 = vmatpush.bf16.msra.mxu0 %v887
  %2193 = vmatpush.bf16.msra.mxu0 %v883
  %2194 = vmatpush.bf16.msra.mxu0 %v879
  %2195 = vmatpush.bf16.msra.mxu0 %v875
  %2196 = vmatpush.bf16.msra.mxu0 %v871
  %2197 = vmatpush.bf16.msra.mxu0 %v867
  %2198 = vmatpush.bf16.msra.mxu0 %v863
  %2199 = vmatmul.bf16.gmra.mxu0 %v2190
  %v2200 = vpop.f32.mrf.mxu0
  %v2201 = vadd.f32 0.0, %v2200
  %v2202 = vpop.f32.mrf.mxu0
  %2203 = vdwg.mxu0
  %2204 = vmatpush.bf16.msra.mxu0 %v892
  %2205 = vmatpush.bf16.msra.mxu0 %v888
  %2206 = vmatpush.bf16.msra.mxu0 %v884
  %2207 = vmatpush.bf16.msra.mxu0 %v880
  %2208 = vmatpush.bf16.msra.mxu0 %v876
  %2209 = vmatpush.bf16.msra.mxu0 %v872
  %2210 = vmatpush.bf16.msra.mxu0 %v868
  %2211 = vmatpush.bf16.msra.mxu0 %v864
  %2212 = vmatmul.bf16.gmra.mxu0 %v2190
  %v2213 = vpop.f32.mrf.mxu0
  %v2214 = vadd.f32 0.0, %v2213
  %v2215 = vpop.f32.mrf.mxu0
  %2216 = vdwg.mxu0
  %2217 = vmatpush.bf16.msra.mxu0 %v893
  %2218 = vmatpush.bf16.msra.mxu0 %v889
  %2219 = vmatpush.bf16.msra.mxu0 %v885
  %2220 = vmatpush.bf16.msra.mxu0 %v881
  %2221 = vmatpush.bf16.msra.mxu0 %v877
  %2222 = vmatpush.bf16.msra.mxu0 %v873
  %2223 = vmatpush.bf16.msra.mxu0 %v869
  %2224 = vmatpush.bf16.msra.mxu0 %v865
  %2225 = vmatmul.bf16.gmra.mxu0 %v2190
  %v2226 = vpop.f32.mrf.mxu0
  %v2227 = vadd.f32 0.0, %v2226
  %v2228 = vpop.f32.mrf.mxu0
  %2229 = vdwg.mxu0
  %2230 = vmatpush.bf16.msra.mxu0 %v894
  %2231 = vmatpush.bf16.msra.mxu0 %v890
  %2232 = vmatpush.bf16.msra.mxu0 %v886
  %2233 = vmatpush.bf16.msra.mxu0 %v882
  %2234 = vmatpush.bf16.msra.mxu0 %v878
  %2235 = vmatpush.bf16.msra.mxu0 %v874
  %2236 = vmatpush.bf16.msra.mxu0 %v870
  %2237 = vmatpush.bf16.msra.mxu0 %v866
  %2238 = vmatmul.bf16.gmra.mxu0 %v2190
  %v2239 = vpop.f32.mrf.mxu0
  %v2240 = vadd.f32 0.0, %v2239
  %v2241 = vpop.f32.mrf.mxu0
  %2242 = vdwg.mxu0
  %v2243 = vadd.f32 %v2186, %v2201
  %v2244 = vadd.f32 %v2187, %v2214
  %v2245 = vadd.f32 %v2188, %v2227
  %v2246 = vadd.f32 %v2189, %v2240
  %v2247 = vmul.f32 %v2243, 0.5
  %v2248 = vtanh.pop %v2247
  %v2249 = vmul.f32 %v2248, 0.5
  %v2250 = vadd.f32 %v2249, 0.5
  %v2251 = vmul.f32 %v2244, 0.5
  %v2252 = vtanh.pop %v2251
  %v2253 = vmul.f32 %v2252, 0.5
  %v2254 = vadd.f32 %v2253, 0.5
  %v2255 = vtanh.pop %v2245
  %v2256 = vmul.f32 %v2246, 0.5
  %v2257 = vtanh.pop %v2256
  %v2258 = vmul.f32 %v2257, 0.5
  %v2259 = vadd.f32 %v2258, 0.5
  %v2260 = vmul.f32 %v2254, %v2183
  %v2261 = vmul.f32 %v2250, %v2255
  %v2262 = vadd.f32 %v2260, %v2261
  %v2263 = vtanh.pop %v2262
  %v2264 = vmul.f32 %v2259, %v2263
  %v2265 = vld [vmem:[#allocation2 + $0x220] sm:$0xff]
  %v2266 = vld [vmem:[#allocation2 + $0x228] sm:$0xff]
  %v2267 = vld [vmem:[#allocation2 + $0x230] sm:$0xff]
  %v2268 = vld [vmem:[#allocation2 + $0x238] sm:$0xff]
  %v2269 = vpack.c.bf16 %v2264, %v2264
  %2270 = vmatpush.bf16.msra.mxu0 %v891
  %2271 = vmatpush.bf16.msra.mxu0 %v887
  %2272 = vmatpush.bf16.msra.mxu0 %v883
  %2273 = vmatpush.bf16.msra.mxu0 %v879
  %2274 = vmatpush.bf16.msra.mxu0 %v875
  %2275 = vmatpush.bf16.msra.mxu0 %v871
  %2276 = vmatpush.bf16.msra.mxu0 %v867
  %2277 = vmatpush.bf16.msra.mxu0 %v863
  %2278 = vmatmul.bf16.gmra.mxu0 %v2269
  %v2279 = vpop.f32.mrf.mxu0
  %v2280 = vadd.f32 0.0, %v2279
  %v2281 = vpop.f32.mrf.mxu0
  %2282 = vdwg.mxu0
  %2283 = vmatpush.bf16.msra.mxu0 %v892
  %2284 = vmatpush.bf16.msra.mxu0 %v888
  %2285 = vmatpush.bf16.msra.mxu0 %v884
  %2286 = vmatpush.bf16.msra.mxu0 %v880
  %2287 = vmatpush.bf16.msra.mxu0 %v876
  %2288 = vmatpush.bf16.msra.mxu0 %v872
  %2289 = vmatpush.bf16.msra.mxu0 %v868
  %2290 = vmatpush.bf16.msra.mxu0 %v864
  %2291 = vmatmul.bf16.gmra.mxu0 %v2269
  %v2292 = vpop.f32.mrf.mxu0
  %v2293 = vadd.f32 0.0, %v2292
  %v2294 = vpop.f32.mrf.mxu0
  %2295 = vdwg.mxu0
  %2296 = vmatpush.bf16.msra.mxu0 %v893
  %2297 = vmatpush.bf16.msra.mxu0 %v889
  %2298 = vmatpush.bf16.msra.mxu0 %v885
  %2299 = vmatpush.bf16.msra.mxu0 %v881
  %2300 = vmatpush.bf16.msra.mxu0 %v877
  %2301 = vmatpush.bf16.msra.mxu0 %v873
  %2302 = vmatpush.bf16.msra.mxu0 %v869
  %2303 = vmatpush.bf16.msra.mxu0 %v865
  %2304 = vmatmul.bf16.gmra.mxu0 %v2269
  %v2305 = vpop.f32.mrf.mxu0
  %v2306 = vadd.f32 0.0, %v2305
  %v2307 = vpop.f32.mrf.mxu0
  %2308 = vdwg.mxu0
  %2309 = vmatpush.bf16.msra.mxu0 %v894
  %2310 = vmatpush.bf16.msra.mxu0 %v890
  %2311 = vmatpush.bf16.msra.mxu0 %v886
  %2312 = vmatpush.bf16.msra.mxu0 %v882
  %2313 = vmatpush.bf16.msra.mxu0 %v878
  %2314 = vmatpush.bf16.msra.mxu0 %v874
  %2315 = vmatpush.bf16.msra.mxu0 %v870
  %2316 = vmatpush.bf16.msra.mxu0 %v866
  %2317 = vmatmul.bf16.gmra.mxu0 %v2269
  %v2318 = vpop.f32.mrf.mxu0
  %v2319 = vadd.f32 0.0, %v2318
  %v2320 = vpop.f32.mrf.mxu0
  %2321 = vdwg.mxu0
  %v2322 = vadd.f32 %v2265, %v2280
  %v2323 = vadd.f32 %v2266, %v2293
  %v2324 = vadd.f32 %v2267, %v2306
  %v2325 = vadd.f32 %v2268, %v2319
  %v2326 = vmul.f32 %v2322, 0.5
  %v2327 = vtanh.pop %v2326
  %v2328 = vmul.f32 %v2327, 0.5
  %v2329 = vadd.f32 %v2328, 0.5
  %v2330 = vmul.f32 %v2323, 0.5
  %v2331 = vtanh.pop %v2330
  %v2332 = vmul.f32 %v2331, 0.5
  %v2333 = vadd.f32 %v2332, 0.5
  %v2334 = vtanh.pop %v2324
  %v2335 = vmul.f32 %v2325, 0.5
  %v2336 = vtanh.pop %v2335
  %v2337 = vmul.f32 %v2336, 0.5
  %v2338 = vadd.f32 %v2337, 0.5
  %v2339 = vmul.f32 %v2333, %v2262
  %v2340 = vmul.f32 %v2329, %v2334
  %v2341 = vadd.f32 %v2339, %v2340
  %v2342 = vtanh.pop %v2341
  %v2343 = vmul.f32 %v2338, %v2342
  %v2344 = vld [vmem:[#allocation2 + $0x240] sm:$0xff]
  %v2345 = vld [vmem:[#allocation2 + $0x248] sm:$0xff]
  %v2346 = vld [vmem:[#allocation2 + $0x250] sm:$0xff]
  %v2347 = vld [vmem:[#allocation2 + $0x258] sm:$0xff]
  %v2348 = vpack.c.bf16 %v2343, %v2343
  %2349 = vmatpush.bf16.msra.mxu0 %v891
  %2350 = vmatpush.bf16.msra.mxu0 %v887
  %2351 = vmatpush.bf16.msra.mxu0 %v883
  %2352 = vmatpush.bf16.msra.mxu0 %v879
  %2353 = vmatpush.bf16.msra.mxu0 %v875
  %2354 = vmatpush.bf16.msra.mxu0 %v871
  %2355 = vmatpush.bf16.msra.mxu0 %v867
  %2356 = vmatpush.bf16.msra.mxu0 %v863
  %2357 = vmatmul.bf16.gmra.mxu0 %v2348
  %v2358 = vpop.f32.mrf.mxu0
  %v2359 = vadd.f32 0.0, %v2358
  %v2360 = vpop.f32.mrf.mxu0
  %2361 = vdwg.mxu0
  %2362 = vmatpush.bf16.msra.mxu0 %v892
  %2363 = vmatpush.bf16.msra.mxu0 %v888
  %2364 = vmatpush.bf16.msra.mxu0 %v884
  %2365 = vmatpush.bf16.msra.mxu0 %v880
  %2366 = vmatpush.bf16.msra.mxu0 %v876
  %2367 = vmatpush.bf16.msra.mxu0 %v872
  %2368 = vmatpush.bf16.msra.mxu0 %v868
  %2369 = vmatpush.bf16.msra.mxu0 %v864
  %2370 = vmatmul.bf16.gmra.mxu0 %v2348
  %v2371 = vpop.f32.mrf.mxu0
  %v2372 = vadd.f32 0.0, %v2371
  %v2373 = vpop.f32.mrf.mxu0
  %2374 = vdwg.mxu0
  %2375 = vmatpush.bf16.msra.mxu0 %v893
  %2376 = vmatpush.bf16.msra.mxu0 %v889
  %2377 = vmatpush.bf16.msra.mxu0 %v885
  %2378 = vmatpush.bf16.msra.mxu0 %v881
  %2379 = vmatpush.bf16.msra.mxu0 %v877
  %2380 = vmatpush.bf16.msra.mxu0 %v873
  %2381 = vmatpush.bf16.msra.mxu0 %v869
  %2382 = vmatpush.bf16.msra.mxu0 %v865
  %2383 = vmatmul.bf16.gmra.mxu0 %v2348
  %v2384 = vpop.f32.mrf.mxu0
  %v2385 = vadd.f32 0.0, %v2384
  %v2386 = vpop.f32.mrf.mxu0
  %2387 = vdwg.mxu0
  %2388 = vmatpush.bf16.msra.mxu0 %v894
  %2389 = vmatpush.bf16.msra.mxu0 %v890
  %2390 = vmatpush.bf16.msra.mxu0 %v886
  %2391 = vmatpush.bf16.msra.mxu0 %v882
  %2392 = vmatpush.bf16.msra.mxu0 %v878
  %2393 = vmatpush.bf16.msra.mxu0 %v874
  %2394 = vmatpush.bf16.msra.mxu0 %v870
  %2395 = vmatpush.bf16.msra.mxu0 %v866
  %2396 = vmatmul.bf16.gmra.mxu0 %v2348
  %v2397 = vpop.f32.mrf.mxu0
  %v2398 = vadd.f32 0.0, %v2397
  %v2399 = vpop.f32.mrf.mxu0
  %2400 = vdwg.mxu0
  %v2401 = vadd.f32 %v2344, %v2359
  %v2402 = vadd.f32 %v2345, %v2372
  %v2403 = vadd.f32 %v2346, %v2385
  %v2404 = vadd.f32 %v2347, %v2398
  %v2405 = vmul.f32 %v2401, 0.5
  %v2406 = vtanh.pop %v2405
  %v2407 = vmul.f32 %v2406, 0.5
  %v2408 = vadd.f32 %v2407, 0.5
  %v2409 = vmul.f32 %v2402, 0.5
  %v2410 = vtanh.pop %v2409
  %v2411 = vmul.f32 %v2410, 0.5
  %v2412 = vadd.f32 %v2411, 0.5
  %v2413 = vtanh.pop %v2403
  %v2414 = vmul.f32 %v2404, 0.5
  %v2415 = vtanh.pop %v2414
  %v2416 = vmul.f32 %v2415, 0.5
  %v2417 = vadd.f32 %v2416, 0.5
  %v2418 = vmul.f32 %v2412, %v2341
  %v2419 = vmul.f32 %v2408, %v2413
  %v2420 = vadd.f32 %v2418, %v2419
  %v2421 = vtanh.pop %v2420
  %v2422 = vmul.f32 %v2417, %v2421
  %v2423 = vld [vmem:[#allocation2 + $0x260] sm:$0xff]
  %v2424 = vld [vmem:[#allocation2 + $0x268] sm:$0xff]
  %v2425 = vld [vmem:[#allocation2 + $0x270] sm:$0xff]
  %v2426 = vld [vmem:[#allocation2 + $0x278] sm:$0xff]
  %v2427 = vpack.c.bf16 %v2422, %v2422
  %2428 = vmatpush.bf16.msra.mxu0 %v891
  %2429 = vmatpush.bf16.msra.mxu0 %v887
  %2430 = vmatpush.bf16.msra.mxu0 %v883
  %2431 = vmatpush.bf16.msra.mxu0 %v879
  %2432 = vmatpush.bf16.msra.mxu0 %v875
  %2433 = vmatpush.bf16.msra.mxu0 %v871
  %2434 = vmatpush.bf16.msra.mxu0 %v867
  %2435 = vmatpush.bf16.msra.mxu0 %v863
  %2436 = vmatmul.bf16.gmra.mxu0 %v2427
  %v2437 = vpop.f32.mrf.mxu0
  %v2438 = vadd.f32 0.0, %v2437
  %v2439 = vpop.f32.mrf.mxu0
  %2440 = vdwg.mxu0
  %2441 = vmatpush.bf16.msra.mxu0 %v892
  %2442 = vmatpush.bf16.msra.mxu0 %v888
  %2443 = vmatpush.bf16.msra.mxu0 %v884
  %2444 = vmatpush.bf16.msra.mxu0 %v880
  %2445 = vmatpush.bf16.msra.mxu0 %v876
  %2446 = vmatpush.bf16.msra.mxu0 %v872
  %2447 = vmatpush.bf16.msra.mxu0 %v868
  %2448 = vmatpush.bf16.msra.mxu0 %v864
  %2449 = vmatmul.bf16.gmra.mxu0 %v2427
  %v2450 = vpop.f32.mrf.mxu0
  %v2451 = vadd.f32 0.0, %v2450
  %v2452 = vpop.f32.mrf.mxu0
  %2453 = vdwg.mxu0
  %2454 = vmatpush.bf16.msra.mxu0 %v893
  %2455 = vmatpush.bf16.msra.mxu0 %v889
  %2456 = vmatpush.bf16.msra.mxu0 %v885
  %2457 = vmatpush.bf16.msra.mxu0 %v881
  %2458 = vmatpush.bf16.msra.mxu0 %v877
  %2459 = vmatpush.bf16.msra.mxu0 %v873
  %2460 = vmatpush.bf16.msra.mxu0 %v869
  %2461 = vmatpush.bf16.msra.mxu0 %v865
  %2462 = vmatmul.bf16.gmra.mxu0 %v2427
  %v2463 = vpop.f32.mrf.mxu0
  %v2464 = vadd.f32 0.0, %v2463
  %v2465 = vpop.f32.mrf.mxu0
  %2466 = vdwg.mxu0
  %2467 = vmatpush.bf16.msra.mxu0 %v894
  %2468 = vmatpush.bf16.msra.mxu0 %v890
  %2469 = vmatpush.bf16.msra.mxu0 %v886
  %2470 = vmatpush.bf16.msra.mxu0 %v882
  %2471 = vmatpush.bf16.msra.mxu0 %v878
  %2472 = vmatpush.bf16.msra.mxu0 %v874
  %2473 = vmatpush.bf16.msra.mxu0 %v870
  %2474 = vmatpush.bf16.msra.mxu0 %v866
  %2475 = vmatmul.bf16.gmra.mxu0 %v2427
  %v2476 = vpop.f32.mrf.mxu0
  %v2477 = vadd.f32 0.0, %v2476
  %v2478 = vpop.f32.mrf.mxu0
  %2479 = vdwg.mxu0
  %v2480 = vadd.f32 %v2423, %v2438
  %v2481 = vadd.f32 %v2424, %v2451
  %v2482 = vadd.f32 %v2425, %v2464
  %v2483 = vadd.f32 %v2426, %v2477
  %v2484 = vmul.f32 %v2480, 0.5
  %v2485 = vtanh.pop %v2484
  %v2486 = vmul.f32 %v2485, 0.5
  %v2487 = vadd.f32 %v2486, 0.5
  %v2488 = vmul.f32 %v2481, 0.5
  %v2489 = vtanh.pop %v2488
  %v2490 = vmul.f32 %v2489, 0.5
  %v2491 = vadd.f32 %v2490, 0.5
  %v2492 = vtanh.pop %v2482
  %v2493 = vmul.f32 %v2483, 0.5
  %v2494 = vtanh.pop %v2493
  %v2495 = vmul.f32 %v2494, 0.5
  %v2496 = vadd.f32 %v2495, 0.5
  %v2497 = vmul.f32 %v2491, %v2420
  %v2498 = vmul.f32 %v2487, %v2492
  %v2499 = vadd.f32 %v2497, %v2498
  %v2500 = vtanh.pop %v2499
  %v2501 = vmul.f32 %v2496, %v2500
  %v2502 = vld [vmem:[#allocation2 + $0x280] sm:$0xff]
  %v2503 = vld [vmem:[#allocation2 + $0x288] sm:$0xff]
  %v2504 = vld [vmem:[#allocation2 + $0x290] sm:$0xff]
  %v2505 = vld [vmem:[#allocation2 + $0x298] sm:$0xff]
  %v2506 = vpack.c.bf16 %v2501, %v2501
  %2507 = vmatpush.bf16.msra.mxu0 %v891
  %2508 = vmatpush.bf16.msra.mxu0 %v887
  %2509 = vmatpush.bf16.msra.mxu0 %v883
  %2510 = vmatpush.bf16.msra.mxu0 %v879
  %2511 = vmatpush.bf16.msra.mxu0 %v875
  %2512 = vmatpush.bf16.msra.mxu0 %v871
  %2513 = vmatpush.bf16.msra.mxu0 %v867
  %2514 = vmatpush.bf16.msra.mxu0 %v863
  %2515 = vmatmul.bf16.gmra.mxu0 %v2506
  %v2516 = vpop.f32.mrf.mxu0
  %v2517 = vadd.f32 0.0, %v2516
  %v2518 = vpop.f32.mrf.mxu0
  %2519 = vdwg.mxu0
  %2520 = vmatpush.bf16.msra.mxu0 %v892
  %2521 = vmatpush.bf16.msra.mxu0 %v888
  %2522 = vmatpush.bf16.msra.mxu0 %v884
  %2523 = vmatpush.bf16.msra.mxu0 %v880
  %2524 = vmatpush.bf16.msra.mxu0 %v876
  %2525 = vmatpush.bf16.msra.mxu0 %v872
  %2526 = vmatpush.bf16.msra.mxu0 %v868
  %2527 = vmatpush.bf16.msra.mxu0 %v864
  %2528 = vmatmul.bf16.gmra.mxu0 %v2506
  %v2529 = vpop.f32.mrf.mxu0
  %v2530 = vadd.f32 0.0, %v2529
  %v2531 = vpop.f32.mrf.mxu0
  %2532 = vdwg.mxu0
  %2533 = vmatpush.bf16.msra.mxu0 %v893
  %2534 = vmatpush.bf16.msra.mxu0 %v889
  %2535 = vmatpush.bf16.msra.mxu0 %v885
  %2536 = vmatpush.bf16.msra.mxu0 %v881
  %2537 = vmatpush.bf16.msra.mxu0 %v877
  %2538 = vmatpush.bf16.msra.mxu0 %v873
  %2539 = vmatpush.bf16.msra.mxu0 %v869
  %2540 = vmatpush.bf16.msra.mxu0 %v865
  %2541 = vmatmul.bf16.gmra.mxu0 %v2506
  %v2542 = vpop.f32.mrf.mxu0
  %v2543 = vadd.f32 0.0, %v2542
  %v2544 = vpop.f32.mrf.mxu0
  %2545 = vdwg.mxu0
  %2546 = vmatpush.bf16.msra.mxu0 %v894
  %2547 = vmatpush.bf16.msra.mxu0 %v890
  %2548 = vmatpush.bf16.msra.mxu0 %v886
  %2549 = vmatpush.bf16.msra.mxu0 %v882
  %2550 = vmatpush.bf16.msra.mxu0 %v878
  %2551 = vmatpush.bf16.msra.mxu0 %v874
  %2552 = vmatpush.bf16.msra.mxu0 %v870
  %2553 = vmatpush.bf16.msra.mxu0 %v866
  %2554 = vmatmul.bf16.gmra.mxu0 %v2506
  %v2555 = vpop.f32.mrf.mxu0
  %v2556 = vadd.f32 0.0, %v2555
  %v2557 = vpop.f32.mrf.mxu0
  %2558 = vdwg.mxu0
  %v2559 = vadd.f32 %v2502, %v2517
  %v2560 = vadd.f32 %v2503, %v2530
  %v2561 = vadd.f32 %v2504, %v2543
  %v2562 = vadd.f32 %v2505, %v2556
  %v2563 = vmul.f32 %v2559, 0.5
  %v2564 = vtanh.pop %v2563
  %v2565 = vmul.f32 %v2564, 0.5
  %v2566 = vadd.f32 %v2565, 0.5
  %v2567 = vmul.f32 %v2560, 0.5
  %v2568 = vtanh.pop %v2567
  %v2569 = vmul.f32 %v2568, 0.5
  %v2570 = vadd.f32 %v2569, 0.5
  %v2571 = vtanh.pop %v2561
  %v2572 = vmul.f32 %v2562, 0.5
  %v2573 = vtanh.pop %v2572
  %v2574 = vmul.f32 %v2573, 0.5
  %v2575 = vadd.f32 %v2574, 0.5
  %v2576 = vmul.f32 %v2570, %v2499
  %v2577 = vmul.f32 %v2566, %v2571
  %v2578 = vadd.f32 %v2576, %v2577
  %v2579 = vtanh.pop %v2578
  %v2580 = vmul.f32 %v2575, %v2579
  %v2581 = vld [vmem:[#allocation2 + $0x2a0] sm:$0xff]
  %v2582 = vld [vmem:[#allocation2 + $0x2a8] sm:$0xff]
  %v2583 = vld [vmem:[#allocation2 + $0x2b0] sm:$0xff]
  %v2584 = vld [vmem:[#allocation2 + $0x2b8] sm:$0xff]
  %v2585 = vpack.c.bf16 %v2580, %v2580
  %2586 = vmatpush.bf16.msra.mxu0 %v891
  %2587 = vmatpush.bf16.msra.mxu0 %v887
  %2588 = vmatpush.bf16.msra.mxu0 %v883
  %2589 = vmatpush.bf16.msra.mxu0 %v879
  %2590 = vmatpush.bf16.msra.mxu0 %v875
  %2591 = vmatpush.bf16.msra.mxu0 %v871
  %2592 = vmatpush.bf16.msra.mxu0 %v867
  %2593 = vmatpush.bf16.msra.mxu0 %v863
  %2594 = vmatmul.bf16.gmra.mxu0 %v2585
  %v2595 = vpop.f32.mrf.mxu0
  %v2596 = vadd.f32 0.0, %v2595
  %v2597 = vpop.f32.mrf.mxu0
  %2598 = vdwg.mxu0
  %2599 = vmatpush.bf16.msra.mxu0 %v892
  %2600 = vmatpush.bf16.msra.mxu0 %v888
  %2601 = vmatpush.bf16.msra.mxu0 %v884
  %2602 = vmatpush.bf16.msra.mxu0 %v880
  %2603 = vmatpush.bf16.msra.mxu0 %v876
  %2604 = vmatpush.bf16.msra.mxu0 %v872
  %2605 = vmatpush.bf16.msra.mxu0 %v868
  %2606 = vmatpush.bf16.msra.mxu0 %v864
  %2607 = vmatmul.bf16.gmra.mxu0 %v2585
  %v2608 = vpop.f32.mrf.mxu0
  %v2609 = vadd.f32 0.0, %v2608
  %v2610 = vpop.f32.mrf.mxu0
  %2611 = vdwg.mxu0
  %2612 = vmatpush.bf16.msra.mxu0 %v893
  %2613 = vmatpush.bf16.msra.mxu0 %v889
  %2614 = vmatpush.bf16.msra.mxu0 %v885
  %2615 = vmatpush.bf16.msra.mxu0 %v881
  %2616 = vmatpush.bf16.msra.mxu0 %v877
  %2617 = vmatpush.bf16.msra.mxu0 %v873
  %2618 = vmatpush.bf16.msra.mxu0 %v869
  %2619 = vmatpush.bf16.msra.mxu0 %v865
  %2620 = vmatmul.bf16.gmra.mxu0 %v2585
  %v2621 = vpop.f32.mrf.mxu0
  %v2622 = vadd.f32 0.0, %v2621
  %v2623 = vpop.f32.mrf.mxu0
  %2624 = vdwg.mxu0
  %2625 = vmatpush.bf16.msra.mxu0 %v894
  %2626 = vmatpush.bf16.msra.mxu0 %v890
  %2627 = vmatpush.bf16.msra.mxu0 %v886
  %2628 = vmatpush.bf16.msra.mxu0 %v882
  %2629 = vmatpush.bf16.msra.mxu0 %v878
  %2630 = vmatpush.bf16.msra.mxu0 %v874
  %2631 = vmatpush.bf16.msra.mxu0 %v870
  %2632 = vmatpush.bf16.msra.mxu0 %v866
  %2633 = vmatmul.bf16.gmra.mxu0 %v2585
  %v2634 = vpop.f32.mrf.mxu0
  %v2635 = vadd.f32 0.0, %v2634
  %v2636 = vpop.f32.mrf.mxu0
  %2637 = vdwg.mxu0
  %v2638 = vadd.f32 %v2581, %v2596
  %v2639 = vadd.f32 %v2582, %v2609
  %v2640 = vadd.f32 %v2583, %v2622
  %v2641 = vadd.f32 %v2584, %v2635
  %v2642 = vmul.f32 %v2638, 0.5
  %v2643 = vtanh.pop %v2642
  %v2644 = vmul.f32 %v2643, 0.5
  %v2645 = vadd.f32 %v2644, 0.5
  %v2646 = vmul.f32 %v2639, 0.5
  %v2647 = vtanh.pop %v2646
  %v2648 = vmul.f32 %v2647, 0.5
  %v2649 = vadd.f32 %v2648, 0.5
  %v2650 = vtanh.pop %v2640
  %v2651 = vmul.f32 %v2641, 0.5
  %v2652 = vtanh.pop %v2651
  %v2653 = vmul.f32 %v2652, 0.5
  %v2654 = vadd.f32 %v2653, 0.5
  %v2655 = vmul.f32 %v2649, %v2578
  %v2656 = vmul.f32 %v2645, %v2650
  %v2657 = vadd.f32 %v2655, %v2656
  %v2658 = vtanh.pop %v2657
  %v2659 = vmul.f32 %v2654, %v2658
  %v2660 = vld [vmem:[#allocation2 + $0x2c0] sm:$0xff]
  %v2661 = vld [vmem:[#allocation2 + $0x2c8] sm:$0xff]
  %v2662 = vld [vmem:[#allocation2 + $0x2d0] sm:$0xff]
  %v2663 = vld [vmem:[#allocation2 + $0x2d8] sm:$0xff]
  %v2664 = vpack.c.bf16 %v2659, %v2659
  %2665 = vmatpush.bf16.msra.mxu0 %v891
  %2666 = vmatpush.bf16.msra.mxu0 %v887
  %2667 = vmatpush.bf16.msra.mxu0 %v883
  %2668 = vmatpush.bf16.msra.mxu0 %v879
  %2669 = vmatpush.bf16.msra.mxu0 %v875
  %2670 = vmatpush.bf16.msra.mxu0 %v871
  %2671 = vmatpush.bf16.msra.mxu0 %v867
  %2672 = vmatpush.bf16.msra.mxu0 %v863
  %2673 = vmatmul.bf16.gmra.mxu0 %v2664
  %v2674 = vpop.f32.mrf.mxu0
  %v2675 = vadd.f32 0.0, %v2674
  %v2676 = vpop.f32.mrf.mxu0
  %2677 = vdwg.mxu0
  %2678 = vmatpush.bf16.msra.mxu0 %v892
  %2679 = vmatpush.bf16.msra.mxu0 %v888
  %2680 = vmatpush.bf16.msra.mxu0 %v884
  %2681 = vmatpush.bf16.msra.mxu0 %v880
  %2682 = vmatpush.bf16.msra.mxu0 %v876
  %2683 = vmatpush.bf16.msra.mxu0 %v872
  %2684 = vmatpush.bf16.msra.mxu0 %v868
  %2685 = vmatpush.bf16.msra.mxu0 %v864
  %2686 = vmatmul.bf16.gmra.mxu0 %v2664
  %v2687 = vpop.f32.mrf.mxu0
  %v2688 = vadd.f32 0.0, %v2687
  %v2689 = vpop.f32.mrf.mxu0
  %2690 = vdwg.mxu0
  %2691 = vmatpush.bf16.msra.mxu0 %v893
  %2692 = vmatpush.bf16.msra.mxu0 %v889
  %2693 = vmatpush.bf16.msra.mxu0 %v885
  %2694 = vmatpush.bf16.msra.mxu0 %v881
  %2695 = vmatpush.bf16.msra.mxu0 %v877
  %2696 = vmatpush.bf16.msra.mxu0 %v873
  %2697 = vmatpush.bf16.msra.mxu0 %v869
  %2698 = vmatpush.bf16.msra.mxu0 %v865
  %2699 = vmatmul.bf16.gmra.mxu0 %v2664
  %v2700 = vpop.f32.mrf.mxu0
  %v2701 = vadd.f32 0.0, %v2700
  %v2702 = vpop.f32.mrf.mxu0
  %2703 = vdwg.mxu0
  %2704 = vmatpush.bf16.msra.mxu0 %v894
  %2705 = vmatpush.bf16.msra.mxu0 %v890
  %2706 = vmatpush.bf16.msra.mxu0 %v886
  %2707 = vmatpush.bf16.msra.mxu0 %v882
  %2708 = vmatpush.bf16.msra.mxu0 %v878
  %2709 = vmatpush.bf16.msra.mxu0 %v874
  %2710 = vmatpush.bf16.msra.mxu0 %v870
  %2711 = vmatpush.bf16.msra.mxu0 %v866
  %2712 = vmatmul.bf16.gmra.mxu0 %v2664
  %v2713 = vpop.f32.mrf.mxu0
  %v2714 = vadd.f32 0.0, %v2713
  %v2715 = vpop.f32.mrf.mxu0
  %2716 = vdwg.mxu0
  %v2717 = vadd.f32 %v2660, %v2675
  %v2718 = vadd.f32 %v2661, %v2688
  %v2719 = vadd.f32 %v2662, %v2701
  %v2720 = vadd.f32 %v2663, %v2714
  %v2721 = vmul.f32 %v2717, 0.5
  %v2722 = vtanh.pop %v2721
  %v2723 = vmul.f32 %v2722, 0.5
  %v2724 = vadd.f32 %v2723, 0.5
  %v2725 = vmul.f32 %v2718, 0.5
  %v2726 = vtanh.pop %v2725
  %v2727 = vmul.f32 %v2726, 0.5
  %v2728 = vadd.f32 %v2727, 0.5
  %v2729 = vtanh.pop %v2719
  %v2730 = vmul.f32 %v2720, 0.5
  %v2731 = vtanh.pop %v2730
  %v2732 = vmul.f32 %v2731, 0.5
  %v2733 = vadd.f32 %v2732, 0.5
  %v2734 = vmul.f32 %v2728, %v2657
  %v2735 = vmul.f32 %v2724, %v2729
  %v2736 = vadd.f32 %v2734, %v2735
  %v2737 = vtanh.pop %v2736
  %v2738 = vmul.f32 %v2733, %v2737
  %v2739 = vld [vmem:[#allocation2 + $0x2e0] sm:$0xff]
  %v2740 = vld [vmem:[#allocation2 + $0x2e8] sm:$0xff]
  %v2741 = vld [vmem:[#allocation2 + $0x2f0] sm:$0xff]
  %v2742 = vld [vmem:[#allocation2 + $0x2f8] sm:$0xff]
  %v2743 = vpack.c.bf16 %v2738, %v2738
  %2744 = vmatpush.bf16.msra.mxu0 %v891
  %2745 = vmatpush.bf16.msra.mxu0 %v887
  %2746 = vmatpush.bf16.msra.mxu0 %v883
  %2747 = vmatpush.bf16.msra.mxu0 %v879
  %2748 = vmatpush.bf16.msra.mxu0 %v875
  %2749 = vmatpush.bf16.msra.mxu0 %v871
  %2750 = vmatpush.bf16.msra.mxu0 %v867
  %2751 = vmatpush.bf16.msra.mxu0 %v863
  %2752 = vmatmul.bf16.gmra.mxu0 %v2743
  %v2753 = vpop.f32.mrf.mxu0
  %v2754 = vadd.f32 0.0, %v2753
  %v2755 = vpop.f32.mrf.mxu0
  %2756 = vdwg.mxu0
  %2757 = vmatpush.bf16.msra.mxu0 %v892
  %2758 = vmatpush.bf16.msra.mxu0 %v888
  %2759 = vmatpush.bf16.msra.mxu0 %v884
  %2760 = vmatpush.bf16.msra.mxu0 %v880
  %2761 = vmatpush.bf16.msra.mxu0 %v876
  %2762 = vmatpush.bf16.msra.mxu0 %v872
  %2763 = vmatpush.bf16.msra.mxu0 %v868
  %2764 = vmatpush.bf16.msra.mxu0 %v864
  %2765 = vmatmul.bf16.gmra.mxu0 %v2743
  %v2766 = vpop.f32.mrf.mxu0
  %v2767 = vadd.f32 0.0, %v2766
  %v2768 = vpop.f32.mrf.mxu0
  %2769 = vdwg.mxu0
  %2770 = vmatpush.bf16.msra.mxu0 %v893
  %2771 = vmatpush.bf16.msra.mxu0 %v889
  %2772 = vmatpush.bf16.msra.mxu0 %v885
  %2773 = vmatpush.bf16.msra.mxu0 %v881
  %2774 = vmatpush.bf16.msra.mxu0 %v877
  %2775 = vmatpush.bf16.msra.mxu0 %v873
  %2776 = vmatpush.bf16.msra.mxu0 %v869
  %2777 = vmatpush.bf16.msra.mxu0 %v865
  %2778 = vmatmul.bf16.gmra.mxu0 %v2743
  %v2779 = vpop.f32.mrf.mxu0
  %v2780 = vadd.f32 0.0, %v2779
  %v2781 = vpop.f32.mrf.mxu0
  %2782 = vdwg.mxu0
  %2783 = vmatpush.bf16.msra.mxu0 %v894
  %2784 = vmatpush.bf16.msra.mxu0 %v890
  %2785 = vmatpush.bf16.msra.mxu0 %v886
  %2786 = vmatpush.bf16.msra.mxu0 %v882
  %2787 = vmatpush.bf16.msra.mxu0 %v878
  %2788 = vmatpush.bf16.msra.mxu0 %v874
  %2789 = vmatpush.bf16.msra.mxu0 %v870
  %2790 = vmatpush.bf16.msra.mxu0 %v866
  %2791 = vmatmul.bf16.gmra.mxu0 %v2743
  %v2792 = vpop.f32.mrf.mxu0
  %v2793 = vadd.f32 0.0, %v2792
  %v2794 = vpop.f32.mrf.mxu0
  %2795 = vdwg.mxu0
  %v2796 = vadd.f32 %v2739, %v2754
  %v2797 = vadd.f32 %v2740, %v2767
  %v2798 = vadd.f32 %v2741, %v2780
  %v2799 = vadd.f32 %v2742, %v2793
  %v2800 = vmul.f32 %v2796, 0.5
  %v2801 = vtanh.pop %v2800
  %v2802 = vmul.f32 %v2801, 0.5
  %v2803 = vadd.f32 %v2802, 0.5
  %v2804 = vmul.f32 %v2797, 0.5
  %v2805 = vtanh.pop %v2804
  %v2806 = vmul.f32 %v2805, 0.5
  %v2807 = vadd.f32 %v2806, 0.5
  %v2808 = vtanh.pop %v2798
  %v2809 = vmul.f32 %v2799, 0.5
  %v2810 = vtanh.pop %v2809
  %v2811 = vmul.f32 %v2810, 0.5
  %v2812 = vadd.f32 %v2811, 0.5
  %v2813 = vmul.f32 %v2807, %v2736
  %v2814 = vmul.f32 %v2803, %v2808
  %v2815 = vadd.f32 %v2813, %v2814
  %v2816 = vtanh.pop %v2815
  %v2817 = vmul.f32 %v2812, %v2816
  %v2818 = vld [vmem:[#allocation2 + $0x300] sm:$0xff]
  %v2819 = vld [vmem:[#allocation2 + $0x308] sm:$0xff]
  %v2820 = vld [vmem:[#allocation2 + $0x310] sm:$0xff]
  %v2821 = vld [vmem:[#allocation2 + $0x318] sm:$0xff]
  %v2822 = vpack.c.bf16 %v2817, %v2817
  %2823 = vmatpush.bf16.msra.mxu0 %v891
  %2824 = vmatpush.bf16.msra.mxu0 %v887
  %2825 = vmatpush.bf16.msra.mxu0 %v883
  %2826 = vmatpush.bf16.msra.mxu0 %v879
  %2827 = vmatpush.bf16.msra.mxu0 %v875
  %2828 = vmatpush.bf16.msra.mxu0 %v871
  %2829 = vmatpush.bf16.msra.mxu0 %v867
  %2830 = vmatpush.bf16.msra.mxu0 %v863
  %2831 = vmatmul.bf16.gmra.mxu0 %v2822
  %v2832 = vpop.f32.mrf.mxu0
  %v2833 = vadd.f32 0.0, %v2832
  %v2834 = vpop.f32.mrf.mxu0
  %2835 = vdwg.mxu0
  %2836 = vmatpush.bf16.msra.mxu0 %v892
  %2837 = vmatpush.bf16.msra.mxu0 %v888
  %2838 = vmatpush.bf16.msra.mxu0 %v884
  %2839 = vmatpush.bf16.msra.mxu0 %v880
  %2840 = vmatpush.bf16.msra.mxu0 %v876
  %2841 = vmatpush.bf16.msra.mxu0 %v872
  %2842 = vmatpush.bf16.msra.mxu0 %v868
  %2843 = vmatpush.bf16.msra.mxu0 %v864
  %2844 = vmatmul.bf16.gmra.mxu0 %v2822
  %v2845 = vpop.f32.mrf.mxu0
  %v2846 = vadd.f32 0.0, %v2845
  %v2847 = vpop.f32.mrf.mxu0
  %2848 = vdwg.mxu0
  %2849 = vmatpush.bf16.msra.mxu0 %v893
  %2850 = vmatpush.bf16.msra.mxu0 %v889
  %2851 = vmatpush.bf16.msra.mxu0 %v885
  %2852 = vmatpush.bf16.msra.mxu0 %v881
  %2853 = vmatpush.bf16.msra.mxu0 %v877
  %2854 = vmatpush.bf16.msra.mxu0 %v873
  %2855 = vmatpush.bf16.msra.mxu0 %v869
  %2856 = vmatpush.bf16.msra.mxu0 %v865
  %2857 = vmatmul.bf16.gmra.mxu0 %v2822
  %v2858 = vpop.f32.mrf.mxu0
  %v2859 = vadd.f32 0.0, %v2858
  %v2860 = vpop.f32.mrf.mxu0
  %2861 = vdwg.mxu0
  %2862 = vmatpush.bf16.msra.mxu0 %v894
  %2863 = vmatpush.bf16.msra.mxu0 %v890
  %2864 = vmatpush.bf16.msra.mxu0 %v886
  %2865 = vmatpush.bf16.msra.mxu0 %v882
  %2866 = vmatpush.bf16.msra.mxu0 %v878
  %2867 = vmatpush.bf16.msra.mxu0 %v874
  %2868 = vmatpush.bf16.msra.mxu0 %v870
  %2869 = vmatpush.bf16.msra.mxu0 %v866
  %2870 = vmatmul.bf16.gmra.mxu0 %v2822
  %v2871 = vpop.f32.mrf.mxu0
  %v2872 = vadd.f32 0.0, %v2871
  %v2873 = vpop.f32.mrf.mxu0
  %2874 = vdwg.mxu0
  %v2875 = vadd.f32 %v2818, %v2833
  %v2876 = vadd.f32 %v2819, %v2846
  %v2877 = vadd.f32 %v2820, %v2859
  %v2878 = vadd.f32 %v2821, %v2872
  %v2879 = vmul.f32 %v2875, 0.5
  %v2880 = vtanh.pop %v2879
  %v2881 = vmul.f32 %v2880, 0.5
  %v2882 = vadd.f32 %v2881, 0.5
  %v2883 = vmul.f32 %v2876, 0.5
  %v2884 = vtanh.pop %v2883
  %v2885 = vmul.f32 %v2884, 0.5
  %v2886 = vadd.f32 %v2885, 0.5
  %v2887 = vtanh.pop %v2877
  %v2888 = vmul.f32 %v2878, 0.5
  %v2889 = vtanh.pop %v2888
  %v2890 = vmul.f32 %v2889, 0.5
  %v2891 = vadd.f32 %v2890, 0.5
  %v2892 = vmul.f32 %v2886, %v2815
  %v2893 = vmul.f32 %v2882, %v2887
  %v2894 = vadd.f32 %v2892, %v2893
  %v2895 = vtanh.pop %v2894
  %v2896 = vmul.f32 %v2891, %v2895
  %v2897 = vld [vmem:[#allocation2 + $0x320] sm:$0xff]
  %v2898 = vld [vmem:[#allocation2 + $0x328] sm:$0xff]
  %v2899 = vld [vmem:[#allocation2 + $0x330] sm:$0xff]
  %v2900 = vld [vmem:[#allocation2 + $0x338] sm:$0xff]
  %v2901 = vpack.c.bf16 %v2896, %v2896
  %2902 = vmatpush.bf16.msra.mxu0 %v891
  %2903 = vmatpush.bf16.msra.mxu0 %v887
  %2904 = vmatpush.bf16.msra.mxu0 %v883
  %2905 = vmatpush.bf16.msra.mxu0 %v879
  %2906 = vmatpush.bf16.msra.mxu0 %v875
  %2907 = vmatpush.bf16.msra.mxu0 %v871
  %2908 = vmatpush.bf16.msra.mxu0 %v867
  %2909 = vmatpush.bf16.msra.mxu0 %v863
  %2910 = vmatmul.bf16.gmra.mxu0 %v2901
  %v2911 = vpop.f32.mrf.mxu0
  %v2912 = vadd.f32 0.0, %v2911
  %v2913 = vpop.f32.mrf.mxu0
  %2914 = vdwg.mxu0
  %2915 = vmatpush.bf16.msra.mxu0 %v892
  %2916 = vmatpush.bf16.msra.mxu0 %v888
  %2917 = vmatpush.bf16.msra.mxu0 %v884
  %2918 = vmatpush.bf16.msra.mxu0 %v880
  %2919 = vmatpush.bf16.msra.mxu0 %v876
  %2920 = vmatpush.bf16.msra.mxu0 %v872
  %2921 = vmatpush.bf16.msra.mxu0 %v868
  %2922 = vmatpush.bf16.msra.mxu0 %v864
  %2923 = vmatmul.bf16.gmra.mxu0 %v2901
  %v2924 = vpop.f32.mrf.mxu0
  %v2925 = vadd.f32 0.0, %v2924
  %v2926 = vpop.f32.mrf.mxu0
  %2927 = vdwg.mxu0
  %2928 = vmatpush.bf16.msra.mxu0 %v893
  %2929 = vmatpush.bf16.msra.mxu0 %v889
  %2930 = vmatpush.bf16.msra.mxu0 %v885
  %2931 = vmatpush.bf16.msra.mxu0 %v881
  %2932 = vmatpush.bf16.msra.mxu0 %v877
  %2933 = vmatpush.bf16.msra.mxu0 %v873
  %2934 = vmatpush.bf16.msra.mxu0 %v869
  %2935 = vmatpush.bf16.msra.mxu0 %v865
  %2936 = vmatmul.bf16.gmra.mxu0 %v2901
  %v2937 = vpop.f32.mrf.mxu0
  %v2938 = vadd.f32 0.0, %v2937
  %v2939 = vpop.f32.mrf.mxu0
  %2940 = vdwg.mxu0
  %2941 = vmatpush.bf16.msra.mxu0 %v894
  %2942 = vmatpush.bf16.msra.mxu0 %v890
  %2943 = vmatpush.bf16.msra.mxu0 %v886
  %2944 = vmatpush.bf16.msra.mxu0 %v882
  %2945 = vmatpush.bf16.msra.mxu0 %v878
  %2946 = vmatpush.bf16.msra.mxu0 %v874
  %2947 = vmatpush.bf16.msra.mxu0 %v870
  %2948 = vmatpush.bf16.msra.mxu0 %v866
  %2949 = vmatmul.bf16.gmra.mxu0 %v2901
  %v2950 = vpop.f32.mrf.mxu0
  %v2951 = vadd.f32 0.0, %v2950
  %v2952 = vpop.f32.mrf.mxu0
  %2953 = vdwg.mxu0
  %v2954 = vadd.f32 %v2897, %v2912
  %v2955 = vadd.f32 %v2898, %v2925
  %v2956 = vadd.f32 %v2899, %v2938
  %v2957 = vadd.f32 %v2900, %v2951
  %v2958 = vmul.f32 %v2954, 0.5
  %v2959 = vtanh.pop %v2958
  %v2960 = vmul.f32 %v2959, 0.5
  %v2961 = vadd.f32 %v2960, 0.5
  %v2962 = vmul.f32 %v2955, 0.5
  %v2963 = vtanh.pop %v2962
  %v2964 = vmul.f32 %v2963, 0.5
  %v2965 = vadd.f32 %v2964, 0.5
  %v2966 = vtanh.pop %v2956
  %v2967 = vmul.f32 %v2957, 0.5
  %v2968 = vtanh.pop %v2967
  %v2969 = vmul.f32 %v2968, 0.5
  %v2970 = vadd.f32 %v2969, 0.5
  %v2971 = vmul.f32 %v2965, %v2894
  %v2972 = vmul.f32 %v2961, %v2966
  %v2973 = vadd.f32 %v2971, %v2972
  %v2974 = vtanh.pop %v2973
  %v2975 = vmul.f32 %v2970, %v2974
  %v2976 = vld [vmem:[%s2 + $0xc0] sm:$0xff]
  %v2977 = vld [vmem:[%s2 + $0xc8] sm:$0xff]
  %v2978 = vld [vmem:[%s2 + $0xd0] sm:$0xff]
  %v2979 = vld [vmem:[%s2 + $0xd8] sm:$0xff]
  %v2980 = vld [vmem:[%s2 + $0xe0] sm:$0xff]
  %v2981 = vld [vmem:[%s2 + $0xe8] sm:$0xff]
  %v2982 = vld [vmem:[%s2 + $0xf0] sm:$0xff]
  %v2983 = vld [vmem:[%s2 + $0xf8] sm:$0xff]
  %v2984 = vld [vmem:[%s2 + $0x100] sm:$0xff]
  %v2985 = vld [vmem:[%s2 + $0x108] sm:$0xff]
  %v2986 = vld [vmem:[%s2 + $0x110] sm:$0xff]
  %v2987 = vld [vmem:[%s2 + $0x118] sm:$0xff]
  %v2988 = vld [vmem:[%s2 + $0x120] sm:$0xff]
  %v2989 = vld [vmem:[%s2 + $0x128] sm:$0xff]
  %v2990 = vld [vmem:[%s2 + $0x130] sm:$0xff]
  %v2991 = vld [vmem:[%s2 + $0x138] sm:$0xff]
  %v2992 = vld [vmem:[%s4 + $0x3] ss:$0 sm:$0xff]
  %2993 = vmatpush.msra.mxu0 %v2991
  %2994 = vmatpush.msra.mxu0 %v2990
  %2995 = vmatpush.msra.mxu0 %v2989
  %2996 = vmatpush.msra.mxu0 %v2988
  %2997 = vmatpush.msra.mxu0 %v2987
  %2998 = vmatpush.msra.mxu0 %v2986
  %2999 = vmatpush.msra.mxu0 %v2985
  %3000 = vmatpush.msra.mxu0 %v2984
  %3001 = vmatpush.msra.mxu0 %v2983
  %3002 = vmatpush.msra.mxu0 %v2982
  %3003 = vmatpush.msra.mxu0 %v2981
  %3004 = vmatpush.msra.mxu0 %v2980
  %3005 = vmatpush.msra.mxu0 %v2979
  %3006 = vmatpush.msra.mxu0 %v2978
  %3007 = vmatpush.msra.mxu0 %v2977
  %3008 = vmatpush.msra.mxu0 %v2976
  %3009 = vmatmul.f32.gmra.mxu0 %v2975
  %v3010 = vpop.f32.mrf.mxu0
  %v3011 = vadd.f32 %v2992, %v3010
  %3012 = vdwg.mxu0
  %v3013 = vmax.f32 %v3011, 0.0
  %v3014 = vld [vmem:[%s4 + $0x4] ss:$0 sm:$0xff]
  %v3015 = vmul.f32 %v3013, %v3014
  %3016 = vadd.xlane.f32.xlu0 %v3015
  %v3017 = vpop.xlane.xlu0 %3016
  %v3018 = vld [vmem:[%s4 + $0x5] ss:$0 sm:$0xff]
  %v3019 = vadd.f32 %v3017, %v3018
  %vm3020 = vcmask 7168
  %3021 = vst.msk [vmem:[%s5] sm:$0xff] %vm3020, %v3019
  // Predicated region
  $region22: #{kitty_forward.1} parent=0 // pred_check
    _
  $region23: #{kitty_forward.1} parent=0 // pred_check_branch
    %3023 = sbr.rel (0) target = $region25
  $region24: #{kitty_forward.1} parent=0 // pred_region
    _
  $region25: #{kitty_forward.1} parent=0 // pred_fallthru
    _
  // Predicated region
  $region26: #{kitty_forward.1} parent=0 // pred_check
    _
  $region27: #{kitty_forward.1} parent=0 // pred_check_branch
    %3025 = sbr.rel (0) target = $region29
  $region28: #{kitty_forward.1} parent=0 // pred_region
    _
  $region29: #{kitty_forward.1} parent=0 // pred_fallthru
    _

</llo_original>
